<compile_context>
chip_gen: v7x
topology: tpu7x:2x2x1
jax: 0.10.0
libtpu: 0.0.40
codegen_flags: <defaults>
</compile_context>

<pallas_src>
import functools

import jax
import jax.numpy as jnp
from jax.experimental import pallas as pl
from jax.experimental.pallas import tpu as pltpu


# --------------------------- tiling helpers ----------------------------------


def _round_up(x, m):
    return ((x + m - 1) // m) * m


def _tiling(dim, target, align):
    """Return (tile, padded_dim): tile divides padded_dim and is align-aligned,
    or (dim, dim) when dim < align (block == full array dim is always legal)."""
    if dim < align:
        return dim, dim
    p = _round_up(dim, align)
    t = (min(target, p) // align) * align
    while p % t:
        t -= align
    return t, p


def _pick_tile(dim, target, align):
    """Largest multiple of `align` that divides `dim` and is <= target, else dim.
    (Used only for the row-wise LayerNorm grid, where a full-dim block is fine.)"""
    if dim <= target:
        return dim
    t = (target // align) * align
    while t >= align:
        if dim % t == 0:
            return t
        t -= align
    return dim


@functools.lru_cache(maxsize=1)
def _vmem_limit():
    """Generation-aware scoped-VMEM limit: 48 MiB on 128 MiB parts (v5e/v6e),
    36 MiB on 64 MiB/TC parts (v7x)."""
    cap = 128 * 1024 * 1024
    try:
        cap = int(pltpu.get_tpu_info().vmem_capacity_bytes)
    except Exception:
        pass
    return 48 * 1024 * 1024 if cap >= 96 * 1024 * 1024 else 36 * 1024 * 1024


# --------------------------- linear (tiled matmul) ---------------------------


def _linear_kernel(x_ref, w_ref, b_ref, o_ref, acc_ref, *, activation):
    @pl.when(pl.program_id(2) == 0)
    def _():
        acc_ref[...] = jnp.zeros_like(acc_ref)

    # bf16 operands straight from VMEM into the MXU, f32 accumulation.
    acc_ref[...] += jnp.dot(x_ref[...], w_ref[...],
                            preferred_element_type=jnp.float32)

    @pl.when(pl.program_id(2) == pl.num_programs(2) - 1)
    def _():
        y = acc_ref[...] + b_ref[...]
        if activation == "gelu":
            # TODO(synk): HF BERT GELU is erf-based; tanh approximation used here.
            y = jax.nn.gelu(y)
        o_ref[...] = y.astype(o_ref.dtype)


def linear(x, w, b, activation=None, out_dtype=jnp.float32):
    """x: (M, K), w: (K, N), b: (N,) -> (M, N) out_dtype. bf16 MXU feeds."""
    M, K = x.shape
    N = w.shape[1]
    x = x.astype(jnp.bfloat16)          # one wrapper cast, not per-K-step in-kernel
    w = w.astype(jnp.bfloat16)

    align_m = 128 if M % 128 == 0 else 8          # MXU-row aligned tm when M allows
    tm, Mp = _tiling(M, 256, align_m)
    tn, Np = _tiling(N, 512, 128)
    tk, Kp = _tiling(K, 512, 128)

    if Mp != M or Kp != K:
        x = jnp.pad(x, ((0, Mp - M), (0, Kp - K)))
    if Kp != K or Np != N:
        w = jnp.pad(w, ((0, Kp - K), (0, Np - N)))
    bb = b.reshape(1, N)
    if Np != N:
        bb = jnp.pad(bb, ((0, 0), (0, Np - N)))

    grid = (Mp // tm, Np // tn, Kp // tk)
    out = pl.pallas_call(
        functools.partial(_linear_kernel, activation=activation),
        out_shape=jax.ShapeDtypeStruct((Mp, Np), out_dtype),
        grid=grid,
        in_specs=[
            pl.BlockSpec((tm, tk), lambda i, j, k: (i, k)),
            pl.BlockSpec((tk, tn), lambda i, j, k: (k, j)),
            pl.BlockSpec((1, tn), lambda i, j, k: (0, j)),
        ],
        out_specs=pl.BlockSpec((tm, tn), lambda i, j, k: (i, j)),
        scratch_shapes=[pltpu.VMEM((tm, tn), jnp.float32)],
        compiler_params=pltpu.CompilerParams(
            dimension_semantics=("parallel", "parallel", "arbitrary"),
            vmem_limit_bytes=_vmem_limit(),
        ),
    )(x, w, bb)
    if Mp != M or Np != N:
        out = out[:M, :N]
    return out


# --------------------------- layernorm (row-tiled, fused residual) -----------


def _layernorm_kernel(x_ref, g_ref, b_ref, o_ref, *, eps):
    x = x_ref[...]
    mu = jnp.mean(x, axis=-1, keepdims=True)
    var = jnp.mean((x - mu) ** 2, axis=-1, keepdims=True)
    o_ref[...] = (x - mu) * jax.lax.rsqrt(var + eps) * g_ref[...] + b_ref[...]


def _add_layernorm_kernel(x_ref, r_ref, g_ref, b_ref, o_ref, *, eps):
    x = x_ref[...] + r_ref[...]          # fused residual add
    mu = jnp.mean(x, axis=-1, keepdims=True)
    var = jnp.mean((x - mu) ** 2, axis=-1, keepdims=True)
    o_ref[...] = (x - mu) * jax.lax.rsqrt(var + eps) * g_ref[...] + b_ref[...]


def layernorm(x, g, b, residual=None, eps=1e-12):
    M, D = x.shape
    tm = _pick_tile(M, 512, 8)
    grid = (M // tm,)
    row_spec = pl.BlockSpec((tm, D), lambda i: (i, 0))
    vec_spec = pl.BlockSpec((1, D), lambda i: (0, 0))
    if residual is None:
        kernel = functools.partial(_layernorm_kernel, eps=eps)
        in_specs = [row_spec, vec_spec, vec_spec]
        args = (x, g.reshape(1, D), b.reshape(1, D))
    else:
        kernel = functools.partial(_add_layernorm_kernel, eps=eps)
        in_specs = [row_spec, row_spec, vec_spec, vec_spec]
        args = (x, residual, g.reshape(1, D), b.reshape(1, D))
    return pl.pallas_call(
        kernel,
        out_shape=jax.ShapeDtypeStruct((M, D), jnp.float32),
        grid=grid,
        in_specs=in_specs,
        out_specs=row_spec,
        compiler_params=pltpu.CompilerParams(dimension_semantics=("parallel",)),
    )(*args)


# --------------------------- fused masked attention --------------------------


def _attn_kernel(qkv_ref, m_ref, o_ref, *, num_heads, dh, scale):
    qkv = qkv_ref[0]                       # (S, 3D) bf16
    m = m_ref[0]                           # (1, S) f32: 1.0 keep / 0.0 masked
    D = num_heads * dh
    neg = (m - 1.0) * 1e9                  # 0 where allowed, -1e9 where masked out
    # fold 1/sqrt(dh) into Q once: one (S, D) multiply instead of H x (S, S)
    q_all = qkv[:, 0:D] * scale            # stays bf16 (weak-typed scalar)
    # TODO(synk): for long S, tile query rows / KV blocks (flash-style) to bound
    # the H x S x S f32 score memory on v7x's 64 MiB VMEM.
    # TODO(synk): with dh < 128 each per-head MXU pass underfills the 256-wide
    # MXU on v6e/v7x; packing several heads' V per pass would improve fill.
    for h in range(num_heads):             # static unroll over heads
        qh = q_all[:, h * dh:(h + 1) * dh]
        kh = qkv[:, D + h * dh:D + (h + 1) * dh]
        vh = qkv[:, 2 * D + h * dh:2 * D + (h + 1) * dh]
        # contract on dh directly (no in-kernel transpose), f32 accumulation
        s = jax.lax.dot_general(qh, kh, (((1,), (1,)), ((), ())),
                                preferred_element_type=jnp.float32)
        s = s + neg
        s = s - jnp.max(s, axis=-1, keepdims=True)
        p = jnp.exp(s)
        p = p * pl.reciprocal(jnp.sum(p, axis=-1, keepdims=True), approx=True)
        # store each head's context directly into its output columns (no concat)
        o_ref[0, :, h * dh:(h + 1) * dh] = jnp.dot(
            p.astype(qkv.dtype), vh, preferred_element_type=jnp.float32
        ).astype(o_ref.dtype)


def attention(qkv, mask_f, num_heads, scale):
    """qkv: (B, S, 3D) bf16 (fused Q|K|V), mask_f: (B,1,S) f32 -> (B, S, D) bf16."""
    B, S, D3 = qkv.shape
    D = D3 // 3
    return pl.pallas_call(
        functools.partial(_attn_kernel, num_heads=num_heads, dh=D // num_heads,
                          scale=scale),
        out_shape=jax.ShapeDtypeStruct((B, S, D), jnp.bfloat16),
        grid=(B,),
        in_specs=[
            pl.BlockSpec((1, S, D3), lambda b: (b, 0, 0)),
            pl.BlockSpec((1, 1, S), lambda b: (b, 0, 0)),
        ],
        out_specs=pl.BlockSpec((1, S, D), lambda b: (b, 0, 0)),
        compiler_params=pltpu.CompilerParams(dimension_semantics=("parallel",)),
    )(qkv, mask_f)


# --------------------------- bidirectional LSTM layer -------------------------


def _bilstm_kernel(gx_ref, whh_ref, out_ref, hf, cf, hb, cb, *, seq_len, hidden):
    """Both directions fused in one body: two small recurrent matmuls per step
    interleaved (hides MXU/EUP latency on single-TensorCore v5e/v6e)."""
    H = hidden
    hf[...] = jnp.zeros_like(hf)
    cf[...] = jnp.zeros_like(cf)
    hb[...] = jnp.zeros_like(hb)
    cb[...] = jnp.zeros_like(cb)

    def lstm_cell(gates, c_prev):
        # gate-sliced activations (PyTorch order i,f,g,o): sigmoid on 3H, tanh on H
        i_g = jax.nn.sigmoid(gates[:, 0 * H:1 * H])
        f_g = jax.nn.sigmoid(gates[:, 1 * H:2 * H])
        g_g = jnp.tanh(gates[:, 2 * H:3 * H])
        o_g = jax.nn.sigmoid(gates[:, 3 * H:4 * H])
        c = f_g * c_prev + i_g * g_g
        h = o_g * jnp.tanh(c)
        return h, c

    # TODO(synk): for large S/B/H, chunk the time axis (grid axis 'arbitrary',
    # h/c persist in scratch) so gates/output blocks fit v7x's 64 MiB VMEM.
    @pl.loop(0, seq_len)
    def _(step):
        tf = step
        tb = seq_len - 1 - step
        # input projection was hoisted out; only the recurrent matmuls are serial.
        gates_f = gx_ref[tf, :, 0:4 * H].astype(jnp.float32) + jnp.dot(
            hf[...].astype(jnp.bfloat16), whh_ref[0],
            preferred_element_type=jnp.float32)
        gates_b = gx_ref[tb, :, 4 * H:8 * H].astype(jnp.float32) + jnp.dot(
            hb[...].astype(jnp.bfloat16), whh_ref[1],
            preferred_element_type=jnp.float32)
        h_f, c_f = lstm_cell(gates_f, cf[...])
        h_b, c_b = lstm_cell(gates_b, cb[...])
        hf[...] = h_f
        cf[...] = c_f
        hb[...] = h_b
        cb[...] = c_b
        # write fwd/bwd halves directly into the (S, B, 2H) output (no concat)
        out_ref[tf, :, 0:H] = h_f
        out_ref[tb, :, H:2 * H] = h_b


def bilstm_layer(x_tm, wih_fb, b_fb, whh_fb):
    """x_tm: (S, B, In) f32; wih_fb: (In, 8H) bf16 = [fwd|bwd] input projections;
       b_fb: (8H,) f32 = bias_ih + bias_hh for both dirs; whh_fb: (2, H, 4H) bf16.
       Returns (S, B, 2H) f32: columns [0:H] forward, [H:2H] backward."""
    S, B, In = x_tm.shape
    H = whh_fb.shape[1]
    # Hoisted input projection: one big tiled, pipelined matmul for all timesteps,
    # both directions; emitted bf16 (largest LSTM operand -> half the DMA/VMEM).
    gates = linear(x_tm.reshape(S * B, In), wih_fb, b_fb, out_dtype=jnp.bfloat16)
    gates = gates.reshape(S, B, 8 * H)
    return pl.pallas_call(
        functools.partial(_bilstm_kernel, seq_len=S, hidden=H),
        out_shape=jax.ShapeDtypeStruct((S, B, 2 * H), jnp.float32),
        grid=(1,),
        in_specs=[
            pl.BlockSpec((S, B, 8 * H), lambda i: (0, 0, 0)),
            pl.BlockSpec((2, H, 4 * H), lambda i: (0, 0, 0)),
        ],
        out_specs=pl.BlockSpec((S, B, 2 * H), lambda i: (0, 0, 0)),
        scratch_shapes=[
            pltpu.VMEM((B, H), jnp.float32),   # h fwd
            pltpu.VMEM((B, H), jnp.float32),   # c fwd
            pltpu.VMEM((B, H), jnp.float32),   # h bwd
            pltpu.VMEM((B, H), jnp.float32),   # c bwd
        ],
        compiler_params=pltpu.CompilerParams(dimension_semantics=("arbitrary",)),
    )(gates, whh_fb)


# --------------------------- model (glue) ------------------------------------


def init_params(key, cfg):
    keys = iter(jax.random.split(key, 64))

    def nrm(shape, scale=0.02, dtype=jnp.bfloat16):
        return (scale * jax.random.normal(next(keys), shape)).astype(dtype)

    D, I = cfg["hidden_size"], cfg["intermediate"]
    params = {
        "word_emb": nrm((cfg["vocab"], D), dtype=jnp.float32),
        "pos_emb": nrm((cfg["max_pos"], D), dtype=jnp.float32),
        "tok_emb": nrm((2, D), dtype=jnp.float32),
        "emb_ln_g": jnp.ones((D,), jnp.float32),
        "emb_ln_b": jnp.zeros((D,), jnp.float32),
        "layers": [],
        "lstm": [],
    }
    for _ in range(cfg["bert_layers"]):
        params["layers"].append({
            # fused QKV projection (wq|wk|wv), weights stored bf16 for the MXU
            "wqkv": nrm((D, 3 * D)), "bqkv": jnp.zeros((3 * D,), jnp.float32),
            "wo": nrm((D, D)), "bo": jnp.zeros((D,), jnp.float32),
            "ln1_g": jnp.ones((D,), jnp.float32), "ln1_b": jnp.zeros((D,), jnp.float32),
            "w1": nrm((D, I)), "b1": jnp.zeros((I,), jnp.float32),
            "w2": nrm((I, D)), "b2": jnp.zeros((D,), jnp.float32),
            "ln2_g": jnp.ones((D,), jnp.float32), "ln2_b": jnp.zeros((D,), jnp.float32),
        })
    Hd = cfg["hidden_dim"]
    in_size = D
    for _ in range(cfg["lstm_layers"]):
        params["lstm"].append({
            # fused [forward | backward] input projections; bias = bias_ih + bias_hh
            "wih": nrm((in_size, 8 * Hd), 0.1),
            "b": jnp.zeros((8 * Hd,), jnp.float32),
            "whh": nrm((2, Hd, 4 * Hd), 0.1),
        })
        in_size = 2 * Hd  # bidirectional concat feeds next layer
    # final classifier runs in plain XLA (N=3 is too narrow for a useful kernel)
    params["fc_w"] = nrm((2 * Hd, cfg["output_dim"]), 0.1, dtype=jnp.float32)
    params["fc_b"] = jnp.zeros((cfg["output_dim"],), jnp.float32)
    return params


def bert_lstm_classifier_forward(params, cfg, input_ids, attention_mask):
    B, S = input_ids.shape
    D, H = cfg["hidden_size"], cfg["num_heads"]
    dh = D // H

    # --- mini-BERT encoder (stand-in for BertModel.from_pretrained) ---
    # TODO(synk): token/positional embedding gather is left to XLA (no clean
    # rectangular BlockSpec for a vocab gather at this scale).
    emb = (
        params["word_emb"][input_ids]
        + params["pos_emb"][:S][None, :, :]
        + params["tok_emb"][0][None, None, :]
    )
    x = layernorm(emb.reshape(B * S, D), params["emb_ln_g"], params["emb_ln_b"])
    mask_f = attention_mask.astype(jnp.float32).reshape(B, 1, S)

    for lp in params["layers"]:
        # fused QKV projection, emitted in bf16 directly for the attention kernel
        qkv = linear(x, lp["wqkv"], lp["bqkv"], out_dtype=jnp.bfloat16)  # (B*S, 3D)
        ctx = attention(qkv.reshape(B, S, 3 * D), mask_f, H, 1.0 / (dh ** 0.5))
        attn_out = linear(ctx.reshape(B * S, D), lp["wo"], lp["bo"])
        x = layernorm(attn_out, lp["ln1_g"], lp["ln1_b"], residual=x)
        h1 = linear(x, lp["w1"], lp["b1"], activation="gelu",
                    out_dtype=jnp.bfloat16)          # GELU fused into epilogue
        ff = linear(h1, lp["w2"], lp["b2"])
        x = layernorm(ff, lp["ln2_g"], lp["ln2_b"], residual=x)

    # --- bidirectional multi-layer LSTM (batch_first=True semantics) ---
    h_tm = x.reshape(B, S, D).transpose(1, 0, 2)          # (S, B, D) time-major
    for lp in params["lstm"]:
        h_tm = bilstm_layer(h_tm, lp["wih"], lp["b"], lp["whh"])   # (S, B, 2*Hd)
        # TODO(synk): nn.LSTM inter-layer dropout is train-time only; identity here.

    last = h_tm[S - 1]        # == lstm_output[:, -1, :]  (B, 2*hidden_dim)
    # nn.Dropout -> identity at inference.  Classifier (N=3) in plain XLA.
    logits = jnp.dot(last, params["fc_w"]) + params["fc_b"]
    return logits


if __name__ == "__main__":
    cfg = dict(
        vocab=64, max_pos=16, hidden_size=32, num_heads=4, intermediate=64,
        bert_layers=2, hidden_dim=32, lstm_layers=2, output_dim=3,
    )
    key = jax.random.PRNGKey(0)
    pkey, ikey = jax.random.split(key)
    params = init_params(pkey, cfg)

    B, S = 2, 8
    input_ids = jax.random.randint(ikey, (B, S), 0, cfg["vocab"], dtype=jnp.int32)
    attention_mask = jnp.ones((B, S), jnp.int32).at[1, 6:].set(0)

    fwd = jax.jit(lambda p, ids, m: bert_lstm_classifier_forward(p, cfg, ids, m))
    logits = fwd(params, input_ids, attention_mask)
    jax.block_until_ready(logits)
    assert logits.shape == (B, cfg["output_dim"]), logits.shape
    print("KERNEL_OK")
</pallas_src>

<mosaic_0001>
module attributes {stable_mosaic.version = 11 : i64} {
  func.func @_linear_kernel(%arg0: i32, %arg1: i32, %arg2: i32, %arg3: memref<16x32xbf16, #tpu.memory_space<vmem>>, %arg4: memref<32x32xbf16, #tpu.memory_space<vmem>>, %arg5: memref<1x32xf32, #tpu.memory_space<vmem>>, %arg6: memref<16x32xf32, #tpu.memory_space<vmem>>, %arg7: memref<16x32xf32, #tpu.memory_space<vmem>>) attributes {dimension_semantics = [#tpu.dimension_semantics<parallel>, #tpu.dimension_semantics<parallel>, #tpu.dimension_semantics<arbitrary>], iteration_bounds = array<i64: 1, 1, 1>, scalar_prefetch = 0 : i64, scratch_operands = 1 : i64, tpu.core_type = #tpu.core_type<tc>, window_params = [{transform_indices = @transform_0, window_bounds = array<i64: 16, 32>}, {transform_indices = @transform_1, window_bounds = array<i64: 32, 32>}, {transform_indices = @transform_2, window_bounds = array<i64: 1, 32>}, {transform_indices = @transform_3, window_bounds = array<i64: 16, 32>}]} {
    %c0_i32 = arith.constant 0 : i32
    %0 = arith.cmpi eq, %arg2, %c0_i32 : i32
    %1 = arith.extui %0 : i1 to i32
    %c0_i32_0 = arith.constant 0 : i32
    %2 = arith.cmpi ne, %1, %c0_i32_0 : i32
    scf.if %2 {
      %cst_10 = arith.constant 0.000000e+00 : f32
      %12 = vector.broadcast %cst_10 : f32 to vector<16x32xf32>
      %c0_11 = arith.constant 0 : index
      %c0_12 = arith.constant 0 : index
      %13 = vector.load %arg7[%c0_11, %c0_12] : memref<16x32xf32, #tpu.memory_space<vmem>>, vector<16x32xf32>
      tpu.vector_store %arg7[%c0_11, %c0_12], %12 {strides = array<i32>} : memref<16x32xf32, #tpu.memory_space<vmem>>, vector<16x32xf32>,
    } else {
    }
    %c0 = arith.constant 0 : index
    %c0_1 = arith.constant 0 : index
    %3 = vector.load %arg7[%c0, %c0_1] : memref<16x32xf32, #tpu.memory_space<vmem>>, vector<16x32xf32>
    %c0_2 = arith.constant 0 : index
    %c0_3 = arith.constant 0 : index
    %4 = vector.load %arg3[%c0_2, %c0_3] : memref<16x32xbf16, #tpu.memory_space<vmem>>, vector<16x32xbf16>
    %c0_4 = arith.constant 0 : index
    %c0_5 = arith.constant 0 : index
    %5 = vector.load %arg4[%c0_4, %c0_5] : memref<32x32xbf16, #tpu.memory_space<vmem>>, vector<32x32xbf16>
    %cst = arith.constant dense<0.000000e+00> : vector<16x32xf32>
    %6 = tpu.matmul %4, %5, %cst {dimension_numbers = #tpu.dot_dimension_numbers<[1], [0], [0], [1], [0, 0, 1, 1], [], []>} : vector<16x32xbf16>, vector<32x32xbf16>, vector<16x32xf32> -> vector<16x32xf32>
    %7 = arith.addf %3, %6 : vector<16x32xf32>
    %c0_6 = arith.constant 0 : index
    %c0_7 = arith.constant 0 : index
    %8 = vector.load %arg7[%c0_6, %c0_7] : memref<16x32xf32, #tpu.memory_space<vmem>>, vector<16x32xf32>
    tpu.vector_store %arg7[%c0_6, %c0_7], %7 {strides = array<i32>} : memref<16x32xf32, #tpu.memory_space<vmem>>, vector<16x32xf32>,
    %c0_i32_8 = arith.constant 0 : i32
    %9 = arith.cmpi eq, %arg2, %c0_i32_8 : i32
    %10 = arith.extui %9 : i1 to i32
    %c0_i32_9 = arith.constant 0 : i32
    %11 = arith.cmpi ne, %10, %c0_i32_9 : i32
    scf.if %11 {
      %c0_10 = arith.constant 0 : index
      %c0_11 = arith.constant 0 : index
      %12 = vector.load %arg7[%c0_10, %c0_11] : memref<16x32xf32, #tpu.memory_space<vmem>>, vector<16x32xf32>
      %c0_12 = arith.constant 0 : index
      %c0_13 = arith.constant 0 : index
      %13 = vector.load %arg5[%c0_12, %c0_13] : memref<1x32xf32, #tpu.memory_space<vmem>>, vector<1x32xf32>
      %14 = vector.broadcast %13 : vector<1x32xf32> to vector<16x32xf32>
      %15 = arith.addf %12, %14 : vector<16x32xf32>
      %c0_14 = arith.constant 0 : index
      %c0_15 = arith.constant 0 : index
      %16 = vector.load %arg6[%c0_14, %c0_15] : memref<16x32xf32, #tpu.memory_space<vmem>>, vector<16x32xf32>
      tpu.vector_store %arg6[%c0_14, %c0_15], %15 {strides = array<i32>} : memref<16x32xf32, #tpu.memory_space<vmem>>, vector<16x32xf32>,
    } else {
    }
    return
  }
  func.func @transform_0(%arg0: i32, %arg1: i32, %arg2: i32) -> (i32, i32) {
    %c0_i32 = arith.constant 0 : i32
    return %arg0, %arg2 : i32, i32
  }
  func.func @transform_1(%arg0: i32, %arg1: i32, %arg2: i32) -> (i32, i32) {
    %c0_i32 = arith.constant 0 : i32
    return %arg2, %arg1 : i32, i32
  }
  func.func @transform_2(%arg0: i32, %arg1: i32, %arg2: i32) -> (i32, i32) {
    %c0_i32 = arith.constant 0 : i32
    %c0_i32_0 = arith.constant 0 : i32
    return %c0_i32, %arg1 : i32, i32
  }
  func.func @transform_3(%arg0: i32, %arg1: i32, %arg2: i32) -> (i32, i32) {
    %c0_i32 = arith.constant 0 : i32
    return %arg0, %arg1 : i32, i32
  }
}

module attributes {stable_mosaic.version = 11 : i64} {
  func.func @_layernorm_kernel(%arg0: i32, %arg1: memref<16x32xf32, #tpu.memory_space<vmem>>, %arg2: memref<1x32xf32, #tpu.memory_space<vmem>>, %arg3: memref<1x32xf32, #tpu.memory_space<vmem>>, %arg4: memref<16x32xf32, #tpu.memory_space<vmem>>) attributes {dimension_semantics = [#tpu.dimension_semantics<parallel>], iteration_bounds = array<i64: 1>, scalar_prefetch = 0 : i64, scratch_operands = 0 : i64, tpu.core_type = #tpu.core_type<tc>, window_params = [{transform_indices = @transform_0, window_bounds = array<i64: 16, 32>}, {pipeline_mode = #tpu.pipeline_mode<synchronous>, transform_indices = @transform_1, window_bounds = array<i64: 1, 32>}, {pipeline_mode = #tpu.pipeline_mode<synchronous>, transform_indices = @transform_2, window_bounds = array<i64: 1, 32>}, {transform_indices = @transform_3, window_bounds = array<i64: 16, 32>}]} {
    %c0 = arith.constant 0 : index
    %c0_0 = arith.constant 0 : index
    %0 = vector.load %arg1[%c0, %c0_0] : memref<16x32xf32, #tpu.memory_space<vmem>>, vector<16x32xf32>
    %cst = arith.constant dense<0.000000e+00> : vector<16xf32>
    %1 = vector.multi_reduction <add>, %0, %cst [1] : vector<16x32xf32> to vector<16xf32>
    %2 = vector.shape_cast %1 : vector<16xf32> to vector<16x1xf32>
    %cst_1 = arith.constant 3.200000e+01 : f32
    %3 = vector.broadcast %cst_1 : f32 to vector<16x1xf32>
    %4 = arith.divf %2, %3 : vector<16x1xf32>
    %5 = vector.broadcast %4 : vector<16x1xf32> to vector<16x32xf32>
    %6 = arith.subf %0, %5 : vector<16x32xf32>
    %7 = arith.mulf %6, %6 : vector<16x32xf32>
    %cst_2 = arith.constant dense<0.000000e+00> : vector<16xf32>
    %8 = vector.multi_reduction <add>, %7, %cst_2 [1] : vector<16x32xf32> to vector<16xf32>
    %9 = vector.shape_cast %8 : vector<16xf32> to vector<16x1xf32>
    %cst_3 = arith.constant 3.200000e+01 : f32
    %10 = vector.broadcast %cst_3 : f32 to vector<16x1xf32>
    %11 = arith.divf %9, %10 : vector<16x1xf32>
    %12 = vector.broadcast %4 : vector<16x1xf32> to vector<16x32xf32>
    %13 = arith.subf %0, %12 : vector<16x32xf32>
    %cst_4 = arith.constant 9.99999996E-13 : f32
    %14 = vector.broadcast %cst_4 : f32 to vector<16x1xf32>
    %15 = arith.addf %11, %14 : vector<16x1xf32>
    %16 = math.rsqrt %15 : vector<16x1xf32>
    %17 = vector.broadcast %16 : vector<16x1xf32> to vector<16x32xf32>
    %18 = arith.mulf %13, %17 : vector<16x32xf32>
    %c0_5 = arith.constant 0 : index
    %c0_6 = arith.constant 0 : index
    %19 = vector.load %arg2[%c0_5, %c0_6] : memref<1x32xf32, #tpu.memory_space<vmem>>, vector<1x32xf32>
    %20 = vector.broadcast %19 : vector<1x32xf32> to vector<16x32xf32>
    %21 = arith.mulf %18, %20 : vector<16x32xf32>
    %c0_7 = arith.constant 0 : index
    %c0_8 = arith.constant 0 : index
    %22 = vector.load %arg3[%c0_7, %c0_8] : memref<1x32xf32, #tpu.memory_space<vmem>>, vector<1x32xf32>
    %23 = vector.broadcast %22 : vector<1x32xf32> to vector<16x32xf32>
    %24 = arith.addf %21, %23 : vector<16x32xf32>
    %c0_9 = arith.constant 0 : index
    %c0_10 = arith.constant 0 : index
    %25 = vector.load %arg4[%c0_9, %c0_10] : memref<16x32xf32, #tpu.memory_space<vmem>>, vector<16x32xf32>
    tpu.vector_store %arg4[%c0_9, %c0_10], %24 {strides = array<i32>} : memref<16x32xf32, #tpu.memory_space<vmem>>, vector<16x32xf32>,
    return
  }
  func.func @transform_0(%arg0: i32) -> (i32, i32) {
    %c0_i32 = arith.constant 0 : i32
    %c0_i32_0 = arith.constant 0 : i32
    return %arg0, %c0_i32 : i32, i32
  }
  func.func @transform_1(%arg0: i32) -> (i32, i32) {
    %c0_i32 = arith.constant 0 : i32
    %c0_i32_0 = arith.constant 0 : i32
    %c0_i32_1 = arith.constant 0 : i32
    return %c0_i32, %c0_i32_0 : i32, i32
  }
  func.func @transform_2(%arg0: i32) -> (i32, i32) {
    %c0_i32 = arith.constant 0 : i32
    %c0_i32_0 = arith.constant 0 : i32
    %c0_i32_1 = arith.constant 0 : i32
    return %c0_i32, %c0_i32_0 : i32, i32
  }
  func.func @transform_3(%arg0: i32) -> (i32, i32) {
    %c0_i32 = arith.constant 0 : i32
    %c0_i32_0 = arith.constant 0 : i32
    return %arg0, %c0_i32 : i32, i32
  }
}

module attributes {stable_mosaic.version = 11 : i64} {
  func.func @_linear_kernel(%arg0: i32, %arg1: i32, %arg2: i32, %arg3: memref<16x32xbf16, #tpu.memory_space<vmem>>, %arg4: memref<32x96xbf16, #tpu.memory_space<vmem>>, %arg5: memref<1x96xf32, #tpu.memory_space<vmem>>, %arg6: memref<16x96xbf16, #tpu.memory_space<vmem>>, %arg7: memref<16x96xf32, #tpu.memory_space<vmem>>) attributes {dimension_semantics = [#tpu.dimension_semantics<parallel>, #tpu.dimension_semantics<parallel>, #tpu.dimension_semantics<arbitrary>], iteration_bounds = array<i64: 1, 1, 1>, scalar_prefetch = 0 : i64, scratch_operands = 1 : i64, tpu.core_type = #tpu.core_type<tc>, window_params = [{transform_indices = @transform_0, window_bounds = array<i64: 16, 32>}, {transform_indices = @transform_1, window_bounds = array<i64: 32, 96>}, {transform_indices = @transform_2, window_bounds = array<i64: 1, 96>}, {transform_indices = @transform_3, window_bounds = array<i64: 16, 96>}]} {
    %c0_i32 = arith.constant 0 : i32
    %0 = arith.cmpi eq, %arg2, %c0_i32 : i32
    %1 = arith.extui %0 : i1 to i32
    %c0_i32_0 = arith.constant 0 : i32
    %2 = arith.cmpi ne, %1, %c0_i32_0 : i32
    scf.if %2 {
      %cst_10 = arith.constant 0.000000e+00 : f32
      %12 = vector.broadcast %cst_10 : f32 to vector<16x96xf32>
      %c0_11 = arith.constant 0 : index
      %c0_12 = arith.constant 0 : index
      %13 = vector.load %arg7[%c0_11, %c0_12] : memref<16x96xf32, #tpu.memory_space<vmem>>, vector<16x96xf32>
      tpu.vector_store %arg7[%c0_11, %c0_12], %12 {strides = array<i32>} : memref<16x96xf32, #tpu.memory_space<vmem>>, vector<16x96xf32>,
    } else {
    }
    %c0 = arith.constant 0 : index
    %c0_1 = arith.constant 0 : index
    %3 = vector.load %arg7[%c0, %c0_1] : memref<16x96xf32, #tpu.memory_space<vmem>>, vector<16x96xf32>
    %c0_2 = arith.constant 0 : index
    %c0_3 = arith.constant 0 : index
    %4 = vector.load %arg3[%c0_2, %c0_3] : memref<16x32xbf16, #tpu.memory_space<vmem>>, vector<16x32xbf16>
    %c0_4 = arith.constant 0 : index
    %c0_5 = arith.constant 0 : index
    %5 = vector.load %arg4[%c0_4, %c0_5] : memref<32x96xbf16, #tpu.memory_space<vmem>>, vector<32x96xbf16>
    %cst = arith.constant dense<0.000000e+00> : vector<16x96xf32>
    %6 = tpu.matmul %4, %5, %cst {dimension_numbers = #tpu.dot_dimension_numbers<[1], [0], [0], [1], [0, 0, 1, 1], [], []>} : vector<16x32xbf16>, vector<32x96xbf16>, vector<16x96xf32> -> vector<16x96xf32>
    %7 = arith.addf %3, %6 : vector<16x96xf32>
    %c0_6 = arith.constant 0 : index
    %c0_7 = arith.constant 0 : index
    %8 = vector.load %arg7[%c0_6, %c0_7] : memref<16x96xf32, #tpu.memory_space<vmem>>, vector<16x96xf32>
    tpu.vector_store %arg7[%c0_6, %c0_7], %7 {strides = array<i32>} : memref<16x96xf32, #tpu.memory_space<vmem>>, vector<16x96xf32>,
    %c0_i32_8 = arith.constant 0 : i32
    %9 = arith.cmpi eq, %arg2, %c0_i32_8 : i32
    %10 = arith.extui %9 : i1 to i32
    %c0_i32_9 = arith.constant 0 : i32
    %11 = arith.cmpi ne, %10, %c0_i32_9 : i32
    scf.if %11 {
      %c0_10 = arith.constant 0 : index
      %c0_11 = arith.constant 0 : index
      %12 = vector.load %arg7[%c0_10, %c0_11] : memref<16x96xf32, #tpu.memory_space<vmem>>, vector<16x96xf32>
      %c0_12 = arith.constant 0 : index
      %c0_13 = arith.constant 0 : index
      %13 = vector.load %arg5[%c0_12, %c0_13] : memref<1x96xf32, #tpu.memory_space<vmem>>, vector<1x96xf32>
      %14 = vector.broadcast %13 : vector<1x96xf32> to vector<16x96xf32>
      %15 = arith.addf %12, %14 : vector<16x96xf32>
      %16 = arith.truncf %15 : vector<16x96xf32> to vector<16x96xbf16>
      %c0_14 = arith.constant 0 : index
      %c0_15 = arith.constant 0 : index
      %17 = vector.load %arg6[%c0_14, %c0_15] : memref<16x96xbf16, #tpu.memory_space<vmem>>, vector<16x96xbf16>
      tpu.vector_store %arg6[%c0_14, %c0_15], %16 {strides = array<i32>} : memref<16x96xbf16, #tpu.memory_space<vmem>>, vector<16x96xbf16>,
    } else {
    }
    return
  }
  func.func @transform_0(%arg0: i32, %arg1: i32, %arg2: i32) -> (i32, i32) {
    %c0_i32 = arith.constant 0 : i32
    return %arg0, %arg2 : i32, i32
  }
  func.func @transform_1(%arg0: i32, %arg1: i32, %arg2: i32) -> (i32, i32) {
    %c0_i32 = arith.constant 0 : i32
    return %arg2, %arg1 : i32, i32
  }
  func.func @transform_2(%arg0: i32, %arg1: i32, %arg2: i32) -> (i32, i32) {
    %c0_i32 = arith.constant 0 : i32
    %c0_i32_0 = arith.constant 0 : i32
    return %c0_i32, %arg1 : i32, i32
  }
  func.func @transform_3(%arg0: i32, %arg1: i32, %arg2: i32) -> (i32, i32) {
    %c0_i32 = arith.constant 0 : i32
    return %arg0, %arg1 : i32, i32
  }
}

module attributes {stable_mosaic.version = 11 : i64} {
  func.func @_attn_kernel(%arg0: i32, %arg1: memref<1x8x96xbf16, #tpu.memory_space<vmem>>, %arg2: memref<1x1x8xf32, #tpu.memory_space<vmem>>, %arg3: memref<1x8x32xbf16, #tpu.memory_space<vmem>>) attributes {dimension_semantics = [#tpu.dimension_semantics<parallel>], iteration_bounds = array<i64: 2>, scalar_prefetch = 0 : i64, scratch_operands = 0 : i64, tpu.core_type = #tpu.core_type<tc>, window_params = [{transform_indices = @transform_0, window_bounds = array<i64: 1, 8, 96>}, {transform_indices = @transform_1, window_bounds = array<i64: 1, 1, 8>}, {transform_indices = @transform_2, window_bounds = array<i64: 1, 8, 32>}]} {
    %c0 = arith.constant 0 : index
    %c0_0 = arith.constant 0 : index
    %c0_1 = arith.constant 0 : index
    %0 = vector.load %arg1[%c0, %c0_0, %c0_1] : memref<1x8x96xbf16, #tpu.memory_space<vmem>>, vector<1x8x96xbf16>
    %1 = vector.shape_cast %0 : vector<1x8x96xbf16> to vector<8x96xbf16>
    %c0_2 = arith.constant 0 : index
    %c0_3 = arith.constant 0 : index
    %c0_4 = arith.constant 0 : index
    %2 = vector.load %arg2[%c0_2, %c0_3, %c0_4] : memref<1x1x8xf32, #tpu.memory_space<vmem>>, vector<1x1x8xf32>
    %3 = vector.shape_cast %2 : vector<1x1x8xf32> to vector<1x8xf32>
    %cst = arith.constant 1.000000e+00 : f32
    %4 = vector.broadcast %cst : f32 to vector<1x8xf32>
    %5 = arith.subf %3, %4 : vector<1x8xf32>
    %cst_5 = arith.constant 1.000000e+09 : f32
    %6 = vector.broadcast %cst_5 : f32 to vector<1x8xf32>
    %7 = arith.mulf %5, %6 : vector<1x8xf32>
    %8 = vector.extract_strided_slice %1 {offsets = [0, 0], sizes = [8, 32], strides = [1, 1]} : vector<8x96xbf16> to vector<8x32xbf16>
    %cst_6 = arith.constant 3.535160e-01 : bf16
    %9 = vector.broadcast %cst_6 : bf16 to vector<8x32xbf16>
    %10 = arith.mulf %8, %9 : vector<8x32xbf16>
    %11 = vector.extract_strided_slice %10 {offsets = [0, 0], sizes = [8, 8], strides = [1, 1]} : vector<8x32xbf16> to vector<8x8xbf16>
    %12 = vector.extract_strided_slice %1 {offsets = [0, 32], sizes = [8, 8], strides = [1, 1]} : vector<8x96xbf16> to vector<8x8xbf16>
    %13 = vector.extract_strided_slice %1 {offsets = [0, 64], sizes = [8, 8], strides = [1, 1]} : vector<8x96xbf16> to vector<8x8xbf16>
    %cst_7 = arith.constant dense<0.000000e+00> : vector<8x8xf32>
    %14 = tpu.matmul %11, %12, %cst_7 {dimension_numbers = #tpu.dot_dimension_numbers<[1], [1], [0], [0], [0, 0, 1, 0], [], []>} : vector<8x8xbf16>, vector<8x8xbf16>, vector<8x8xf32> -> vector<8x8xf32>
    %15 = vector.broadcast %7 : vector<1x8xf32> to vector<8x8xf32>
    %16 = arith.addf %14, %15 : vector<8x8xf32>
    %cst_8 = arith.constant dense<0xFF800000> : vector<8xf32>
    %17 = vector.multi_reduction <maximumf>, %16, %cst_8 [1] : vector<8x8xf32> to vector<8xf32>
    %18 = vector.shape_cast %17 : vector<8xf32> to vector<8x1xf32>
    %19 = vector.broadcast %18 : vector<8x1xf32> to vector<8x8xf32>
    %20 = arith.subf %16, %19 : vector<8x8xf32>
    %21 = math.exp %20 : vector<8x8xf32>
    %cst_9 = arith.constant dense<0.000000e+00> : vector<8xf32>
    %22 = vector.multi_reduction <add>, %21, %cst_9 [1] : vector<8x8xf32> to vector<8xf32>
    %23 = vector.shape_cast %22 : vector<8xf32> to vector<8x1xf32>
    %24 = tpu.reciprocal %23 {approx = true} : vector<8x1xf32> -> vector<8x1xf32>
    %25 = vector.broadcast %24 : vector<8x1xf32> to vector<8x8xf32>
    %26 = arith.mulf %21, %25 : vector<8x8xf32>
    %27 = arith.truncf %26 : vector<8x8xf32> to vector<8x8xbf16>
    %cst_10 = arith.constant dense<0.000000e+00> : vector<8x8xf32>
    %28 = tpu.matmul %27, %13, %cst_10 {dimension_numbers = #tpu.dot_dimension_numbers<[1], [0], [0], [1], [0, 0, 1, 1], [], []>} : vector<8x8xbf16>, vector<8x8xbf16>, vector<8x8xf32> -> vector<8x8xf32>
    %29 = arith.truncf %28 : vector<8x8xf32> to vector<8x8xbf16>
    %c0_11 = arith.constant 0 : index
    %c0_12 = arith.constant 0 : index
    %c0_13 = arith.constant 0 : index
    %30 = vector.load %arg3[%c0_11, %c0_12, %c0_13] : memref<1x8x32xbf16, #tpu.memory_space<vmem>>, vector<1x8x8xbf16>
    %31 = vector.shape_cast %30 : vector<1x8x8xbf16> to vector<8x8xbf16>
    %32 = vector.shape_cast %29 : vector<8x8xbf16> to vector<1x8x8xbf16>
    tpu.vector_store %arg3[%c0_11, %c0_12, %c0_13], %32 {strides = array<i32>} : memref<1x8x32xbf16, #tpu.memory_space<vmem>>, vector<1x8x8xbf16>,
    %33 = vector.extract_strided_slice %10 {offsets = [0, 8], sizes = [8, 8], strides = [1, 1]} : vector<8x32xbf16> to vector<8x8xbf16>
    %34 = vector.extract_strided_slice %1 {offsets = [0, 40], sizes = [8, 8], strides = [1, 1]} : vector<8x96xbf16> to vector<8x8xbf16>
    %35 = vector.extract_strided_slice %1 {offsets = [0, 72], sizes = [8, 8], strides = [1, 1]} : vector<8x96xbf16> to vector<8x8xbf16>
    %cst_14 = arith.constant dense<0.000000e+00> : vector<8x8xf32>
    %36 = tpu.matmul %33, %34, %cst_14 {dimension_numbers = #tpu.dot_dimension_numbers<[1], [1], [0], [0], [0, 0, 1, 0], [], []>} : vector<8x8xbf16>, vector<8x8xbf16>, vector<8x8xf32> -> vector<8x8xf32>
    %37 = vector.broadcast %7 : vector<1x8xf32> to vector<8x8xf32>
    %38 = arith.addf %36, %37 : vector<8x8xf32>
    %cst_15 = arith.constant dense<0xFF800000> : vector<8xf32>
    %39 = vector.multi_reduction <maximumf>, %38, %cst_15 [1] : vector<8x8xf32> to vector<8xf32>
    %40 = vector.shape_cast %39 : vector<8xf32> to vector<8x1xf32>
    %41 = vector.broadcast %40 : vector<8x1xf32> to vector<8x8xf32>
    %42 = arith.subf %38, %41 : vector<8x8xf32>
    %43 = math.exp %42 : vector<8x8xf32>
    %cst_16 = arith.constant dense<0.000000e+00> : vector<8xf32>
    %44 = vector.multi_reduction <add>, %43, %cst_16 [1] : vector<8x8xf32> to vector<8xf32>
    %45 = vector.shape_cast %44 : vector<8xf32> to vector<8x1xf32>
    %46 = tpu.reciprocal %45 {approx = true} : vector<8x1xf32> -> vector<8x1xf32>
    %47 = vector.broadcast %46 : vector<8x1xf32> to vector<8x8xf32>
    %48 = arith.mulf %43, %47 : vector<8x8xf32>
    %49 = arith.truncf %48 : vector<8x8xf32> to vector<8x8xbf16>
    %cst_17 = arith.constant dense<0.000000e+00> : vector<8x8xf32>
    %50 = tpu.matmul %49, %35, %cst_17 {dimension_numbers = #tpu.dot_dimension_numbers<[1], [0], [0], [1], [0, 0, 1, 1], [], []>} : vector<8x8xbf16>, vector<8x8xbf16>, vector<8x8xf32> -> vector<8x8xf32>
    %51 = arith.truncf %50 : vector<8x8xf32> to vector<8x8xbf16>
    %c0_18 = arith.constant 0 : index
    %c0_19 = arith.constant 0 : index
    %c8 = arith.constant 8 : index
    %52 = vector.load %arg3[%c0_18, %c0_19, %c8] : memref<1x8x32xbf16, #tpu.memory_space<vmem>>, vector<1x8x8xbf16>
    %53 = vector.shape_cast %52 : vector<1x8x8xbf16> to vector<8x8xbf16>
    %54 = vector.shape_cast %51 : vector<8x8xbf16> to vector<1x8x8xbf16>
    tpu.vector_store %arg3[%c0_18, %c0_19, %c8], %54 {strides = array<i32>} : memref<1x8x32xbf16, #tpu.memory_space<vmem>>, vector<1x8x8xbf16>,
    %55 = vector.extract_strided_slice %10 {offsets = [0, 16], sizes = [8, 8], strides = [1, 1]} : vector<8x32xbf16> to vector<8x8xbf16>
    %56 = vector.extract_strided_slice %1 {offsets = [0, 48], sizes = [8, 8], strides = [1, 1]} : vector<8x96xbf16> to vector<8x8xbf16>
    %57 = vector.extract_strided_slice %1 {offsets = [0, 80], sizes = [8, 8], strides = [1, 1]} : vector<8x96xbf16> to vector<8x8xbf16>
    %cst_20 = arith.constant dense<0.000000e+00> : vector<8x8xf32>
    %58 = tpu.matmul %55, %56, %cst_20 {dimension_numbers = #tpu.dot_dimension_numbers<[1], [1], [0], [0], [0, 0, 1, 0], [], []>} : vector<8x8xbf16>, vector<8x8xbf16>, vector<8x8xf32> -> vector<8x8xf32>
    %59 = vector.broadcast %7 : vector<1x8xf32> to vector<8x8xf32>
    %60 = arith.addf %58, %59 : vector<8x8xf32>
    %cst_21 = arith.constant dense<0xFF800000> : vector<8xf32>
    %61 = vector.multi_reduction <maximumf>, %60, %cst_21 [1] : vector<8x8xf32> to vector<8xf32>
    %62 = vector.shape_cast %61 : vector<8xf32> to vector<8x1xf32>
    %63 = vector.broadcast %62 : vector<8x1xf32> to vector<8x8xf32>
    %64 = arith.subf %60, %63 : vector<8x8xf32>
    %65 = math.exp %64 : vector<8x8xf32>
    %cst_22 = arith.constant dense<0.000000e+00> : vector<8xf32>
    %66 = vector.multi_reduction <add>, %65, %cst_22 [1] : vector<8x8xf32> to vector<8xf32>
    %67 = vector.shape_cast %66 : vector<8xf32> to vector<8x1xf32>
    %68 = tpu.reciprocal %67 {approx = true} : vector<8x1xf32> -> vector<8x1xf32>
    %69 = vector.broadcast %68 : vector<8x1xf32> to vector<8x8xf32>
    %70 = arith.mulf %65, %69 : vector<8x8xf32>
    %71 = arith.truncf %70 : vector<8x8xf32> to vector<8x8xbf16>
    %cst_23 = arith.constant dense<0.000000e+00> : vector<8x8xf32>
    %72 = tpu.matmul %71, %57, %cst_23 {dimension_numbers = #tpu.dot_dimension_numbers<[1], [0], [0], [1], [0, 0, 1, 1], [], []>} : vector<8x8xbf16>, vector<8x8xbf16>, vector<8x8xf32> -> vector<8x8xf32>
    %73 = arith.truncf %72 : vector<8x8xf32> to vector<8x8xbf16>
    %c0_24 = arith.constant 0 : index
    %c0_25 = arith.constant 0 : index
    %c16 = arith.constant 16 : index
    %74 = vector.load %arg3[%c0_24, %c0_25, %c16] : memref<1x8x32xbf16, #tpu.memory_space<vmem>>, vector<1x8x8xbf16>
    %75 = vector.shape_cast %74 : vector<1x8x8xbf16> to vector<8x8xbf16>
    %76 = vector.shape_cast %73 : vector<8x8xbf16> to vector<1x8x8xbf16>
    tpu.vector_store %arg3[%c0_24, %c0_25, %c16], %76 {strides = array<i32>} : memref<1x8x32xbf16, #tpu.memory_space<vmem>>, vector<1x8x8xbf16>,
    %77 = vector.extract_strided_slice %10 {offsets = [0, 24], sizes = [8, 8], strides = [1, 1]} : vector<8x32xbf16> to vector<8x8xbf16>
    %78 = vector.extract_strided_slice %1 {offsets = [0, 56], sizes = [8, 8], strides = [1, 1]} : vector<8x96xbf16> to vector<8x8xbf16>
    %79 = vector.extract_strided_slice %1 {offsets = [0, 88], sizes = [8, 8], strides = [1, 1]} : vector<8x96xbf16> to vector<8x8xbf16>
    %cst_26 = arith.constant dense<0.000000e+00> : vector<8x8xf32>
    %80 = tpu.matmul %77, %78, %cst_26 {dimension_numbers = #tpu.dot_dimension_numbers<[1], [1], [0], [0], [0, 0, 1, 0], [], []>} : vector<8x8xbf16>, vector<8x8xbf16>, vector<8x8xf32> -> vector<8x8xf32>
    %81 = vector.broadcast %7 : vector<1x8xf32> to vector<8x8xf32>
    %82 = arith.addf %80, %81 : vector<8x8xf32>
    %cst_27 = arith.constant dense<0xFF800000> : vector<8xf32>
    %83 = vector.multi_reduction <maximumf>, %82, %cst_27 [1] : vector<8x8xf32> to vector<8xf32>
    %84 = vector.shape_cast %83 : vector<8xf32> to vector<8x1xf32>
    %85 = vector.broadcast %84 : vector<8x1xf32> to vector<8x8xf32>
    %86 = arith.subf %82, %85 : vector<8x8xf32>
    %87 = math.exp %86 : vector<8x8xf32>
    %cst_28 = arith.constant dense<0.000000e+00> : vector<8xf32>
    %88 = vector.multi_reduction <add>, %87, %cst_28 [1] : vector<8x8xf32> to vector<8xf32>
    %89 = vector.shape_cast %88 : vector<8xf32> to vector<8x1xf32>
    %90 = tpu.reciprocal %89 {approx = true} : vector<8x1xf32> -> vector<8x1xf32>
    %91 = vector.broadcast %90 : vector<8x1xf32> to vector<8x8xf32>
    %92 = arith.mulf %87, %91 : vector<8x8xf32>
    %93 = arith.truncf %92 : vector<8x8xf32> to vector<8x8xbf16>
    %cst_29 = arith.constant dense<0.000000e+00> : vector<8x8xf32>
    %94 = tpu.matmul %93, %79, %cst_29 {dimension_numbers = #tpu.dot_dimension_numbers<[1], [0], [0], [1], [0, 0, 1, 1], [], []>} : vector<8x8xbf16>, vector<8x8xbf16>, vector<8x8xf32> -> vector<8x8xf32>
    %95 = arith.truncf %94 : vector<8x8xf32> to vector<8x8xbf16>
    %c0_30 = arith.constant 0 : index
    %c0_31 = arith.constant 0 : index
    %c24 = arith.constant 24 : index
    %96 = vector.load %arg3[%c0_30, %c0_31, %c24] : memref<1x8x32xbf16, #tpu.memory_space<vmem>>, vector<1x8x8xbf16>
    %97 = vector.shape_cast %96 : vector<1x8x8xbf16> to vector<8x8xbf16>
    %98 = vector.shape_cast %95 : vector<8x8xbf16> to vector<1x8x8xbf16>
    tpu.vector_store %arg3[%c0_30, %c0_31, %c24], %98 {strides = array<i32>} : memref<1x8x32xbf16, #tpu.memory_space<vmem>>, vector<1x8x8xbf16>,
    return
  }
  func.func @transform_0(%arg0: i32) -> (i32, i32, i32) {
    %c0_i32 = arith.constant 0 : i32
    %c0_i32_0 = arith.constant 0 : i32
    %c0_i32_1 = arith.constant 0 : i32
    return %arg0, %c0_i32, %c0_i32_0 : i32, i32, i32
  }
  func.func @transform_1(%arg0: i32) -> (i32, i32, i32) {
    %c0_i32 = arith.constant 0 : i32
    %c0_i32_0 = arith.constant 0 : i32
    %c0_i32_1 = arith.constant 0 : i32
    return %arg0, %c0_i32, %c0_i32_0 : i32, i32, i32
  }
  func.func @transform_2(%arg0: i32) -> (i32, i32, i32) {
    %c0_i32 = arith.constant 0 : i32
    %c0_i32_0 = arith.constant 0 : i32
    %c0_i32_1 = arith.constant 0 : i32
    return %arg0, %c0_i32, %c0_i32_0 : i32, i32, i32
  }
}

module attributes {stable_mosaic.version = 11 : i64} {
  func.func @_add_layernorm_kernel(%arg0: i32, %arg1: memref<16x32xf32, #tpu.memory_space<vmem>>, %arg2: memref<16x32xf32, #tpu.memory_space<vmem>>, %arg3: memref<1x32xf32, #tpu.memory_space<vmem>>, %arg4: memref<1x32xf32, #tpu.memory_space<vmem>>, %arg5: memref<16x32xf32, #tpu.memory_space<vmem>>) attributes {dimension_semantics = [#tpu.dimension_semantics<parallel>], iteration_bounds = array<i64: 1>, scalar_prefetch = 0 : i64, scratch_operands = 0 : i64, tpu.core_type = #tpu.core_type<tc>, window_params = [{transform_indices = @transform_0, window_bounds = array<i64: 16, 32>}, {transform_indices = @transform_1, window_bounds = array<i64: 16, 32>}, {pipeline_mode = #tpu.pipeline_mode<synchronous>, transform_indices = @transform_2, window_bounds = array<i64: 1, 32>}, {pipeline_mode = #tpu.pipeline_mode<synchronous>, transform_indices = @transform_3, window_bounds = array<i64: 1, 32>}, {transform_indices = @transform_4, window_bounds = array<i64: 16, 32>}]} {
    %c0 = arith.constant 0 : index
    %c0_0 = arith.constant 0 : index
    %0 = vector.load %arg1[%c0, %c0_0] : memref<16x32xf32, #tpu.memory_space<vmem>>, vector<16x32xf32>
    %c0_1 = arith.constant 0 : index
    %c0_2 = arith.constant 0 : index
    %1 = vector.load %arg2[%c0_1, %c0_2] : memref<16x32xf32, #tpu.memory_space<vmem>>, vector<16x32xf32>
    %2 = arith.addf %0, %1 : vector<16x32xf32>
    %cst = arith.constant dense<0.000000e+00> : vector<16xf32>
    %3 = vector.multi_reduction <add>, %2, %cst [1] : vector<16x32xf32> to vector<16xf32>
    %4 = vector.shape_cast %3 : vector<16xf32> to vector<16x1xf32>
    %cst_3 = arith.constant 3.200000e+01 : f32
    %5 = vector.broadcast %cst_3 : f32 to vector<16x1xf32>
    %6 = arith.divf %4, %5 : vector<16x1xf32>
    %7 = vector.broadcast %6 : vector<16x1xf32> to vector<16x32xf32>
    %8 = arith.subf %2, %7 : vector<16x32xf32>
    %9 = arith.mulf %8, %8 : vector<16x32xf32>
    %cst_4 = arith.constant dense<0.000000e+00> : vector<16xf32>
    %10 = vector.multi_reduction <add>, %9, %cst_4 [1] : vector<16x32xf32> to vector<16xf32>
    %11 = vector.shape_cast %10 : vector<16xf32> to vector<16x1xf32>
    %cst_5 = arith.constant 3.200000e+01 : f32
    %12 = vector.broadcast %cst_5 : f32 to vector<16x1xf32>
    %13 = arith.divf %11, %12 : vector<16x1xf32>
    %14 = vector.broadcast %6 : vector<16x1xf32> to vector<16x32xf32>
    %15 = arith.subf %2, %14 : vector<16x32xf32>
    %cst_6 = arith.constant 9.99999996E-13 : f32
    %16 = vector.broadcast %cst_6 : f32 to vector<16x1xf32>
    %17 = arith.addf %13, %16 : vector<16x1xf32>
    %18 = math.rsqrt %17 : vector<16x1xf32>
    %19 = vector.broadcast %18 : vector<16x1xf32> to vector<16x32xf32>
    %20 = arith.mulf %15, %19 : vector<16x32xf32>
    %c0_7 = arith.constant 0 : index
    %c0_8 = arith.constant 0 : index
    %21 = vector.load %arg3[%c0_7, %c0_8] : memref<1x32xf32, #tpu.memory_space<vmem>>, vector<1x32xf32>
    %22 = vector.broadcast %21 : vector<1x32xf32> to vector<16x32xf32>
    %23 = arith.mulf %20, %22 : vector<16x32xf32>
    %c0_9 = arith.constant 0 : index
    %c0_10 = arith.constant 0 : index
    %24 = vector.load %arg4[%c0_9, %c0_10] : memref<1x32xf32, #tpu.memory_space<vmem>>, vector<1x32xf32>
    %25 = vector.broadcast %24 : vector<1x32xf32> to vector<16x32xf32>
    %26 = arith.addf %23, %25 : vector<16x32xf32>
    %c0_11 = arith.constant 0 : index
    %c0_12 = arith.constant 0 : index
    %27 = vector.load %arg5[%c0_11, %c0_12] : memref<16x32xf32, #tpu.memory_space<vmem>>, vector<16x32xf32>
    tpu.vector_store %arg5[%c0_11, %c0_12], %26 {strides = array<i32>} : memref<16x32xf32, #tpu.memory_space<vmem>>, vector<16x32xf32>,
    return
  }
  func.func @transform_0(%arg0: i32) -> (i32, i32) {
    %c0_i32 = arith.constant 0 : i32
    %c0_i32_0 = arith.constant 0 : i32
    return %arg0, %c0_i32 : i32, i32
  }
  func.func @transform_1(%arg0: i32) -> (i32, i32) {
    %c0_i32 = arith.constant 0 : i32
    %c0_i32_0 = arith.constant 0 : i32
    return %arg0, %c0_i32 : i32, i32
  }
  func.func @transform_2(%arg0: i32) -> (i32, i32) {
    %c0_i32 = arith.constant 0 : i32
    %c0_i32_0 = arith.constant 0 : i32
    %c0_i32_1 = arith.constant 0 : i32
    return %c0_i32, %c0_i32_0 : i32, i32
  }
  func.func @transform_3(%arg0: i32) -> (i32, i32) {
    %c0_i32 = arith.constant 0 : i32
    %c0_i32_0 = arith.constant 0 : i32
    %c0_i32_1 = arith.constant 0 : i32
    return %c0_i32, %c0_i32_0 : i32, i32
  }
  func.func @transform_4(%arg0: i32) -> (i32, i32) {
    %c0_i32 = arith.constant 0 : i32
    %c0_i32_0 = arith.constant 0 : i32
    return %arg0, %c0_i32 : i32, i32
  }
}

module attributes {stable_mosaic.version = 11 : i64} {
  func.func @_linear_kernel(%arg0: i32, %arg1: i32, %arg2: i32, %arg3: memref<16x32xbf16, #tpu.memory_space<vmem>>, %arg4: memref<32x64xbf16, #tpu.memory_space<vmem>>, %arg5: memref<1x64xf32, #tpu.memory_space<vmem>>, %arg6: memref<16x64xbf16, #tpu.memory_space<vmem>>, %arg7: memref<16x64xf32, #tpu.memory_space<vmem>>) attributes {dimension_semantics = [#tpu.dimension_semantics<parallel>, #tpu.dimension_semantics<parallel>, #tpu.dimension_semantics<arbitrary>], iteration_bounds = array<i64: 1, 1, 1>, scalar_prefetch = 0 : i64, scratch_operands = 1 : i64, tpu.core_type = #tpu.core_type<tc>, window_params = [{transform_indices = @transform_0, window_bounds = array<i64: 16, 32>}, {transform_indices = @transform_1, window_bounds = array<i64: 32, 64>}, {transform_indices = @transform_2, window_bounds = array<i64: 1, 64>}, {transform_indices = @transform_3, window_bounds = array<i64: 16, 64>}]} {
    %c0_i32 = arith.constant 0 : i32
    %0 = arith.cmpi eq, %arg2, %c0_i32 : i32
    %1 = arith.extui %0 : i1 to i32
    %c0_i32_0 = arith.constant 0 : i32
    %2 = arith.cmpi ne, %1, %c0_i32_0 : i32
    scf.if %2 {
      %cst_10 = arith.constant 0.000000e+00 : f32
      %12 = vector.broadcast %cst_10 : f32 to vector<16x64xf32>
      %c0_11 = arith.constant 0 : index
      %c0_12 = arith.constant 0 : index
      %13 = vector.load %arg7[%c0_11, %c0_12] : memref<16x64xf32, #tpu.memory_space<vmem>>, vector<16x64xf32>
      tpu.vector_store %arg7[%c0_11, %c0_12], %12 {strides = array<i32>} : memref<16x64xf32, #tpu.memory_space<vmem>>, vector<16x64xf32>,
    } else {
    }
    %c0 = arith.constant 0 : index
    %c0_1 = arith.constant 0 : index
    %3 = vector.load %arg7[%c0, %c0_1] : memref<16x64xf32, #tpu.memory_space<vmem>>, vector<16x64xf32>
    %c0_2 = arith.constant 0 : index
    %c0_3 = arith.constant 0 : index
    %4 = vector.load %arg3[%c0_2, %c0_3] : memref<16x32xbf16, #tpu.memory_space<vmem>>, vector<16x32xbf16>
    %c0_4 = arith.constant 0 : index
    %c0_5 = arith.constant 0 : index
    %5 = vector.load %arg4[%c0_4, %c0_5] : memref<32x64xbf16, #tpu.memory_space<vmem>>, vector<32x64xbf16>
    %cst = arith.constant dense<0.000000e+00> : vector<16x64xf32>
    %6 = tpu.matmul %4, %5, %cst {dimension_numbers = #tpu.dot_dimension_numbers<[1], [0], [0], [1], [0, 0, 1, 1], [], []>} : vector<16x32xbf16>, vector<32x64xbf16>, vector<16x64xf32> -> vector<16x64xf32>
    %7 = arith.addf %3, %6 : vector<16x64xf32>
    %c0_6 = arith.constant 0 : index
    %c0_7 = arith.constant 0 : index
    %8 = vector.load %arg7[%c0_6, %c0_7] : memref<16x64xf32, #tpu.memory_space<vmem>>, vector<16x64xf32>
    tpu.vector_store %arg7[%c0_6, %c0_7], %7 {strides = array<i32>} : memref<16x64xf32, #tpu.memory_space<vmem>>, vector<16x64xf32>,
    %c0_i32_8 = arith.constant 0 : i32
    %9 = arith.cmpi eq, %arg2, %c0_i32_8 : i32
    %10 = arith.extui %9 : i1 to i32
    %c0_i32_9 = arith.constant 0 : i32
    %11 = arith.cmpi ne, %10, %c0_i32_9 : i32
    scf.if %11 {
      %c0_10 = arith.constant 0 : index
      %c0_11 = arith.constant 0 : index
      %12 = vector.load %arg7[%c0_10, %c0_11] : memref<16x64xf32, #tpu.memory_space<vmem>>, vector<16x64xf32>
      %c0_12 = arith.constant 0 : index
      %c0_13 = arith.constant 0 : index
      %13 = vector.load %arg5[%c0_12, %c0_13] : memref<1x64xf32, #tpu.memory_space<vmem>>, vector<1x64xf32>
      %14 = vector.broadcast %13 : vector<1x64xf32> to vector<16x64xf32>
      %15 = arith.addf %12, %14 : vector<16x64xf32>
      %16 = arith.mulf %15, %15 : vector<16x64xf32>
      %17 = arith.mulf %15, %16 : vector<16x64xf32>
      %cst_14 = arith.constant 4.471500e-02 : f32
      %18 = vector.broadcast %cst_14 : f32 to vector<16x64xf32>
      %19 = arith.mulf %18, %17 : vector<16x64xf32>
      %20 = arith.addf %15, %19 : vector<16x64xf32>
      %cst_15 = arith.constant 0.797884583 : f32
      %21 = vector.broadcast %cst_15 : f32 to vector<16x64xf32>
      %22 = arith.mulf %21, %20 : vector<16x64xf32>
      %23 = math.tanh %22 : vector<16x64xf32>
      %cst_16 = arith.constant 1.000000e+00 : f32
      %24 = vector.broadcast %cst_16 : f32 to vector<16x64xf32>
      %25 = arith.addf %24, %23 : vector<16x64xf32>
      %cst_17 = arith.constant 5.000000e-01 : f32
      %26 = vector.broadcast %cst_17 : f32 to vector<16x64xf32>
      %27 = arith.mulf %26, %25 : vector<16x64xf32>
      %28 = arith.mulf %15, %27 : vector<16x64xf32>
      %29 = arith.truncf %28 : vector<16x64xf32> to vector<16x64xbf16>
      %c0_18 = arith.constant 0 : index
      %c0_19 = arith.constant 0 : index
      %30 = vector.load %arg6[%c0_18, %c0_19] : memref<16x64xbf16, #tpu.memory_space<vmem>>, vector<16x64xbf16>
      tpu.vector_store %arg6[%c0_18, %c0_19], %29 {strides = array<i32>} : memref<16x64xbf16, #tpu.memory_space<vmem>>, vector<16x64xbf16>,
    } else {
    }
    return
  }
  func.func @transform_0(%arg0: i32, %arg1: i32, %arg2: i32) -> (i32, i32) {
    %c0_i32 = arith.constant 0 : i32
    return %arg0, %arg2 : i32, i32
  }
  func.func @transform_1(%arg0: i32, %arg1: i32, %arg2: i32) -> (i32, i32) {
    %c0_i32 = arith.constant 0 : i32
    return %arg2, %arg1 : i32, i32
  }
  func.func @transform_2(%arg0: i32, %arg1: i32, %arg2: i32) -> (i32, i32) {
    %c0_i32 = arith.constant 0 : i32
    %c0_i32_0 = arith.constant 0 : i32
    return %c0_i32, %arg1 : i32, i32
  }
  func.func @transform_3(%arg0: i32, %arg1: i32, %arg2: i32) -> (i32, i32) {
    %c0_i32 = arith.constant 0 : i32
    return %arg0, %arg1 : i32, i32
  }
}

module attributes {stable_mosaic.version = 11 : i64} {
  func.func @_linear_kernel(%arg0: i32, %arg1: i32, %arg2: i32, %arg3: memref<16x64xbf16, #tpu.memory_space<vmem>>, %arg4: memref<64x32xbf16, #tpu.memory_space<vmem>>, %arg5: memref<1x32xf32, #tpu.memory_space<vmem>>, %arg6: memref<16x32xf32, #tpu.memory_space<vmem>>, %arg7: memref<16x32xf32, #tpu.memory_space<vmem>>) attributes {dimension_semantics = [#tpu.dimension_semantics<parallel>, #tpu.dimension_semantics<parallel>, #tpu.dimension_semantics<arbitrary>], iteration_bounds = array<i64: 1, 1, 1>, scalar_prefetch = 0 : i64, scratch_operands = 1 : i64, tpu.core_type = #tpu.core_type<tc>, window_params = [{transform_indices = @transform_0, window_bounds = array<i64: 16, 64>}, {transform_indices = @transform_1, window_bounds = array<i64: 64, 32>}, {transform_indices = @transform_2, window_bounds = array<i64: 1, 32>}, {transform_indices = @transform_3, window_bounds = array<i64: 16, 32>}]} {
    %c0_i32 = arith.constant 0 : i32
    %0 = arith.cmpi eq, %arg2, %c0_i32 : i32
    %1 = arith.extui %0 : i1 to i32
    %c0_i32_0 = arith.constant 0 : i32
    %2 = arith.cmpi ne, %1, %c0_i32_0 : i32
    scf.if %2 {
      %cst_10 = arith.constant 0.000000e+00 : f32
      %12 = vector.broadcast %cst_10 : f32 to vector<16x32xf32>
      %c0_11 = arith.constant 0 : index
      %c0_12 = arith.constant 0 : index
      %13 = vector.load %arg7[%c0_11, %c0_12] : memref<16x32xf32, #tpu.memory_space<vmem>>, vector<16x32xf32>
      tpu.vector_store %arg7[%c0_11, %c0_12], %12 {strides = array<i32>} : memref<16x32xf32, #tpu.memory_space<vmem>>, vector<16x32xf32>,
    } else {
    }
    %c0 = arith.constant 0 : index
    %c0_1 = arith.constant 0 : index
    %3 = vector.load %arg7[%c0, %c0_1] : memref<16x32xf32, #tpu.memory_space<vmem>>, vector<16x32xf32>
    %c0_2 = arith.constant 0 : index
    %c0_3 = arith.constant 0 : index
    %4 = vector.load %arg3[%c0_2, %c0_3] : memref<16x64xbf16, #tpu.memory_space<vmem>>, vector<16x64xbf16>
    %c0_4 = arith.constant 0 : index
    %c0_5 = arith.constant 0 : index
    %5 = vector.load %arg4[%c0_4, %c0_5] : memref<64x32xbf16, #tpu.memory_space<vmem>>, vector<64x32xbf16>
    %cst = arith.constant dense<0.000000e+00> : vector<16x32xf32>
    %6 = tpu.matmul %4, %5, %cst {dimension_numbers = #tpu.dot_dimension_numbers<[1], [0], [0], [1], [0, 0, 1, 1], [], []>} : vector<16x64xbf16>, vector<64x32xbf16>, vector<16x32xf32> -> vector<16x32xf32>
    %7 = arith.addf %3, %6 : vector<16x32xf32>
    %c0_6 = arith.constant 0 : index
    %c0_7 = arith.constant 0 : index
    %8 = vector.load %arg7[%c0_6, %c0_7] : memref<16x32xf32, #tpu.memory_space<vmem>>, vector<16x32xf32>
    tpu.vector_store %arg7[%c0_6, %c0_7], %7 {strides = array<i32>} : memref<16x32xf32, #tpu.memory_space<vmem>>, vector<16x32xf32>,
    %c0_i32_8 = arith.constant 0 : i32
    %9 = arith.cmpi eq, %arg2, %c0_i32_8 : i32
    %10 = arith.extui %9 : i1 to i32
    %c0_i32_9 = arith.constant 0 : i32
    %11 = arith.cmpi ne, %10, %c0_i32_9 : i32
    scf.if %11 {
      %c0_10 = arith.constant 0 : index
      %c0_11 = arith.constant 0 : index
      %12 = vector.load %arg7[%c0_10, %c0_11] : memref<16x32xf32, #tpu.memory_space<vmem>>, vector<16x32xf32>
      %c0_12 = arith.constant 0 : index
      %c0_13 = arith.constant 0 : index
      %13 = vector.load %arg5[%c0_12, %c0_13] : memref<1x32xf32, #tpu.memory_space<vmem>>, vector<1x32xf32>
      %14 = vector.broadcast %13 : vector<1x32xf32> to vector<16x32xf32>
      %15 = arith.addf %12, %14 : vector<16x32xf32>
      %c0_14 = arith.constant 0 : index
      %c0_15 = arith.constant 0 : index
      %16 = vector.load %arg6[%c0_14, %c0_15] : memref<16x32xf32, #tpu.memory_space<vmem>>, vector<16x32xf32>
      tpu.vector_store %arg6[%c0_14, %c0_15], %15 {strides = array<i32>} : memref<16x32xf32, #tpu.memory_space<vmem>>, vector<16x32xf32>,
    } else {
    }
    return
  }
  func.func @transform_0(%arg0: i32, %arg1: i32, %arg2: i32) -> (i32, i32) {
    %c0_i32 = arith.constant 0 : i32
    return %arg0, %arg2 : i32, i32
  }
  func.func @transform_1(%arg0: i32, %arg1: i32, %arg2: i32) -> (i32, i32) {
    %c0_i32 = arith.constant 0 : i32
    return %arg2, %arg1 : i32, i32
  }
  func.func @transform_2(%arg0: i32, %arg1: i32, %arg2: i32) -> (i32, i32) {
    %c0_i32 = arith.constant 0 : i32
    %c0_i32_0 = arith.constant 0 : i32
    return %c0_i32, %arg1 : i32, i32
  }
  func.func @transform_3(%arg0: i32, %arg1: i32, %arg2: i32) -> (i32, i32) {
    %c0_i32 = arith.constant 0 : i32
    return %arg0, %arg1 : i32, i32
  }
}

module attributes {stable_mosaic.version = 11 : i64} {
  func.func @_linear_kernel(%arg0: i32, %arg1: i32, %arg2: i32, %arg3: memref<16x32xbf16, #tpu.memory_space<vmem>>, %arg4: memref<32x256xbf16, #tpu.memory_space<vmem>>, %arg5: memref<1x256xf32, #tpu.memory_space<vmem>>, %arg6: memref<16x256xbf16, #tpu.memory_space<vmem>>, %arg7: memref<16x256xf32, #tpu.memory_space<vmem>>) attributes {dimension_semantics = [#tpu.dimension_semantics<parallel>, #tpu.dimension_semantics<parallel>, #tpu.dimension_semantics<arbitrary>], iteration_bounds = array<i64: 1, 1, 1>, scalar_prefetch = 0 : i64, scratch_operands = 1 : i64, tpu.core_type = #tpu.core_type<tc>, window_params = [{transform_indices = @transform_0, window_bounds = array<i64: 16, 32>}, {transform_indices = @transform_1, window_bounds = array<i64: 32, 256>}, {transform_indices = @transform_2, window_bounds = array<i64: 1, 256>}, {transform_indices = @transform_3, window_bounds = array<i64: 16, 256>}]} {
    %c0_i32 = arith.constant 0 : i32
    %0 = arith.cmpi eq, %arg2, %c0_i32 : i32
    %1 = arith.extui %0 : i1 to i32
    %c0_i32_0 = arith.constant 0 : i32
    %2 = arith.cmpi ne, %1, %c0_i32_0 : i32
    scf.if %2 {
      %cst_10 = arith.constant 0.000000e+00 : f32
      %12 = vector.broadcast %cst_10 : f32 to vector<16x256xf32>
      %c0_11 = arith.constant 0 : index
      %c0_12 = arith.constant 0 : index
      %13 = vector.load %arg7[%c0_11, %c0_12] : memref<16x256xf32, #tpu.memory_space<vmem>>, vector<16x256xf32>
      tpu.vector_store %arg7[%c0_11, %c0_12], %12 {strides = array<i32>} : memref<16x256xf32, #tpu.memory_space<vmem>>, vector<16x256xf32>,
    } else {
    }
    %c0 = arith.constant 0 : index
    %c0_1 = arith.constant 0 : index
    %3 = vector.load %arg7[%c0, %c0_1] : memref<16x256xf32, #tpu.memory_space<vmem>>, vector<16x256xf32>
    %c0_2 = arith.constant 0 : index
    %c0_3 = arith.constant 0 : index
    %4 = vector.load %arg3[%c0_2, %c0_3] : memref<16x32xbf16, #tpu.memory_space<vmem>>, vector<16x32xbf16>
    %c0_4 = arith.constant 0 : index
    %c0_5 = arith.constant 0 : index
    %5 = vector.load %arg4[%c0_4, %c0_5] : memref<32x256xbf16, #tpu.memory_space<vmem>>, vector<32x256xbf16>
    %cst = arith.constant dense<0.000000e+00> : vector<16x256xf32>
    %6 = tpu.matmul %4, %5, %cst {dimension_numbers = #tpu.dot_dimension_numbers<[1], [0], [0], [1], [0, 0, 1, 1], [], []>} : vector<16x32xbf16>, vector<32x256xbf16>, vector<16x256xf32> -> vector<16x256xf32>
    %7 = arith.addf %3, %6 : vector<16x256xf32>
    %c0_6 = arith.constant 0 : index
    %c0_7 = arith.constant 0 : index
    %8 = vector.load %arg7[%c0_6, %c0_7] : memref<16x256xf32, #tpu.memory_space<vmem>>, vector<16x256xf32>
    tpu.vector_store %arg7[%c0_6, %c0_7], %7 {strides = array<i32>} : memref<16x256xf32, #tpu.memory_space<vmem>>, vector<16x256xf32>,
    %c0_i32_8 = arith.constant 0 : i32
    %9 = arith.cmpi eq, %arg2, %c0_i32_8 : i32
    %10 = arith.extui %9 : i1 to i32
    %c0_i32_9 = arith.constant 0 : i32
    %11 = arith.cmpi ne, %10, %c0_i32_9 : i32
    scf.if %11 {
      %c0_10 = arith.constant 0 : index
      %c0_11 = arith.constant 0 : index
      %12 = vector.load %arg7[%c0_10, %c0_11] : memref<16x256xf32, #tpu.memory_space<vmem>>, vector<16x256xf32>
      %c0_12 = arith.constant 0 : index
      %c0_13 = arith.constant 0 : index
      %13 = vector.load %arg5[%c0_12, %c0_13] : memref<1x256xf32, #tpu.memory_space<vmem>>, vector<1x256xf32>
      %14 = vector.broadcast %13 : vector<1x256xf32> to vector<16x256xf32>
      %15 = arith.addf %12, %14 : vector<16x256xf32>
      %16 = arith.truncf %15 : vector<16x256xf32> to vector<16x256xbf16>
      %c0_14 = arith.constant 0 : index
      %c0_15 = arith.constant 0 : index
      %17 = vector.load %arg6[%c0_14, %c0_15] : memref<16x256xbf16, #tpu.memory_space<vmem>>, vector<16x256xbf16>
      tpu.vector_store %arg6[%c0_14, %c0_15], %16 {strides = array<i32>} : memref<16x256xbf16, #tpu.memory_space<vmem>>, vector<16x256xbf16>,
    } else {
    }
    return
  }
  func.func @transform_0(%arg0: i32, %arg1: i32, %arg2: i32) -> (i32, i32) {
    %c0_i32 = arith.constant 0 : i32
    return %arg0, %arg2 : i32, i32
  }
  func.func @transform_1(%arg0: i32, %arg1: i32, %arg2: i32) -> (i32, i32) {
    %c0_i32 = arith.constant 0 : i32
    return %arg2, %arg1 : i32, i32
  }
  func.func @transform_2(%arg0: i32, %arg1: i32, %arg2: i32) -> (i32, i32) {
    %c0_i32 = arith.constant 0 : i32
    %c0_i32_0 = arith.constant 0 : i32
    return %c0_i32, %arg1 : i32, i32
  }
  func.func @transform_3(%arg0: i32, %arg1: i32, %arg2: i32) -> (i32, i32) {
    %c0_i32 = arith.constant 0 : i32
    return %arg0, %arg1 : i32, i32
  }
}

module attributes {stable_mosaic.version = 11 : i64} {
  func.func @_bilstm_kernel(%arg0: i32, %arg1: memref<8x2x256xbf16, #tpu.memory_space<vmem>>, %arg2: memref<2x32x128xbf16, #tpu.memory_space<vmem>>, %arg3: memref<8x2x64xf32, #tpu.memory_space<vmem>>, %arg4: memref<2x32xf32, #tpu.memory_space<vmem>>, %arg5: memref<2x32xf32, #tpu.memory_space<vmem>>, %arg6: memref<2x32xf32, #tpu.memory_space<vmem>>, %arg7: memref<2x32xf32, #tpu.memory_space<vmem>>) attributes {dimension_semantics = [#tpu.dimension_semantics<arbitrary>], iteration_bounds = array<i64: 1>, scalar_prefetch = 0 : i64, scratch_operands = 4 : i64, tpu.core_type = #tpu.core_type<tc>, window_params = [{pipeline_mode = #tpu.pipeline_mode<synchronous>, transform_indices = @transform_0, window_bounds = array<i64: 8, 2, 256>}, {pipeline_mode = #tpu.pipeline_mode<synchronous>, transform_indices = @transform_1, window_bounds = array<i64: 2, 32, 128>}, {pipeline_mode = #tpu.pipeline_mode<synchronous>, transform_indices = @transform_2, window_bounds = array<i64: 8, 2, 64>}]} {
    %cst = arith.constant 0.000000e+00 : f32
    %0 = vector.broadcast %cst : f32 to vector<2x32xf32>
    %c0 = arith.constant 0 : index
    %c0_0 = arith.constant 0 : index
    %1 = vector.load %arg4[%c0, %c0_0] : memref<2x32xf32, #tpu.memory_space<vmem>>, vector<2x32xf32>
    tpu.vector_store %arg4[%c0, %c0_0], %0 {strides = array<i32>} : memref<2x32xf32, #tpu.memory_space<vmem>>, vector<2x32xf32>,
    %cst_1 = arith.constant 0.000000e+00 : f32
    %2 = vector.broadcast %cst_1 : f32 to vector<2x32xf32>
    %c0_2 = arith.constant 0 : index
    %c0_3 = arith.constant 0 : index
    %3 = vector.load %arg5[%c0_2, %c0_3] : memref<2x32xf32, #tpu.memory_space<vmem>>, vector<2x32xf32>
    tpu.vector_store %arg5[%c0_2, %c0_3], %2 {strides = array<i32>} : memref<2x32xf32, #tpu.memory_space<vmem>>, vector<2x32xf32>,
    %cst_4 = arith.constant 0.000000e+00 : f32
    %4 = vector.broadcast %cst_4 : f32 to vector<2x32xf32>
    %c0_5 = arith.constant 0 : index
    %c0_6 = arith.constant 0 : index
    %5 = vector.load %arg6[%c0_5, %c0_6] : memref<2x32xf32, #tpu.memory_space<vmem>>, vector<2x32xf32>
    tpu.vector_store %arg6[%c0_5, %c0_6], %4 {strides = array<i32>} : memref<2x32xf32, #tpu.memory_space<vmem>>, vector<2x32xf32>,
    %cst_7 = arith.constant 0.000000e+00 : f32
    %6 = vector.broadcast %cst_7 : f32 to vector<2x32xf32>
    %c0_8 = arith.constant 0 : index
    %c0_9 = arith.constant 0 : index
    %7 = vector.load %arg7[%c0_8, %c0_9] : memref<2x32xf32, #tpu.memory_space<vmem>>, vector<2x32xf32>
    tpu.vector_store %arg7[%c0_8, %c0_9], %6 {strides = array<i32>} : memref<2x32xf32, #tpu.memory_space<vmem>>, vector<2x32xf32>,
    %c0_i32 = arith.constant 0 : i32
    %c8_i32 = arith.constant 8 : i32
    %8 = arith.addi %c0_i32, %c8_i32 : i32
    %c1_i32 = arith.constant 1 : i32
    scf.for %arg8 = %c0_i32 to %8 step %c1_i32  : i32 {
      %c1_i32_11 = arith.constant 1 : i32
      %9 = arith.muli %arg8, %c1_i32_11 : i32
      %c0_i32_12 = arith.constant 0 : i32
      %10 = arith.addi %c0_i32_12, %9 : i32
      %c7_i32 = arith.constant 7 : i32
      %11 = arith.subi %c7_i32, %10 : i32
      %12 = arith.index_cast %10 : i32 to index
      %c0_13 = arith.constant 0 : index
      %c0_14 = arith.constant 0 : index
      %13 = vector.load %arg1[%12, %c0_13, %c0_14] : memref<8x2x256xbf16, #tpu.memory_space<vmem>>, vector<1x2x128xbf16>
      %14 = vector.shape_cast %13 : vector<1x2x128xbf16> to vector<2x128xbf16>
      %15 = arith.extf %14 : vector<2x128xbf16> to vector<2x128xf32>
      %c0_15 = arith.constant 0 : index
      %c0_16 = arith.constant 0 : index
      %16 = vector.load %arg4[%c0_15, %c0_16] : memref<2x32xf32, #tpu.memory_space<vmem>>, vector<2x32xf32>
      %17 = arith.truncf %16 : vector<2x32xf32> to vector<2x32xbf16>
      %c0_17 = arith.constant 0 : index
      %c0_18 = arith.constant 0 : index
      %c0_19 = arith.constant 0 : index
      %18 = vector.load %arg2[%c0_17, %c0_18, %c0_19] : memref<2x32x128xbf16, #tpu.memory_space<vmem>>, vector<1x32x128xbf16>
      %19 = vector.shape_cast %18 : vector<1x32x128xbf16> to vector<32x128xbf16>
      %cst_20 = arith.constant dense<0.000000e+00> : vector<2x128xf32>
      %20 = tpu.matmul %17, %19, %cst_20 {dimension_numbers = #tpu.dot_dimension_numbers<[1], [0], [0], [1], [0, 0, 1, 1], [], []>} : vector<2x32xbf16>, vector<32x128xbf16>, vector<2x128xf32> -> vector<2x128xf32>
      %21 = arith.addf %15, %20 : vector<2x128xf32>
      %22 = arith.index_cast %11 : i32 to index
      %c0_21 = arith.constant 0 : index
      %c128 = arith.constant 128 : index
      %23 = vector.load %arg1[%22, %c0_21, %c128] : memref<8x2x256xbf16, #tpu.memory_space<vmem>>, vector<1x2x128xbf16>
      %24 = vector.shape_cast %23 : vector<1x2x128xbf16> to vector<2x128xbf16>
      %25 = arith.extf %24 : vector<2x128xbf16> to vector<2x128xf32>
      %c0_22 = arith.constant 0 : index
      %c0_23 = arith.constant 0 : index
      %26 = vector.load %arg6[%c0_22, %c0_23] : memref<2x32xf32, #tpu.memory_space<vmem>>, vector<2x32xf32>
      %27 = arith.truncf %26 : vector<2x32xf32> to vector<2x32xbf16>
      %c1 = arith.constant 1 : index
      %c0_24 = arith.constant 0 : index
      %c0_25 = arith.constant 0 : index
      %28 = vector.load %arg2[%c1, %c0_24, %c0_25] : memref<2x32x128xbf16, #tpu.memory_space<vmem>>, vector<1x32x128xbf16>
      %29 = vector.shape_cast %28 : vector<1x32x128xbf16> to vector<32x128xbf16>
      %cst_26 = arith.constant dense<0.000000e+00> : vector<2x128xf32>
      %30 = tpu.matmul %27, %29, %cst_26 {dimension_numbers = #tpu.dot_dimension_numbers<[1], [0], [0], [1], [0, 0, 1, 1], [], []>} : vector<2x32xbf16>, vector<32x128xbf16>, vector<2x128xf32> -> vector<2x128xf32>
      %31 = arith.addf %25, %30 : vector<2x128xf32>
      %c0_27 = arith.constant 0 : index
      %c0_28 = arith.constant 0 : index
      %32 = vector.load %arg5[%c0_27, %c0_28] : memref<2x32xf32, #tpu.memory_space<vmem>>, vector<2x32xf32>
      %33 = vector.extract_strided_slice %21 {offsets = [0, 0], sizes = [2, 32], strides = [1, 1]} : vector<2x128xf32> to vector<2x32xf32>
      %34 = arith.negf %33 : vector<2x32xf32>
      %35 = math.exp %34 : vector<2x32xf32>
      %cst_29 = arith.constant 1.000000e+00 : f32
      %36 = vector.broadcast %cst_29 : f32 to vector<2x32xf32>
      %37 = arith.addf %36, %35 : vector<2x32xf32>
      %38 = arith.divf %36, %37 : vector<2x32xf32>
      %39 = vector.extract_strided_slice %21 {offsets = [0, 32], sizes = [2, 32], strides = [1, 1]} : vector<2x128xf32> to vector<2x32xf32>
      %40 = arith.negf %39 : vector<2x32xf32>
      %41 = math.exp %40 : vector<2x32xf32>
      %cst_30 = arith.constant 1.000000e+00 : f32
      %42 = vector.broadcast %cst_30 : f32 to vector<2x32xf32>
      %43 = arith.addf %42, %41 : vector<2x32xf32>
      %44 = arith.divf %42, %43 : vector<2x32xf32>
      %45 = vector.extract_strided_slice %21 {offsets = [0, 64], sizes = [2, 32], strides = [1, 1]} : vector<2x128xf32> to vector<2x32xf32>
      %46 = math.tanh %45 : vector<2x32xf32>
      %47 = vector.extract_strided_slice %21 {offsets = [0, 96], sizes = [2, 32], strides = [1, 1]} : vector<2x128xf32> to vector<2x32xf32>
      %48 = arith.negf %47 : vector<2x32xf32>
      %49 = math.exp %48 : vector<2x32xf32>
      %cst_31 = arith.constant 1.000000e+00 : f32
      %50 = vector.broadcast %cst_31 : f32 to vector<2x32xf32>
      %51 = arith.addf %50, %49 : vector<2x32xf32>
      %52 = arith.divf %50, %51 : vector<2x32xf32>
      %53 = arith.mulf %44, %32 : vector<2x32xf32>
      %54 = arith.mulf %38, %46 : vector<2x32xf32>
      %55 = arith.addf %53, %54 : vector<2x32xf32>
      %56 = math.tanh %55 : vector<2x32xf32>
      %57 = arith.mulf %52, %56 : vector<2x32xf32>
      %c0_32 = arith.constant 0 : index
      %c0_33 = arith.constant 0 : index
      %58 = vector.load %arg7[%c0_32, %c0_33] : memref<2x32xf32, #tpu.memory_space<vmem>>, vector<2x32xf32>
      %59 = vector.extract_strided_slice %31 {offsets = [0, 0], sizes = [2, 32], strides = [1, 1]} : vector<2x128xf32> to vector<2x32xf32>
      %60 = arith.negf %59 : vector<2x32xf32>
      %61 = math.exp %60 : vector<2x32xf32>
      %cst_34 = arith.constant 1.000000e+00 : f32
      %62 = vector.broadcast %cst_34 : f32 to vector<2x32xf32>
      %63 = arith.addf %62, %61 : vector<2x32xf32>
      %64 = arith.divf %62, %63 : vector<2x32xf32>
      %65 = vector.extract_strided_slice %31 {offsets = [0, 32], sizes = [2, 32], strides = [1, 1]} : vector<2x128xf32> to vector<2x32xf32>
      %66 = arith.negf %65 : vector<2x32xf32>
      %67 = math.exp %66 : vector<2x32xf32>
      %cst_35 = arith.constant 1.000000e+00 : f32
      %68 = vector.broadcast %cst_35 : f32 to vector<2x32xf32>
      %69 = arith.addf %68, %67 : vector<2x32xf32>
      %70 = arith.divf %68, %69 : vector<2x32xf32>
      %71 = vector.extract_strided_slice %31 {offsets = [0, 64], sizes = [2, 32], strides = [1, 1]} : vector<2x128xf32> to vector<2x32xf32>
      %72 = math.tanh %71 : vector<2x32xf32>
      %73 = vector.extract_strided_slice %31 {offsets = [0, 96], sizes = [2, 32], strides = [1, 1]} : vector<2x128xf32> to vector<2x32xf32>
      %74 = arith.negf %73 : vector<2x32xf32>
      %75 = math.exp %74 : vector<2x32xf32>
      %cst_36 = arith.constant 1.000000e+00 : f32
      %76 = vector.broadcast %cst_36 : f32 to vector<2x32xf32>
      %77 = arith.addf %76, %75 : vector<2x32xf32>
      %78 = arith.divf %76, %77 : vector<2x32xf32>
      %79 = arith.mulf %70, %58 : vector<2x32xf32>
      %80 = arith.mulf %64, %72 : vector<2x32xf32>
      %81 = arith.addf %79, %80 : vector<2x32xf32>
      %82 = math.tanh %81 : vector<2x32xf32>
      %83 = arith.mulf %78, %82 : vector<2x32xf32>
      %c0_37 = arith.constant 0 : index
      %c0_38 = arith.constant 0 : index
      %84 = vector.load %arg4[%c0_37, %c0_38] : memref<2x32xf32, #tpu.memory_space<vmem>>, vector<2x32xf32>
      tpu.vector_store %arg4[%c0_37, %c0_38], %57 {strides = array<i32>} : memref<2x32xf32, #tpu.memory_space<vmem>>, vector<2x32xf32>,
      %c0_39 = arith.constant 0 : index
      %c0_40 = arith.constant 0 : index
      %85 = vector.load %arg5[%c0_39, %c0_40] : memref<2x32xf32, #tpu.memory_space<vmem>>, vector<2x32xf32>
      tpu.vector_store %arg5[%c0_39, %c0_40], %55 {strides = array<i32>} : memref<2x32xf32, #tpu.memory_space<vmem>>, vector<2x32xf32>,
      %c0_41 = arith.constant 0 : index
      %c0_42 = arith.constant 0 : index
      %86 = vector.load %arg6[%c0_41, %c0_42] : memref<2x32xf32, #tpu.memory_space<vmem>>, vector<2x32xf32>
      tpu.vector_store %arg6[%c0_41, %c0_42], %83 {strides = array<i32>} : memref<2x32xf32, #tpu.memory_space<vmem>>, vector<2x32xf32>,
      %c0_43 = arith.constant 0 : index
      %c0_44 = arith.constant 0 : index
      %87 = vector.load %arg7[%c0_43, %c0_44] : memref<2x32xf32, #tpu.memory_space<vmem>>, vector<2x32xf32>
      tpu.vector_store %arg7[%c0_43, %c0_44], %81 {strides = array<i32>} : memref<2x32xf32, #tpu.memory_space<vmem>>, vector<2x32xf32>,
      %88 = arith.index_cast %10 : i32 to index
      %c0_45 = arith.constant 0 : index
      %c0_46 = arith.constant 0 : index
      %89 = vector.load %arg3[%88, %c0_45, %c0_46] : memref<8x2x64xf32, #tpu.memory_space<vmem>>, vector<1x2x32xf32>
      %90 = vector.shape_cast %89 : vector<1x2x32xf32> to vector<2x32xf32>
      %91 = vector.shape_cast %57 : vector<2x32xf32> to vector<1x2x32xf32>
      tpu.vector_store %arg3[%88, %c0_45, %c0_46], %91 {strides = array<i32>} : memref<8x2x64xf32, #tpu.memory_space<vmem>>, vector<1x2x32xf32>,
      %92 = arith.index_cast %11 : i32 to index
      %c0_47 = arith.constant 0 : index
      %c32 = arith.constant 32 : index
      %93 = vector.load %arg3[%92, %c0_47, %c32] : memref<8x2x64xf32, #tpu.memory_space<vmem>>, vector<1x2x32xf32>
      %94 = vector.shape_cast %93 : vector<1x2x32xf32> to vector<2x32xf32>
      %95 = vector.shape_cast %83 : vector<2x32xf32> to vector<1x2x32xf32>
      tpu.vector_store %arg3[%92, %c0_47, %c32], %95 {strides = array<i32>} : memref<8x2x64xf32, #tpu.memory_space<vmem>>, vector<1x2x32xf32>,
    }
    %c8_i32_10 = arith.constant 8 : i32
    return
  }
  func.func @transform_0(%arg0: i32) -> (i32, i32, i32) {
    %c0_i32 = arith.constant 0 : i32
    %c0_i32_0 = arith.constant 0 : i32
    %c0_i32_1 = arith.constant 0 : i32
    %c0_i32_2 = arith.constant 0 : i32
    return %c0_i32, %c0_i32_0, %c0_i32_1 : i32, i32, i32
  }
  func.func @transform_1(%arg0: i32) -> (i32, i32, i32) {
    %c0_i32 = arith.constant 0 : i32
    %c0_i32_0 = arith.constant 0 : i32
    %c0_i32_1 = arith.constant 0 : i32
    %c0_i32_2 = arith.constant 0 : i32
    return %c0_i32, %c0_i32_0, %c0_i32_1 : i32, i32, i32
  }
  func.func @transform_2(%arg0: i32) -> (i32, i32, i32) {
    %c0_i32 = arith.constant 0 : i32
    %c0_i32_0 = arith.constant 0 : i32
    %c0_i32_1 = arith.constant 0 : i32
    %c0_i32_2 = arith.constant 0 : i32
    return %c0_i32, %c0_i32_0, %c0_i32_1 : i32, i32, i32
  }
}

module attributes {stable_mosaic.version = 11 : i64} {
  func.func @_linear_kernel(%arg0: i32, %arg1: i32, %arg2: i32, %arg3: memref<16x64xbf16, #tpu.memory_space<vmem>>, %arg4: memref<64x256xbf16, #tpu.memory_space<vmem>>, %arg5: memref<1x256xf32, #tpu.memory_space<vmem>>, %arg6: memref<16x256xbf16, #tpu.memory_space<vmem>>, %arg7: memref<16x256xf32, #tpu.memory_space<vmem>>) attributes {dimension_semantics = [#tpu.dimension_semantics<parallel>, #tpu.dimension_semantics<parallel>, #tpu.dimension_semantics<arbitrary>], iteration_bounds = array<i64: 1, 1, 1>, scalar_prefetch = 0 : i64, scratch_operands = 1 : i64, tpu.core_type = #tpu.core_type<tc>, window_params = [{transform_indices = @transform_0, window_bounds = array<i64: 16, 64>}, {transform_indices = @transform_1, window_bounds = array<i64: 64, 256>}, {transform_indices = @transform_2, window_bounds = array<i64: 1, 256>}, {transform_indices = @transform_3, window_bounds = array<i64: 16, 256>}]} {
    %c0_i32 = arith.constant 0 : i32
    %0 = arith.cmpi eq, %arg2, %c0_i32 : i32
    %1 = arith.extui %0 : i1 to i32
    %c0_i32_0 = arith.constant 0 : i32
    %2 = arith.cmpi ne, %1, %c0_i32_0 : i32
    scf.if %2 {
      %cst_10 = arith.constant 0.000000e+00 : f32
      %12 = vector.broadcast %cst_10 : f32 to vector<16x256xf32>
      %c0_11 = arith.constant 0 : index
      %c0_12 = arith.constant 0 : index
      %13 = vector.load %arg7[%c0_11, %c0_12] : memref<16x256xf32, #tpu.memory_space<vmem>>, vector<16x256xf32>
      tpu.vector_store %arg7[%c0_11, %c0_12], %12 {strides = array<i32>} : memref<16x256xf32, #tpu.memory_space<vmem>>, vector<16x256xf32>,
    } else {
    }
    %c0 = arith.constant 0 : index
    %c0_1 = arith.constant 0 : index
    %3 = vector.load %arg7[%c0, %c0_1] : memref<16x256xf32, #tpu.memory_space<vmem>>, vector<16x256xf32>
    %c0_2 = arith.constant 0 : index
    %c0_3 = arith.constant 0 : index
    %4 = vector.load %arg3[%c0_2, %c0_3] : memref<16x64xbf16, #tpu.memory_space<vmem>>, vector<16x64xbf16>
    %c0_4 = arith.constant 0 : index
    %c0_5 = arith.constant 0 : index
    %5 = vector.load %arg4[%c0_4, %c0_5] : memref<64x256xbf16, #tpu.memory_space<vmem>>, vector<64x256xbf16>
    %cst = arith.constant dense<0.000000e+00> : vector<16x256xf32>
    %6 = tpu.matmul %4, %5, %cst {dimension_numbers = #tpu.dot_dimension_numbers<[1], [0], [0], [1], [0, 0, 1, 1], [], []>} : vector<16x64xbf16>, vector<64x256xbf16>, vector<16x256xf32> -> vector<16x256xf32>
    %7 = arith.addf %3, %6 : vector<16x256xf32>
    %c0_6 = arith.constant 0 : index
    %c0_7 = arith.constant 0 : index
    %8 = vector.load %arg7[%c0_6, %c0_7] : memref<16x256xf32, #tpu.memory_space<vmem>>, vector<16x256xf32>
    tpu.vector_store %arg7[%c0_6, %c0_7], %7 {strides = array<i32>} : memref<16x256xf32, #tpu.memory_space<vmem>>, vector<16x256xf32>,
    %c0_i32_8 = arith.constant 0 : i32
    %9 = arith.cmpi eq, %arg2, %c0_i32_8 : i32
    %10 = arith.extui %9 : i1 to i32
    %c0_i32_9 = arith.constant 0 : i32
    %11 = arith.cmpi ne, %10, %c0_i32_9 : i32
    scf.if %11 {
      %c0_10 = arith.constant 0 : index
      %c0_11 = arith.constant 0 : index
      %12 = vector.load %arg7[%c0_10, %c0_11] : memref<16x256xf32, #tpu.memory_space<vmem>>, vector<16x256xf32>
      %c0_12 = arith.constant 0 : index
      %c0_13 = arith.constant 0 : index
      %13 = vector.load %arg5[%c0_12, %c0_13] : memref<1x256xf32, #tpu.memory_space<vmem>>, vector<1x256xf32>
      %14 = vector.broadcast %13 : vector<1x256xf32> to vector<16x256xf32>
      %15 = arith.addf %12, %14 : vector<16x256xf32>
      %16 = arith.truncf %15 : vector<16x256xf32> to vector<16x256xbf16>
      %c0_14 = arith.constant 0 : index
      %c0_15 = arith.constant 0 : index
      %17 = vector.load %arg6[%c0_14, %c0_15] : memref<16x256xbf16, #tpu.memory_space<vmem>>, vector<16x256xbf16>
      tpu.vector_store %arg6[%c0_14, %c0_15], %16 {strides = array<i32>} : memref<16x256xbf16, #tpu.memory_space<vmem>>, vector<16x256xbf16>,
    } else {
    }
    return
  }
  func.func @transform_0(%arg0: i32, %arg1: i32, %arg2: i32) -> (i32, i32) {
    %c0_i32 = arith.constant 0 : i32
    return %arg0, %arg2 : i32, i32
  }
  func.func @transform_1(%arg0: i32, %arg1: i32, %arg2: i32) -> (i32, i32) {
    %c0_i32 = arith.constant 0 : i32
    return %arg2, %arg1 : i32, i32
  }
  func.func @transform_2(%arg0: i32, %arg1: i32, %arg2: i32) -> (i32, i32) {
    %c0_i32 = arith.constant 0 : i32
    %c0_i32_0 = arith.constant 0 : i32
    return %c0_i32, %arg1 : i32, i32
  }
  func.func @transform_3(%arg0: i32, %arg1: i32, %arg2: i32) -> (i32, i32) {
    %c0_i32 = arith.constant 0 : i32
    return %arg0, %arg1 : i32, i32
  }
}

</mosaic_0001>

<llo_original>
// kernel: _lambda_.19
$region0: #{_lambda_.19}
  #allocation0 [shape = 'u32[]', space=smem, size = 0x4, offset = 0x4, fixed_abs, tag = 'smem constant byte address 0x4 - core index']
  #allocation1 [shape = 'u32[144,128]{1,0:T(1,128)}', space=vmem, size = 0x12000, scoped, tag = 'internal scratch']
  %s0 = inlined_call_operand.vmem [shape: f32[16,32], index: 0, kind: input, shape index: {}]
  %s1 = inlined_call_operand.vmem [shape: f32[1,32], index: 1, kind: input, shape index: {}]
  %s2 = inlined_call_operand.vmem [shape: f32[1,32], index: 2, kind: input, shape index: {}]
  %s3 = inlined_call_operand.vmem [shape: f32[16,32], index: 3, kind: output, shape index: {}]
  %s4 = sld [smem:[#allocation0]]
  $region22: #{_lambda_.19} parent=0
    _
  %s6 = ssub.s32 1, %s4
  %s7 = scalar_select 0, %s6, %s4
  // Predicated region
  $region2: #{_lambda_.19} parent=0 // pred_check
    _
  $region3: #{_lambda_.19} parent=0 // pred_check_branch
    %9 = sbr.rel (0) target = $region5
  $region4: #{_lambda_.19} parent=0 // pred_region
    _
  $region5: #{_lambda_.19} parent=0 // pred_fallthru
    _
  // Predicated region
  $region6: #{_lambda_.19} parent=0 // pred_check
    _
  $region7: #{_lambda_.19} parent=0 // pred_check_branch
    %11 = sbr.rel (0) target = $region9
  $region8: #{_lambda_.19} parent=0 // pred_region
    _
  $region9: #{_lambda_.19} parent=0 // pred_fallthru
    _
  // Predicated region
  $region10: #{_lambda_.19} parent=0 // pred_check
    _
  $region11: #{_lambda_.19} parent=0 // pred_check_branch
    %13 = sbr.rel (0) target = $region13
  $region12: #{_lambda_.19} parent=0 // pred_region
    _
  $region13: #{_lambda_.19} parent=0 // pred_fallthru
    _
  %v14 = vld [vmem:[%s0] sm:$0xff]
  %v15 = vld [vmem:[%s0 + $0x8] sm:$0xff]
  %vm16 = vcmask 261120
  %v17 = vsel %vm16, %v14, 0.0
  %18 = vadd.xlane.f32.xlu0 %v17
  %v19 = vpop.xlane.xlu0 %18
  %v20 = vsel %vm16, %v15, 0.0
  %21 = vadd.xlane.f32.xlu0 %v20
  %v22 = vpop.xlane.xlu0 %21
  %v23 = vrcp.pop 32.0
  %v24 = vmul.f32 %v19, %v23
  %v25 = vmul.f32 %v22, %v23
  %v26 = vsub.f32 %v14, %v24
  %v27 = vsub.f32 %v15, %v25
  %v28 = vmul.f32 %v26, %v26
  %v29 = vmul.f32 %v27, %v27
  %v30 = vsel %vm16, %v28, 0.0
  %31 = vadd.xlane.f32.xlu0 %v30
  %v32 = vpop.xlane.xlu0 %31
  %v33 = vsel %vm16, %v29, 0.0
  %34 = vadd.xlane.f32.xlu0 %v33
  %v35 = vpop.xlane.xlu0 %34
  %v36 = vmul.f32 %v32, %v23
  %v37 = vmul.f32 %v35, %v23
  %v38 = vadd.f32 %v36, 1e-12
  %v39 = vadd.f32 %v37, 1e-12
  %v40 = vrsqrt.pop %v38
  %v41 = vrsqrt.pop %v39
  %v42 = vmul.f32 %v26, %v40
  %v43 = vmul.f32 %v27, %v41
  %v44 = vld [vmem:[%s1] sm:$0x1]
  %v46 = vlaneseq
  %v47 = vshrl.u32 %v46, 7
  %v48 = vsub.s32 0, %v47
  %v49 = vrot.slane %v44, %v48
  %v51 = vmul.f32 %v42, %v49
  %v52 = vmul.f32 %v43, %v49
  %v53 = vld [vmem:[%s2] sm:$0x1]
  %v55 = vlaneseq
  %v56 = vshrl.u32 %v55, 7
  %v57 = vsub.s32 0, %v56
  %v58 = vrot.slane %v53, %v57
  %v60 = vadd.f32 %v51, %v58
  %v61 = vadd.f32 %v52, %v58
  %62 = vst.msk [vmem:[%s3] sm:$0xff] %vm16, %v60
  %63 = vst.msk [vmem:[%s3 + $0x8] sm:$0xff] %vm16, %v61
  // Predicated region
  $region14: #{_lambda_.19} parent=0 // pred_check
    _
  $region15: #{_lambda_.19} parent=0 // pred_check_branch
    %65 = sbr.rel (0) target = $region17
  $region16: #{_lambda_.19} parent=0 // pred_region
    _
  $region17: #{_lambda_.19} parent=0 // pred_fallthru
    _
  // Predicated region
  $region18: #{_lambda_.19} parent=0 // pred_check
    _
  $region19: #{_lambda_.19} parent=0 // pred_check_branch
    %67 = sbr.rel (0) target = $region21
  $region20: #{_lambda_.19} parent=0 // pred_region
    _
  $region21: #{_lambda_.19} parent=0 // pred_fallthru
    _

// kernel: _lambda_.20
$region0: #{_lambda_.20}
  #allocation0 [shape = 'u32[]', space=smem, size = 0x4, offset = 0x4, fixed_abs, tag = 'smem constant byte address 0x4 - core index']
  #allocation1 [shape = 'u32[144,128]{1,0:T(1,128)}', space=vmem, size = 0x12000, scoped, tag = 'internal scratch']
  #allocation2 [shape = 'f32[16,96]{1,0:T(8,128)}', space=vmem, size = 0x2000, scoped, tag = 'scratch operand']
  %s0 = inlined_call_operand.vmem [shape: bf16[16,32], index: 0, kind: input, shape index: {}]
  %s1 = inlined_call_operand.vmem [shape: bf16[32,96], index: 1, kind: input, shape index: {}]
  %s2 = inlined_call_operand.vmem [shape: f32[1,96], index: 2, kind: input, shape index: {}]
  %s3 = inlined_call_operand.vmem [shape: bf16[16,96], index: 3, kind: output, shape index: {}]
  %s4 = sld [smem:[#allocation0]]
  $region30: #{_lambda_.20} parent=0
    _
  %s6 = ssub.s32 1, %s4
  %s7 = scalar_select 0, %s6, %s4
  // Predicated region
  $region2: #{_lambda_.20} parent=0 // pred_check
    _
  $region3: #{_lambda_.20} parent=0 // pred_check_branch
    %9 = sbr.rel (0) target = $region5
  $region4: #{_lambda_.20} parent=0 // pred_region
    _
  $region5: #{_lambda_.20} parent=0 // pred_fallthru
    _
  // Predicated region
  $region6: #{_lambda_.20} parent=0 // pred_check
    _
  $region7: #{_lambda_.20} parent=0 // pred_check_branch
    %11 = sbr.rel (0) target = $region9
  $region8: #{_lambda_.20} parent=0 // pred_region
    _
  $region9: #{_lambda_.20} parent=0 // pred_fallthru
    _
  // Predicated region
  $region10: #{_lambda_.20} parent=0 // pred_check
    _
  $region11: #{_lambda_.20} parent=0 // pred_check_branch
    %13 = sbr.rel (0) target = $region13
  $region12: #{_lambda_.20} parent=0 // pred_region
    _
  $region13: #{_lambda_.20} parent=0 // pred_fallthru
    _
  %p15 = scmp.eq.s32.totalorder 0, 0
  // Predicated region
  $region14: #{_lambda_.20} parent=0 // pred_check
    %p16 = pneg %p15
  $region15: #{_lambda_.20} parent=0 // pred_check_branch
    %18 = sbr.rel (%p16) target = $region17
  $region16: #{_lambda_.20} parent=0 // pred_region
    %vm19 = vcmask 785408
    %20 = vst.msk [vmem:[#allocation2] sm:$0xff] %vm19, 0.0
    %21 = vst.msk [vmem:[#allocation2 + $0x8] sm:$0xff] %vm19, 0.0
  $region17: #{_lambda_.20} parent=0 // pred_fallthru
    _
  %v22 = vld [vmem:[#allocation2] sm:$0xff]
  %v23 = vld [vmem:[#allocation2 + $0x8] sm:$0xff]
  %v24 = vld [vmem:[%s0] sm:$0xf]
  %v25 = vld [vmem:[%s0 + $0x4] sm:$0xf]
  %v26 = vld [vmem:[%s1] sm:$0xf]
  %v27 = vld [vmem:[%s1 + $0x4] sm:$0xf]
  %v28 = vld [vmem:[%s1 + $0x8] sm:$0xf]
  %v29 = vld [vmem:[%s1 + $0xc] sm:$0xf]
  %v32 = vunpack.c.l.b16 %v24
  %v33 = vunpack.c.l.b16 %v25
  %v34 = vpack.c.b16 %v33, %v32
  %v39 = vunpack.c.l.b16 %v26
  %v40 = vunpack.c.l.b16 %v27
  %v41 = vunpack.c.l.b16 %v28
  %v42 = vunpack.c.l.b16 %v29
  %v43 = vpack.c.b16 %v40, %v39
  %v44 = vpack.c.b16 %v42, %v41
  %vm47 = vcmask 261120
  %v49 = vsel %vm47, %v34, 0
  %51 = vmatprep.subr.bf16.mxu0 0
  %52 = vmatpush1.bf16.msra.mxu0 %v43
  %53 = vmatprep.subr.bf16.mxu0 0
  %54 = vmatpush1.bf16.msra.mxu0 %v44
  %55 = vmatprep.subr.bf16.mxu0 0
  %56 = vmatpush1.bf16.msra.mxu0 0
  %57 = vmatprep.subr.bf16.mxu0 0
  %58 = vmatpush1.bf16.msra.mxu0 0
  %59 = vmatprep.subr.bf16.mxu0 0
  %60 = vmatpush1.bf16.msra.mxu0 0
  %61 = vmatprep.subr.bf16.mxu0 0
  %62 = vmatpush1.bf16.msra.mxu0 0
  %63 = vmatprep.subr.bf16.mxu0 0
  %64 = vmatpush1.bf16.msra.mxu0 0
  %65 = vmatprep.subr.bf16.mxu0 0
  %66 = vmatpush1.bf16.msra.mxu0 0
  %67 = vmatprep.subr.bf16.mxu0 0
  %68 = vmatpush1.bf16.msra.mxu0 0
  %69 = vmatprep.subr.bf16.mxu0 0
  %70 = vmatpush1.bf16.msra.mxu0 0
  %71 = vmatprep.subr.bf16.mxu0 0
  %72 = vmatpush1.bf16.msra.mxu0 0
  %73 = vmatprep.subr.bf16.mxu0 0
  %74 = vmatpush1.bf16.msra.mxu0 0
  %75 = vmatprep.subr.bf16.mxu0 0
  %76 = vmatpush1.bf16.msra.mxu0 0
  %77 = vmatprep.subr.bf16.mxu0 0
  %78 = vmatpush1.bf16.msra.mxu0 0
  %79 = vmatprep.subr.bf16.mxu0 0
  %80 = vmatpush1.bf16.msra.mxu0 0
  %81 = vmatprep.subr.bf16.mxu0 0
  %82 = vmatpush1.bf16.msra.mxu0 0
  %83 = vmatprep.mubr.bf16.mxu0 0
  %84 = vmatmul.mubr.bf16.gmra.mrb[0].mxu0 %v49
  %v85 = vpop.f32.mrb[0].mxu0
  %v86 = vadd.f32 0.0, %v85
  %v87 = vpop.f32.mrb[0].mxu0
  %v88 = vpop.f32.mrb[0].mxu0
  %v89 = vadd.f32 0.0, %v88
  %v90 = vpop.f32.mrb[0].mxu0
  %91 = vdwg.mxu0
  %v92 = vadd.f32 %v22, %v86
  %v93 = vadd.f32 %v23, %v89
  %vm94 = vcmask 785408
  %95 = vst.msk [vmem:[#allocation2] sm:$0xff] %vm94, %v92
  %96 = vst.msk [vmem:[#allocation2 + $0x8] sm:$0xff] %vm94, %v93
  // Predicated region
  $region18: #{_lambda_.20} parent=0 // pred_check
    %p97 = pneg %p15
  $region19: #{_lambda_.20} parent=0 // pred_check_branch
    %99 = sbr.rel (%p97) target = $region21
  $region20: #{_lambda_.20} parent=0 // pred_region
    %v100 = vld [vmem:[#allocation2] sm:$0xff]
    %v101 = vld [vmem:[#allocation2 + $0x8] sm:$0xff]
    %v102 = vld [vmem:[%s2] sm:$0x1]
    %v104 = vlaneseq
    %v105 = vshrl.u32 %v104, 7
    %v106 = vsub.s32 0, %v105
    %v107 = vrot.slane %v102, %v106
    %v109 = vadd.f32 %v100, %v107
    %v110 = vadd.f32 %v101, %v107
    %v111 = vpack.c.bf16 %v110, %v109
    %v113 = vunpack.c.l.b16 %v111
    %v114 = vunpack.c.h.b16 %v111
    %v115 = vpack.c.b16 %v113, %v113
    %v116 = vpack.c.b16 %v114, %v114
    %vm119 = vcmask 781312
    %120 = vst.msk [vmem:[%s3] sm:$0xf] %vm119, %v115
    %121 = vst.msk [vmem:[%s3 + $0x4] sm:$0xf] %vm119, %v116
  $region21: #{_lambda_.20} parent=0 // pred_fallthru
    _
  // Predicated region
  $region22: #{_lambda_.20} parent=0 // pred_check
    _
  $region23: #{_lambda_.20} parent=0 // pred_check_branch
    %123 = sbr.rel (0) target = $region25
  $region24: #{_lambda_.20} parent=0 // pred_region
    _
  $region25: #{_lambda_.20} parent=0 // pred_fallthru
    _
  // Predicated region
  $region26: #{_lambda_.20} parent=0 // pred_check
    _
  $region27: #{_lambda_.20} parent=0 // pred_check_branch
    %125 = sbr.rel (0) target = $region29
  $region28: #{_lambda_.20} parent=0 // pred_region
    _
  $region29: #{_lambda_.20} parent=0 // pred_fallthru
    _

// kernel: _lambda_.22
$region0: #{_lambda_.22}
  #allocation0 [shape = 'u32[]', space=smem, size = 0x4, offset = 0x4, fixed_abs, tag = 'smem constant byte address 0x4 - core index']
  #allocation1 [shape = 'u32[144,128]{1,0:T(1,128)}', space=vmem, size = 0x12000, scoped, tag = 'internal scratch']
  #allocation2 [shape = 'f32[16,32]{1,0:T(8,128)}', space=vmem, size = 0x2000, scoped, tag = 'scratch operand']
  %s0 = inlined_call_operand.vmem [shape: bf16[16,32], index: 0, kind: input, shape index: {}]
  %s1 = inlined_call_operand.vmem [shape: bf16[32,32], index: 1, kind: input, shape index: {}]
  %s2 = inlined_call_operand.vmem [shape: f32[1,32], index: 2, kind: input, shape index: {}]
  %s3 = inlined_call_operand.vmem [shape: f32[16,32], index: 3, kind: output, shape index: {}]
  %s4 = sld [smem:[#allocation0]]
  $region30: #{_lambda_.22} parent=0
    _
  %s6 = ssub.s32 1, %s4
  %s7 = scalar_select 0, %s6, %s4
  // Predicated region
  $region2: #{_lambda_.22} parent=0 // pred_check
    _
  $region3: #{_lambda_.22} parent=0 // pred_check_branch
    %9 = sbr.rel (0) target = $region5
  $region4: #{_lambda_.22} parent=0 // pred_region
    _
  $region5: #{_lambda_.22} parent=0 // pred_fallthru
    _
  // Predicated region
  $region6: #{_lambda_.22} parent=0 // pred_check
    _
  $region7: #{_lambda_.22} parent=0 // pred_check_branch
    %11 = sbr.rel (0) target = $region9
  $region8: #{_lambda_.22} parent=0 // pred_region
    _
  $region9: #{_lambda_.22} parent=0 // pred_fallthru
    _
  // Predicated region
  $region10: #{_lambda_.22} parent=0 // pred_check
    _
  $region11: #{_lambda_.22} parent=0 // pred_check_branch
    %13 = sbr.rel (0) target = $region13
  $region12: #{_lambda_.22} parent=0 // pred_region
    _
  $region13: #{_lambda_.22} parent=0 // pred_fallthru
    _
  %p15 = scmp.eq.s32.totalorder 0, 0
  // Predicated region
  $region14: #{_lambda_.22} parent=0 // pred_check
    %p16 = pneg %p15
  $region15: #{_lambda_.22} parent=0 // pred_check_branch
    %18 = sbr.rel (%p16) target = $region17
  $region16: #{_lambda_.22} parent=0 // pred_region
    %vm19 = vcmask 261120
    %20 = vst.msk [vmem:[#allocation2] sm:$0xff] %vm19, 0.0
    %21 = vst.msk [vmem:[#allocation2 + $0x8] sm:$0xff] %vm19, 0.0
  $region17: #{_lambda_.22} parent=0 // pred_fallthru
    _
  %v22 = vld [vmem:[#allocation2] sm:$0xff]
  %v23 = vld [vmem:[#allocation2 + $0x8] sm:$0xff]
  %v24 = vld [vmem:[%s0] sm:$0xf]
  %v25 = vld [vmem:[%s0 + $0x4] sm:$0xf]
  %v26 = vld [vmem:[%s1] sm:$0xf]
  %v27 = vld [vmem:[%s1 + $0x4] sm:$0xf]
  %v28 = vld [vmem:[%s1 + $0x8] sm:$0xf]
  %v29 = vld [vmem:[%s1 + $0xc] sm:$0xf]
  %v32 = vunpack.c.l.b16 %v24
  %v33 = vunpack.c.l.b16 %v25
  %v34 = vpack.c.b16 %v33, %v32
  %v39 = vunpack.c.l.b16 %v26
  %v40 = vunpack.c.l.b16 %v27
  %v41 = vunpack.c.l.b16 %v28
  %v42 = vunpack.c.l.b16 %v29
  %v43 = vpack.c.b16 %v40, %v39
  %v44 = vpack.c.b16 %v42, %v41
  %vm47 = vcmask 261120
  %v49 = vsel %vm47, %v34, 0
  %51 = vmatprep.subr.bf16.mxu0 0
  %52 = vmatpush1.bf16.msra.mxu0 %v43
  %53 = vmatprep.subr.bf16.mxu0 0
  %54 = vmatpush1.bf16.msra.mxu0 %v44
  %55 = vmatprep.subr.bf16.mxu0 0
  %56 = vmatpush1.bf16.msra.mxu0 0
  %57 = vmatprep.subr.bf16.mxu0 0
  %58 = vmatpush1.bf16.msra.mxu0 0
  %59 = vmatprep.subr.bf16.mxu0 0
  %60 = vmatpush1.bf16.msra.mxu0 0
  %61 = vmatprep.subr.bf16.mxu0 0
  %62 = vmatpush1.bf16.msra.mxu0 0
  %63 = vmatprep.subr.bf16.mxu0 0
  %64 = vmatpush1.bf16.msra.mxu0 0
  %65 = vmatprep.subr.bf16.mxu0 0
  %66 = vmatpush1.bf16.msra.mxu0 0
  %67 = vmatprep.subr.bf16.mxu0 0
  %68 = vmatpush1.bf16.msra.mxu0 0
  %69 = vmatprep.subr.bf16.mxu0 0
  %70 = vmatpush1.bf16.msra.mxu0 0
  %71 = vmatprep.subr.bf16.mxu0 0
  %72 = vmatpush1.bf16.msra.mxu0 0
  %73 = vmatprep.subr.bf16.mxu0 0
  %74 = vmatpush1.bf16.msra.mxu0 0
  %75 = vmatprep.subr.bf16.mxu0 0
  %76 = vmatpush1.bf16.msra.mxu0 0
  %77 = vmatprep.subr.bf16.mxu0 0
  %78 = vmatpush1.bf16.msra.mxu0 0
  %79 = vmatprep.subr.bf16.mxu0 0
  %80 = vmatpush1.bf16.msra.mxu0 0
  %81 = vmatprep.subr.bf16.mxu0 0
  %82 = vmatpush1.bf16.msra.mxu0 0
  %83 = vmatprep.mubr.bf16.mxu0 0
  %84 = vmatmul.mubr.bf16.gmra.mrb[0].mxu0 %v49
  %v85 = vpop.f32.mrb[0].mxu0
  %v86 = vadd.f32 0.0, %v85
  %v87 = vpop.f32.mrb[0].mxu0
  %v88 = vpop.f32.mrb[0].mxu0
  %v89 = vadd.f32 0.0, %v88
  %v90 = vpop.f32.mrb[0].mxu0
  %91 = vdwg.mxu0
  %v92 = vadd.f32 %v22, %v86
  %v93 = vadd.f32 %v23, %v89
  %94 = vst.msk [vmem:[#allocation2] sm:$0xff] %vm47, %v92
  %95 = vst.msk [vmem:[#allocation2 + $0x8] sm:$0xff] %vm47, %v93
  // Predicated region
  $region18: #{_lambda_.22} parent=0 // pred_check
    %p96 = pneg %p15
  $region19: #{_lambda_.22} parent=0 // pred_check_branch
    %98 = sbr.rel (%p96) target = $region21
  $region20: #{_lambda_.22} parent=0 // pred_region
    %v99 = vld [vmem:[#allocation2] sm:$0xff]
    %v100 = vld [vmem:[#allocation2 + $0x8] sm:$0xff]
    %v101 = vld [vmem:[%s2] sm:$0x1]
    %v103 = vlaneseq
    %v104 = vshrl.u32 %v103, 7
    %v105 = vsub.s32 0, %v104
    %v106 = vrot.slane %v101, %v105
    %v108 = vadd.f32 %v99, %v106
    %v109 = vadd.f32 %v100, %v106
    %110 = vst.msk [vmem:[%s3] sm:$0xff] %vm47, %v108
    %111 = vst.msk [vmem:[%s3 + $0x8] sm:$0xff] %vm47, %v109
  $region21: #{_lambda_.22} parent=0 // pred_fallthru
    _
  // Predicated region
  $region22: #{_lambda_.22} parent=0 // pred_check
    _
  $region23: #{_lambda_.22} parent=0 // pred_check_branch
    %113 = sbr.rel (0) target = $region25
  $region24: #{_lambda_.22} parent=0 // pred_region
    _
  $region25: #{_lambda_.22} parent=0 // pred_fallthru
    _
  // Predicated region
  $region26: #{_lambda_.22} parent=0 // pred_check
    _
  $region27: #{_lambda_.22} parent=0 // pred_check_branch
    %115 = sbr.rel (0) target = $region29
  $region28: #{_lambda_.22} parent=0 // pred_region
    _
  $region29: #{_lambda_.22} parent=0 // pred_fallthru
    _

// kernel: _lambda_.21
$region0: #{_lambda_.21}
  #allocation0 [shape = 'u32[]', space=smem, size = 0x4, offset = 0x4, fixed_abs, tag = 'smem constant byte address 0x4 - core index']
  #allocation1 [shape = 'u32[144,128]{1,0:T(1,128)}', space=vmem, size = 0x12000, scoped, tag = 'internal scratch']
  %s0 = inlined_call_operand.vmem [shape: bf16[2,8,96], index: 0, kind: input, shape index: {}]
  %s1 = inlined_call_operand.vmem [shape: f32[2,1,8], index: 1, kind: input, shape index: {}]
  %s2 = inlined_call_operand.vmem [shape: bf16[2,8,32], index: 2, kind: output, shape index: {}]
  %s3 = sld [smem:[#allocation0]]
  $region41: #{_lambda_.21} parent=0
    _
  %s5 = ssub.s32 1, %s3
  %s6 = scalar_select 0, %s5, %s3
  loop: start=0, step=1, limit=4
  $region2: #{_lambda_.21} parent=0 // loop_pre_header
    _
  $region3: #{_lambda_.21} parent=0 // loop_header
    %s8 = sphi 0, %s12
    %p9 = scmp.ge.s32.totalorder %s8, 4
    %s18 = sphi 0, %s20
    %s21 = sphi 0, %s18
    %s22 = sphi 0, %s21
    %s38 = sphi 0, %s22
    %s44 = sphi 0, %s46
    %s47 = sphi 0, %s44
    %s48 = sphi 0, %s47
    %s64 = sphi 0, %s48
    %s70 = sphi 0, %s72
    %s73 = sphi 0, %s70
    %s74 = sphi 0, %s73
    %s90 = sphi 0, %s74
  $region4: #{_lambda_.21} parent=0 // loop_header_branch
    %11 = sbr.rel (%p9) target = $region8
  $region5: #{_lambda_.21} parent=0 // loop_body
    %s13 = ssub.s32 %s8, 1
    %s14 = ssub.s32 %s8, 2
    %s15 = sadd.s32 %s8, 1
    %s16 = ssub.s32 %s8, %s15
    %p17 = scmp.eq.s32.totalorder %s16, 0
    %s19 = sadd.s32 %s18, 1
    %s20 = scalar_select %p17, %s18, %s19
    %p23 = pneg %p17
    %p24 = scmp.eq.s32.totalorder %s8, 1
    %p25 = por %p23, %p24
    %p26 = scmp.ne.s32.totalorder %s18, %s21
    %p27 = scmp.eq.s32.totalorder %s8, 0
    %p28 = por %p26, %p27
    %p29 = scmp.ne.s32.totalorder %s18, %s21
    %p30 = scmp.eq.s32.totalorder %s13, 1
    %p31 = por %p29, %p30
    %p32 = scmp.ne.s32.totalorder %s21, %s22
    %p33 = scmp.eq.s32.totalorder %s13, 0
    %p34 = por %p32, %p33
    %p35 = scmp.ne.s32.totalorder %s21, %s22
    %p36 = scmp.eq.s32.totalorder %s14, 1
    %p37 = por %p35, %p36
    %p39 = scmp.ne.s32.totalorder %s22, %s38
    %p40 = scmp.eq.s32.totalorder %s14, 0
    %p41 = por %p39, %p40
    %s42 = ssub.s32 %s8, %s15
    %p43 = scmp.eq.s32.totalorder %s42, 0
    %s45 = sadd.s32 %s44, 1
    %s46 = scalar_select %p43, %s44, %s45
    %p49 = pneg %p43
    %p50 = scmp.eq.s32.totalorder %s8, 1
    %p51 = por %p49, %p50
    %p52 = scmp.ne.s32.totalorder %s44, %s47
    %p53 = scmp.eq.s32.totalorder %s8, 0
    %p54 = por %p52, %p53
    %p55 = scmp.ne.s32.totalorder %s44, %s47
    %p56 = scmp.eq.s32.totalorder %s13, 1
    %p57 = por %p55, %p56
    %p58 = scmp.ne.s32.totalorder %s47, %s48
    %p59 = scmp.eq.s32.totalorder %s13, 0
    %p60 = por %p58, %p59
    %p61 = scmp.ne.s32.totalorder %s47, %s48
    %p62 = scmp.eq.s32.totalorder %s14, 1
    %p63 = por %p61, %p62
    %p65 = scmp.ne.s32.totalorder %s48, %s64
    %p66 = scmp.eq.s32.totalorder %s14, 0
    %p67 = por %p65, %p66
    %s68 = ssub.s32 %s8, %s15
    %p69 = scmp.eq.s32.totalorder %s68, 0
    %s71 = sadd.s32 %s70, 1
    %s72 = scalar_select %p69, %s70, %s71
    %p75 = pneg %p69
    %p76 = scmp.eq.s32.totalorder %s8, 1
    %p77 = por %p75, %p76
    %p78 = scmp.ne.s32.totalorder %s70, %s73
    %p79 = scmp.eq.s32.totalorder %s8, 0
    %p80 = por %p78, %p79
    %p81 = scmp.ne.s32.totalorder %s70, %s73
    %p82 = scmp.eq.s32.totalorder %s13, 1
    %p83 = por %p81, %p82
    %p84 = scmp.ne.s32.totalorder %s73, %s74
    %p85 = scmp.eq.s32.totalorder %s13, 0
    %p86 = por %p84, %p85
    %p87 = scmp.ne.s32.totalorder %s73, %s74
    %p88 = scmp.eq.s32.totalorder %s14, 1
    %p89 = por %p87, %p88
    %p91 = scmp.ne.s32.totalorder %s74, %s90
    %p92 = scmp.eq.s32.totalorder %s14, 0
    %p93 = por %p91, %p92
    %p94 = scmp.le.s32.totalorder 1, %s8
    %p95 = scmp.lt.s32.totalorder %s8, 3
    %p96 = pnand %p94, %p95
    %p97 = pneg %p96
    // Predicated region
    $region9: #{_lambda_.21} parent=5 // pred_check
      _
    $region10: #{_lambda_.21} parent=5 // pred_check_branch
      %99 = sbr.rel (%p96) target = $region12
    $region11: #{_lambda_.21} parent=5 // pred_region
      %s100 = ssub.s32 %s8, 1
    $region12: #{_lambda_.21} parent=5 // pred_fallthru
      _
    %p101 = scmp.lt.s32.totalorder %s8, 2
    // Predicated region
    $region13: #{_lambda_.21} parent=5 // pred_check
      %p102 = pneg %p101
    $region14: #{_lambda_.21} parent=5 // pred_check_branch
      %104 = sbr.rel (%p102) target = $region16
    $region15: #{_lambda_.21} parent=5 // pred_region
      // Predicated region
      $region17: #{_lambda_.21} parent=15 // pred_check
        %p105 = pneg %p28
      $region18: #{_lambda_.21} parent=15 // pred_check_branch
        %107 = sbr.rel (%p105) target = $region20
      $region19: #{_lambda_.21} parent=15 // pred_region
        %p108 = scmp.lt.s32.totalorder %s8, 1
        %s109 = scalar_select %p108, %s8, 1
        %s110 = smul.addr %s109, 4
        %s111 = scalar_lea.vmem %s0, %s110
      $region20: #{_lambda_.21} parent=15 // pred_fallthru
        _
      // Predicated region
      $region21: #{_lambda_.21} parent=15 // pred_check
        %p112 = pneg %p54
      $region22: #{_lambda_.21} parent=15 // pred_check_branch
        %114 = sbr.rel (%p112) target = $region24
      $region23: #{_lambda_.21} parent=15 // pred_region
        %p115 = scmp.lt.s32.totalorder %s8, 1
        %s116 = scalar_select %p115, %s8, 1
        %s117 = scalar_lea.vmem %s1, %s116
      $region24: #{_lambda_.21} parent=15 // pred_fallthru
        _
    $region16: #{_lambda_.21} parent=5 // pred_fallthru
      _
    %p118 = scmp.le.s32.totalorder 1, %s8
    %p119 = scmp.lt.s32.totalorder %s8, 3
    %p120 = pnand %p118, %p119
    %p121 = pneg %p120
    // Predicated region
    $region25: #{_lambda_.21} parent=5 // pred_check
      _
    $region26: #{_lambda_.21} parent=5 // pred_check_branch
      %123 = sbr.rel (%p120) target = $region28
    $region27: #{_lambda_.21} parent=5 // pred_region
      %s124 = ssub.s32 %s8, 1
      %p125 = scmp.lt.s32.totalorder %s13, 1
      %s126 = scalar_select %p125, %s13, 1
      %s127 = smul.addr %s126, 4
      %s128 = scalar_lea.vmem %s0, %s127
      %p129 = pneg %p34
      %p130 = pneg %p31
      %p131 = scmp.lt.s32.totalorder %s13, 1
      %s132 = scalar_select %p131, %s13, 1
      %s133 = scalar_lea.vmem %s1, %s132
      %p134 = pneg %p60
      %p135 = pneg %p57
      %p136 = pneg %p86
      %p137 = pneg %p83
      %p138 = scmp.lt.s32.totalorder %s13, 1
      %s139 = scalar_select %p138, %s13, 1
      %s140 = smul.addr %s139, 4
      %s141 = scalar_lea.vmem %s2, %s140
      %p142 = scmp.lt.s32.totalorder %s13, 1
      %s143 = scalar_select %p142, %s13, 1
      %s144 = smul.addr %s143, 4
      %s145 = scalar_lea.vmem %s0, %s144
      %p146 = scmp.lt.s32.totalorder %s13, 1
      %s147 = scalar_select %p146, %s13, 1
      %s148 = scalar_lea.vmem %s1, %s147
      %p149 = scmp.lt.s32.totalorder %s13, 1
      %s150 = scalar_select %p149, %s13, 1
      %s151 = smul.addr %s150, 4
      %s152 = scalar_lea.vmem %s2, %s151
      %v155 = vld [vmem:[%s145] sm:$0xf]
      %v156 = vld [vmem:[%s148] sm:$0x1]
      %v157 = vsub.f32 %v156, 1.0
      %v158 = vmul.f32 %v157, 1e+09
      %v159 = vmul.bf16 %v155, 1052065461
      %v161 = vlaneseq
      %v162 = vshrl.u32 %v161, 7
      %v163 = vsub.s32 0, %v162
      %v164 = vrot.slane %v158, %v163
      %v167 = vunpack.c.l.b16 %v155
      %v168 = vpack.c.b16 %v167, %v167
      %169 = vrot.lane.b32.xlu0 %v168, 96
      %v170 = vpop.permute.xlu0 %169
      %vm171 = vcmask 64512
      %v173 = vsel %vm171, %v159, 0
      %v176 = vsel %vm171, %v170, 0
      %178 = vmatprep.subr.bf16.mxu0 0
      %179 = vmatpush1.bf16.xpose.msra.mxu0 %v176
      %180 = vmatprep.subr.bf16.mxu0 0
      %181 = vmatpush1.bf16.xpose.msra.mxu0 0
      %182 = vmatprep.subr.bf16.mxu0 0
      %183 = vmatpush1.bf16.xpose.msra.mxu0 0
      %184 = vmatprep.subr.bf16.mxu0 0
      %185 = vmatpush1.bf16.xpose.msra.mxu0 0
      %186 = vmatprep.subr.bf16.mxu0 0
      %187 = vmatpush1.bf16.xpose.msra.mxu0 0
      %188 = vmatprep.subr.bf16.mxu0 0
      %189 = vmatpush1.bf16.xpose.msra.mxu0 0
      %190 = vmatprep.subr.bf16.mxu0 0
      %191 = vmatpush1.bf16.xpose.msra.mxu0 0
      %192 = vmatprep.subr.bf16.mxu0 0
      %193 = vmatpush1.bf16.xpose.msra.mxu0 0
      %194 = vmatprep.subr.bf16.mxu0 0
      %195 = vmatpush1.bf16.xpose.msra.mxu0 0
      %196 = vmatprep.subr.bf16.mxu0 0
      %197 = vmatpush1.bf16.xpose.msra.mxu0 0
      %198 = vmatprep.subr.bf16.mxu0 0
      %199 = vmatpush1.bf16.xpose.msra.mxu0 0
      %200 = vmatprep.subr.bf16.mxu0 0
      %201 = vmatpush1.bf16.xpose.msra.mxu0 0
      %202 = vmatprep.subr.bf16.mxu0 0
      %203 = vmatpush1.bf16.xpose.msra.mxu0 0
      %204 = vmatprep.subr.bf16.mxu0 0
      %205 = vmatpush1.bf16.xpose.msra.mxu0 0
      %206 = vmatprep.subr.bf16.mxu0 0
      %207 = vmatpush1.bf16.xpose.msra.mxu0 0
      %208 = vmatprep.subr.bf16.mxu0 0
      %209 = vmatpush1.bf16.xpose.msra.mxu0 0
      %210 = vmatprep.mubr.bf16.mxu0 0
      %211 = vmatmul.mubr.bf16.gmra.mrb[0].mxu0 %v173
      %v212 = vpop.f32.mrb[0].mxu0
      %v213 = vadd.f32 %v164, %v212
      %v214 = vpop.f32.mrb[0].mxu0
      %v215 = vpop.f32.mrb[0].mxu0
      %v216 = vpop.f32.mrb[0].mxu0
      %217 = vdwg.mxu0
      %v218 = vsel %vm171, %v213, -inf
      %219 = vmax.xlane.f32.xlu0 %v218
      %v220 = vpop.xlane.xlu0 %219
      %v221 = vsub.f32 %v213, %v220
      %v222 = vmul.f32 %v221, 1.442695
      %v223 = vpow.pop %v222
      %v224 = vsel %vm171, %v223, 0.0
      %225 = vadd.xlane.f32.xlu0 %v224
      %v226 = vpop.xlane.xlu0 %225
      %v227 = vrcp.pop %v226
      %v228 = vmul.f32 %v223, %v227
      %v229 = vpack.c.bf16 %v228, %v228
      %230 = vrot.lane.b32.xlu0 %v168, 64
      %v231 = vpop.permute.xlu0 %230
      %v233 = vsel %vm171, %v229, 0
      %vm235 = vcmask 1043456
      %v237 = vsel %vm235, %v231, 0
      %239 = vmatprep.subr.bf16.mxu0 0
      %240 = vmatpush1.bf16.msra.mxu0 %v237
      %241 = vmatprep.subr.bf16.mxu0 0
      %242 = vmatpush1.bf16.msra.mxu0 0
      %243 = vmatprep.subr.bf16.mxu0 0
      %244 = vmatpush1.bf16.msra.mxu0 0
      %245 = vmatprep.subr.bf16.mxu0 0
      %246 = vmatpush1.bf16.msra.mxu0 0
      %247 = vmatprep.subr.bf16.mxu0 0
      %248 = vmatpush1.bf16.msra.mxu0 0
      %249 = vmatprep.subr.bf16.mxu0 0
      %250 = vmatpush1.bf16.msra.mxu0 0
      %251 = vmatprep.subr.bf16.mxu0 0
      %252 = vmatpush1.bf16.msra.mxu0 0
      %253 = vmatprep.subr.bf16.mxu0 0
      %254 = vmatpush1.bf16.msra.mxu0 0
      %255 = vmatprep.subr.bf16.mxu0 0
      %256 = vmatpush1.bf16.msra.mxu0 0
      %257 = vmatprep.subr.bf16.mxu0 0
      %258 = vmatpush1.bf16.msra.mxu0 0
      %259 = vmatprep.subr.bf16.mxu0 0
      %260 = vmatpush1.bf16.msra.mxu0 0
      %261 = vmatprep.subr.bf16.mxu0 0
      %262 = vmatpush1.bf16.msra.mxu0 0
      %263 = vmatprep.subr.bf16.mxu0 0
      %264 = vmatpush1.bf16.msra.mxu0 0
      %265 = vmatprep.subr.bf16.mxu0 0
      %266 = vmatpush1.bf16.msra.mxu0 0
      %267 = vmatprep.subr.bf16.mxu0 0
      %268 = vmatpush1.bf16.msra.mxu0 0
      %269 = vmatprep.subr.bf16.mxu0 0
      %270 = vmatpush1.bf16.msra.mxu0 0
      %271 = vmatprep.mubr.bf16.mxu0 0
      %272 = vmatmul.mubr.bf16.gmra.mrb[0].mxu0 %v233
      %v273 = vpop.f32.mrb[0].mxu0
      %v274 = vadd.f32 0.0, %v273
      %v275 = vpop.f32.mrb[0].mxu0
      %v276 = vpop.f32.mrb[0].mxu0
      %v277 = vpop.f32.mrb[0].mxu0
      %278 = vdwg.mxu0
      %v279 = vpack.c.bf16 %v274, %v274
      %vm280 = vcmask 60416
      %281 = vst.msk [vmem:[%s152] sm:$0xf] %vm280, %v279
      %v283 = vunpack.c.l.b16 %v159
      %v284 = vpack.c.b16 %v283, %v283
      %285 = vrot.lane.b32.xlu0 %v284, 120
      %v286 = vpop.permute.xlu0 %285
      %287 = vrot.lane.b32.xlu0 %v168, 88
      %v288 = vpop.permute.xlu0 %287
      %v290 = vsel %vm171, %v286, 0
      %v293 = vsel %vm171, %v288, 0
      %295 = vmatprep.subr.bf16.mxu0 0
      %296 = vmatpush1.bf16.xpose.msra.mxu0 %v293
      %297 = vmatprep.subr.bf16.mxu0 0
      %298 = vmatpush1.bf16.xpose.msra.mxu0 0
      %299 = vmatprep.subr.bf16.mxu0 0
      %300 = vmatpush1.bf16.xpose.msra.mxu0 0
      %301 = vmatprep.subr.bf16.mxu0 0
      %302 = vmatpush1.bf16.xpose.msra.mxu0 0
      %303 = vmatprep.subr.bf16.mxu0 0
      %304 = vmatpush1.bf16.xpose.msra.mxu0 0
      %305 = vmatprep.subr.bf16.mxu0 0
      %306 = vmatpush1.bf16.xpose.msra.mxu0 0
      %307 = vmatprep.subr.bf16.mxu0 0
      %308 = vmatpush1.bf16.xpose.msra.mxu0 0
      %309 = vmatprep.subr.bf16.mxu0 0
      %310 = vmatpush1.bf16.xpose.msra.mxu0 0
      %311 = vmatprep.subr.bf16.mxu0 0
      %312 = vmatpush1.bf16.xpose.msra.mxu0 0
      %313 = vmatprep.subr.bf16.mxu0 0
      %314 = vmatpush1.bf16.xpose.msra.mxu0 0
      %315 = vmatprep.subr.bf16.mxu0 0
      %316 = vmatpush1.bf16.xpose.msra.mxu0 0
      %317 = vmatprep.subr.bf16.mxu0 0
      %318 = vmatpush1.bf16.xpose.msra.mxu0 0
      %319 = vmatprep.subr.bf16.mxu0 0
      %320 = vmatpush1.bf16.xpose.msra.mxu0 0
      %321 = vmatprep.subr.bf16.mxu0 0
      %322 = vmatpush1.bf16.xpose.msra.mxu0 0
      %323 = vmatprep.subr.bf16.mxu0 0
      %324 = vmatpush1.bf16.xpose.msra.mxu0 0
      %325 = vmatprep.subr.bf16.mxu0 0
      %326 = vmatpush1.bf16.xpose.msra.mxu0 0
      %327 = vmatprep.mubr.bf16.mxu0 0
      %328 = vmatmul.mubr.bf16.gmra.mrb[0].mxu0 %v290
      %v329 = vpop.f32.mrb[0].mxu0
      %v330 = vadd.f32 %v164, %v329
      %v331 = vpop.f32.mrb[0].mxu0
      %v332 = vpop.f32.mrb[0].mxu0
      %v333 = vpop.f32.mrb[0].mxu0
      %334 = vdwg.mxu0
      %v335 = vsel %vm171, %v330, -inf
      %336 = vmax.xlane.f32.xlu0 %v335
      %v337 = vpop.xlane.xlu0 %336
      %v338 = vsub.f32 %v330, %v337
      %v339 = vmul.f32 %v338, 1.442695
      %v340 = vpow.pop %v339
      %v341 = vsel %vm171, %v340, 0.0
      %342 = vadd.xlane.f32.xlu0 %v341
      %v343 = vpop.xlane.xlu0 %342
      %v344 = vrcp.pop %v343
      %v345 = vmul.f32 %v340, %v344
      %v346 = vpack.c.bf16 %v345, %v345
      %347 = vrot.lane.b32.xlu0 %v168, 56
      %v348 = vpop.permute.xlu0 %347
      %v350 = vsel %vm171, %v346, 0
      %v353 = vsel %vm235, %v348, 0
      %355 = vmatprep.subr.bf16.mxu0 0
      %356 = vmatpush1.bf16.msra.mxu0 %v353
      %357 = vmatprep.subr.bf16.mxu0 0
      %358 = vmatpush1.bf16.msra.mxu0 0
      %359 = vmatprep.subr.bf16.mxu0 0
      %360 = vmatpush1.bf16.msra.mxu0 0
      %361 = vmatprep.subr.bf16.mxu0 0
      %362 = vmatpush1.bf16.msra.mxu0 0
      %363 = vmatprep.subr.bf16.mxu0 0
      %364 = vmatpush1.bf16.msra.mxu0 0
      %365 = vmatprep.subr.bf16.mxu0 0
      %366 = vmatpush1.bf16.msra.mxu0 0
      %367 = vmatprep.subr.bf16.mxu0 0
      %368 = vmatpush1.bf16.msra.mxu0 0
      %369 = vmatprep.subr.bf16.mxu0 0
      %370 = vmatpush1.bf16.msra.mxu0 0
      %371 = vmatprep.subr.bf16.mxu0 0
      %372 = vmatpush1.bf16.msra.mxu0 0
      %373 = vmatprep.subr.bf16.mxu0 0
      %374 = vmatpush1.bf16.msra.mxu0 0
      %375 = vmatprep.subr.bf16.mxu0 0
      %376 = vmatpush1.bf16.msra.mxu0 0
      %377 = vmatprep.subr.bf16.mxu0 0
      %378 = vmatpush1.bf16.msra.mxu0 0
      %379 = vmatprep.subr.bf16.mxu0 0
      %380 = vmatpush1.bf16.msra.mxu0 0
      %381 = vmatprep.subr.bf16.mxu0 0
      %382 = vmatpush1.bf16.msra.mxu0 0
      %383 = vmatprep.subr.bf16.mxu0 0
      %384 = vmatpush1.bf16.msra.mxu0 0
      %385 = vmatprep.subr.bf16.mxu0 0
      %386 = vmatpush1.bf16.msra.mxu0 0
      %387 = vmatprep.mubr.bf16.mxu0 0
      %388 = vmatmul.mubr.bf16.gmra.mrb[0].mxu0 %v350
      %v389 = vpop.f32.mrb[0].mxu0
      %v390 = vadd.f32 0.0, %v389
      %v391 = vpop.f32.mrb[0].mxu0
      %v392 = vpop.f32.mrb[0].mxu0
      %v393 = vpop.f32.mrb[0].mxu0
      %394 = vdwg.mxu0
      %v395 = vpack.c.bf16 %v390, %v390
      %v397 = vunpack.c.l.b16 %v395
      %v398 = vpack.c.b16 %v397, %v397
      %399 = vrot.lane.b32.xlu0 %v398, 8
      %v400 = vpop.permute.xlu0 %399
      %vm402 = vcmask 126016
      %403 = vst.msk [vmem:[%s152] sm:$0xf] %vm402, %v400
      %404 = vrot.lane.b32.xlu0 %v284, 112
      %v405 = vpop.permute.xlu0 %404
      %406 = vrot.lane.b32.xlu0 %v168, 80
      %v407 = vpop.permute.xlu0 %406
      %v409 = vsel %vm171, %v405, 0
      %v412 = vsel %vm171, %v407, 0
      %414 = vmatprep.subr.bf16.mxu0 0
      %415 = vmatpush1.bf16.xpose.msra.mxu0 %v412
      %416 = vmatprep.subr.bf16.mxu0 0
      %417 = vmatpush1.bf16.xpose.msra.mxu0 0
      %418 = vmatprep.subr.bf16.mxu0 0
      %419 = vmatpush1.bf16.xpose.msra.mxu0 0
      %420 = vmatprep.subr.bf16.mxu0 0
      %421 = vmatpush1.bf16.xpose.msra.mxu0 0
      %422 = vmatprep.subr.bf16.mxu0 0
      %423 = vmatpush1.bf16.xpose.msra.mxu0 0
      %424 = vmatprep.subr.bf16.mxu0 0
      %425 = vmatpush1.bf16.xpose.msra.mxu0 0
      %426 = vmatprep.subr.bf16.mxu0 0
      %427 = vmatpush1.bf16.xpose.msra.mxu0 0
      %428 = vmatprep.subr.bf16.mxu0 0
      %429 = vmatpush1.bf16.xpose.msra.mxu0 0
      %430 = vmatprep.subr.bf16.mxu0 0
      %431 = vmatpush1.bf16.xpose.msra.mxu0 0
      %432 = vmatprep.subr.bf16.mxu0 0
      %433 = vmatpush1.bf16.xpose.msra.mxu0 0
      %434 = vmatprep.subr.bf16.mxu0 0
      %435 = vmatpush1.bf16.xpose.msra.mxu0 0
      %436 = vmatprep.subr.bf16.mxu0 0
      %437 = vmatpush1.bf16.xpose.msra.mxu0 0
      %438 = vmatprep.subr.bf16.mxu0 0
      %439 = vmatpush1.bf16.xpose.msra.mxu0 0
      %440 = vmatprep.subr.bf16.mxu0 0
      %441 = vmatpush1.bf16.xpose.msra.mxu0 0
      %442 = vmatprep.subr.bf16.mxu0 0
      %443 = vmatpush1.bf16.xpose.msra.mxu0 0
      %444 = vmatprep.subr.bf16.mxu0 0
      %445 = vmatpush1.bf16.xpose.msra.mxu0 0
      %446 = vmatprep.mubr.bf16.mxu0 0
      %447 = vmatmul.mubr.bf16.gmra.mrb[0].mxu0 %v409
      %v448 = vpop.f32.mrb[0].mxu0
      %v449 = vadd.f32 %v164, %v448
      %v450 = vpop.f32.mrb[0].mxu0
      %v451 = vpop.f32.mrb[0].mxu0
      %v452 = vpop.f32.mrb[0].mxu0
      %453 = vdwg.mxu0
      %v454 = vsel %vm171, %v449, -inf
      %455 = vmax.xlane.f32.xlu0 %v454
      %v456 = vpop.xlane.xlu0 %455
      %v457 = vsub.f32 %v449, %v456
      %v458 = vmul.f32 %v457, 1.442695
      %v459 = vpow.pop %v458
      %v460 = vsel %vm171, %v459, 0.0
      %461 = vadd.xlane.f32.xlu0 %v460
      %v462 = vpop.xlane.xlu0 %461
      %v463 = vrcp.pop %v462
      %v464 = vmul.f32 %v459, %v463
      %v465 = vpack.c.bf16 %v464, %v464
      %466 = vrot.lane.b32.xlu0 %v168, 48
      %v467 = vpop.permute.xlu0 %466
      %v469 = vsel %vm171, %v465, 0
      %v472 = vsel %vm235, %v467, 0
      %474 = vmatprep.subr.bf16.mxu0 0
      %475 = vmatpush1.bf16.msra.mxu0 %v472
      %476 = vmatprep.subr.bf16.mxu0 0
      %477 = vmatpush1.bf16.msra.mxu0 0
      %478 = vmatprep.subr.bf16.mxu0 0
      %479 = vmatpush1.bf16.msra.mxu0 0
      %480 = vmatprep.subr.bf16.mxu0 0
      %481 = vmatpush1.bf16.msra.mxu0 0
      %482 = vmatprep.subr.bf16.mxu0 0
      %483 = vmatpush1.bf16.msra.mxu0 0
      %484 = vmatprep.subr.bf16.mxu0 0
      %485 = vmatpush1.bf16.msra.mxu0 0
      %486 = vmatprep.subr.bf16.mxu0 0
      %487 = vmatpush1.bf16.msra.mxu0 0
      %488 = vmatprep.subr.bf16.mxu0 0
      %489 = vmatpush1.bf16.msra.mxu0 0
      %490 = vmatprep.subr.bf16.mxu0 0
      %491 = vmatpush1.bf16.msra.mxu0 0
      %492 = vmatprep.subr.bf16.mxu0 0
      %493 = vmatpush1.bf16.msra.mxu0 0
      %494 = vmatprep.subr.bf16.mxu0 0
      %495 = vmatpush1.bf16.msra.mxu0 0
      %496 = vmatprep.subr.bf16.mxu0 0
      %497 = vmatpush1.bf16.msra.mxu0 0
      %498 = vmatprep.subr.bf16.mxu0 0
      %499 = vmatpush1.bf16.msra.mxu0 0
      %500 = vmatprep.subr.bf16.mxu0 0
      %501 = vmatpush1.bf16.msra.mxu0 0
      %502 = vmatprep.subr.bf16.mxu0 0
      %503 = vmatpush1.bf16.msra.mxu0 0
      %504 = vmatprep.subr.bf16.mxu0 0
      %505 = vmatpush1.bf16.msra.mxu0 0
      %506 = vmatprep.mubr.bf16.mxu0 0
      %507 = vmatmul.mubr.bf16.gmra.mrb[0].mxu0 %v469
      %v508 = vpop.f32.mrb[0].mxu0
      %v509 = vadd.f32 0.0, %v508
      %v510 = vpop.f32.mrb[0].mxu0
      %v511 = vpop.f32.mrb[0].mxu0
      %v512 = vpop.f32.mrb[0].mxu0
      %513 = vdwg.mxu0
      %v514 = vpack.c.bf16 %v509, %v509
      %v516 = vunpack.c.l.b16 %v514
      %v517 = vpack.c.b16 %v516, %v516
      %518 = vrot.lane.b32.xlu0 %v517, 16
      %v519 = vpop.permute.xlu0 %518
      %vm521 = vcmask 191616
      %522 = vst.msk [vmem:[%s152] sm:$0xf] %vm521, %v519
      %523 = vrot.lane.b32.xlu0 %v284, 104
      %v524 = vpop.permute.xlu0 %523
      %525 = vrot.lane.b32.xlu0 %v168, 72
      %v526 = vpop.permute.xlu0 %525
      %v528 = vsel %vm171, %v524, 0
      %v531 = vsel %vm171, %v526, 0
      %533 = vmatprep.subr.bf16.mxu0 0
      %534 = vmatpush1.bf16.xpose.msra.mxu0 %v531
      %535 = vmatprep.subr.bf16.mxu0 0
      %536 = vmatpush1.bf16.xpose.msra.mxu0 0
      %537 = vmatprep.subr.bf16.mxu0 0
      %538 = vmatpush1.bf16.xpose.msra.mxu0 0
      %539 = vmatprep.subr.bf16.mxu0 0
      %540 = vmatpush1.bf16.xpose.msra.mxu0 0
      %541 = vmatprep.subr.bf16.mxu0 0
      %542 = vmatpush1.bf16.xpose.msra.mxu0 0
      %543 = vmatprep.subr.bf16.mxu0 0
      %544 = vmatpush1.bf16.xpose.msra.mxu0 0
      %545 = vmatprep.subr.bf16.mxu0 0
      %546 = vmatpush1.bf16.xpose.msra.mxu0 0
      %547 = vmatprep.subr.bf16.mxu0 0
      %548 = vmatpush1.bf16.xpose.msra.mxu0 0
      %549 = vmatprep.subr.bf16.mxu0 0
      %550 = vmatpush1.bf16.xpose.msra.mxu0 0
      %551 = vmatprep.subr.bf16.mxu0 0
      %552 = vmatpush1.bf16.xpose.msra.mxu0 0
      %553 = vmatprep.subr.bf16.mxu0 0
      %554 = vmatpush1.bf16.xpose.msra.mxu0 0
      %555 = vmatprep.subr.bf16.mxu0 0
      %556 = vmatpush1.bf16.xpose.msra.mxu0 0
      %557 = vmatprep.subr.bf16.mxu0 0
      %558 = vmatpush1.bf16.xpose.msra.mxu0 0
      %559 = vmatprep.subr.bf16.mxu0 0
      %560 = vmatpush1.bf16.xpose.msra.mxu0 0
      %561 = vmatprep.subr.bf16.mxu0 0
      %562 = vmatpush1.bf16.xpose.msra.mxu0 0
      %563 = vmatprep.subr.bf16.mxu0 0
      %564 = vmatpush1.bf16.xpose.msra.mxu0 0
      %565 = vmatprep.mubr.bf16.mxu0 0
      %566 = vmatmul.mubr.bf16.gmra.mrb[0].mxu0 %v528
      %v567 = vpop.f32.mrb[0].mxu0
      %v568 = vadd.f32 %v164, %v567
      %v569 = vpop.f32.mrb[0].mxu0
      %v570 = vpop.f32.mrb[0].mxu0
      %v571 = vpop.f32.mrb[0].mxu0
      %572 = vdwg.mxu0
      %v573 = vsel %vm171, %v568, -inf
      %574 = vmax.xlane.f32.xlu0 %v573
      %v575 = vpop.xlane.xlu0 %574
      %v576 = vsub.f32 %v568, %v575
      %v577 = vmul.f32 %v576, 1.442695
      %v578 = vpow.pop %v577
      %v579 = vsel %vm171, %v578, 0.0
      %580 = vadd.xlane.f32.xlu0 %v579
      %v581 = vpop.xlane.xlu0 %580
      %v582 = vrcp.pop %v581
      %v583 = vmul.f32 %v578, %v582
      %v584 = vpack.c.bf16 %v583, %v583
      %585 = vrot.lane.b32.xlu0 %v168, 40
      %v586 = vpop.permute.xlu0 %585
      %v588 = vsel %vm171, %v584, 0
      %v591 = vsel %vm235, %v586, 0
      %593 = vmatprep.subr.bf16.mxu0 0
      %594 = vmatpush1.bf16.msra.mxu0 %v591
      %595 = vmatprep.subr.bf16.mxu0 0
      %596 = vmatpush1.bf16.msra.mxu0 0
      %597 = vmatprep.subr.bf16.mxu0 0
      %598 = vmatpush1.bf16.msra.mxu0 0
      %599 = vmatprep.subr.bf16.mxu0 0
      %600 = vmatpush1.bf16.msra.mxu0 0
      %601 = vmatprep.subr.bf16.mxu0 0
      %602 = vmatpush1.bf16.msra.mxu0 0
      %603 = vmatprep.subr.bf16.mxu0 0
      %604 = vmatpush1.bf16.msra.mxu0 0
      %605 = vmatprep.subr.bf16.mxu0 0
      %606 = vmatpush1.bf16.msra.mxu0 0
      %607 = vmatprep.subr.bf16.mxu0 0
      %608 = vmatpush1.bf16.msra.mxu0 0
      %609 = vmatprep.subr.bf16.mxu0 0
      %610 = vmatpush1.bf16.msra.mxu0 0
      %611 = vmatprep.subr.bf16.mxu0 0
      %612 = vmatpush1.bf16.msra.mxu0 0
      %613 = vmatprep.subr.bf16.mxu0 0
      %614 = vmatpush1.bf16.msra.mxu0 0
      %615 = vmatprep.subr.bf16.mxu0 0
      %616 = vmatpush1.bf16.msra.mxu0 0
      %617 = vmatprep.subr.bf16.mxu0 0
      %618 = vmatpush1.bf16.msra.mxu0 0
      %619 = vmatprep.subr.bf16.mxu0 0
      %620 = vmatpush1.bf16.msra.mxu0 0
      %621 = vmatprep.subr.bf16.mxu0 0
      %622 = vmatpush1.bf16.msra.mxu0 0
      %623 = vmatprep.subr.bf16.mxu0 0
      %624 = vmatpush1.bf16.msra.mxu0 0
      %625 = vmatprep.mubr.bf16.mxu0 0
      %626 = vmatmul.mubr.bf16.gmra.mrb[0].mxu0 %v588
      %v627 = vpop.f32.mrb[0].mxu0
      %v628 = vadd.f32 0.0, %v627
      %v629 = vpop.f32.mrb[0].mxu0
      %v630 = vpop.f32.mrb[0].mxu0
      %v631 = vpop.f32.mrb[0].mxu0
      %632 = vdwg.mxu0
      %v633 = vpack.c.bf16 %v628, %v628
      %v635 = vunpack.c.l.b16 %v633
      %v636 = vpack.c.b16 %v635, %v635
      %637 = vrot.lane.b32.xlu0 %v636, 24
      %v638 = vpop.permute.xlu0 %637
      %vm640 = vcmask 257216
      %641 = vst.msk [vmem:[%s152] sm:$0xf] %vm640, %v638
      %p642 = scmp.lt.s32.totalorder %s13, 1
      %s643 = scalar_select %p642, %s13, 1
      %s644 = smul.addr %s643, 4
      %s645 = scalar_lea.vmem %s2, %s644
      // Predicated region
      $region29: #{_lambda_.21} parent=27 // pred_check
        %p646 = pneg %p83
      $region30: #{_lambda_.21} parent=27 // pred_check_branch
        %648 = sbr.rel (%p646) target = $region32
      $region31: #{_lambda_.21} parent=27 // pred_region
        _
      $region32: #{_lambda_.21} parent=27 // pred_fallthru
        _
    $region28: #{_lambda_.21} parent=5 // pred_fallthru
      _
    %p649 = scmp.le.s32.totalorder 2, %s8
    // Predicated region
    $region33: #{_lambda_.21} parent=5 // pred_check
      %p650 = pneg %p649
    $region34: #{_lambda_.21} parent=5 // pred_check_branch
      %652 = sbr.rel (%p650) target = $region36
    $region35: #{_lambda_.21} parent=5 // pred_region
      %s653 = ssub.s32 %s8, 2
      // Predicated region
      $region37: #{_lambda_.21} parent=35 // pred_check
        %p654 = pneg %p89
      $region38: #{_lambda_.21} parent=35 // pred_check_branch
        %656 = sbr.rel (%p654) target = $region40
      $region39: #{_lambda_.21} parent=35 // pred_region
        %p657 = scmp.lt.s32.totalorder %s14, 1
        %s658 = scalar_select %p657, %s14, 1
        %s659 = smul.addr %s658, 4
        %s660 = scalar_lea.vmem %s2, %s659
      $region40: #{_lambda_.21} parent=35 // pred_fallthru
        _
    $region36: #{_lambda_.21} parent=5 // pred_fallthru
      _
  $region6: #{_lambda_.21} parent=0 // loop_footer
    %s12 = sadd.s32 1, %s8
  $region7: #{_lambda_.21} parent=0 // loop_footer_branch
    %7 = sbr.rel target = $region3
  $region8: #{_lambda_.21} parent=0 // loop_exit
    _

// kernel: _lambda_.23
$region0: #{_lambda_.23}
  #allocation0 [shape = 'u32[]', space=smem, size = 0x4, offset = 0x4, fixed_abs, tag = 'smem constant byte address 0x4 - core index']
  #allocation1 [shape = 'u32[144,128]{1,0:T(1,128)}', space=vmem, size = 0x12000, scoped, tag = 'internal scratch']
  %s0 = inlined_call_operand.vmem [shape: f32[16,32], index: 0, kind: input, shape index: {}]
  %s1 = inlined_call_operand.vmem [shape: f32[16,32], index: 1, kind: input, shape index: {}]
  %s2 = inlined_call_operand.vmem [shape: f32[1,32], index: 2, kind: input, shape index: {}]
  %s3 = inlined_call_operand.vmem [shape: f32[1,32], index: 3, kind: input, shape index: {}]
  %s4 = inlined_call_operand.vmem [shape: f32[16,32], index: 4, kind: output, shape index: {}]
  %s5 = sld [smem:[#allocation0]]
  $region26: #{_lambda_.23} parent=0
    _
  %s7 = ssub.s32 1, %s5
  %s8 = scalar_select 0, %s7, %s5
  // Predicated region
  $region2: #{_lambda_.23} parent=0 // pred_check
    _
  $region3: #{_lambda_.23} parent=0 // pred_check_branch
    %10 = sbr.rel (0) target = $region5
  $region4: #{_lambda_.23} parent=0 // pred_region
    _
  $region5: #{_lambda_.23} parent=0 // pred_fallthru
    _
  // Predicated region
  $region6: #{_lambda_.23} parent=0 // pred_check
    _
  $region7: #{_lambda_.23} parent=0 // pred_check_branch
    %12 = sbr.rel (0) target = $region9
  $region8: #{_lambda_.23} parent=0 // pred_region
    _
  $region9: #{_lambda_.23} parent=0 // pred_fallthru
    _
  // Predicated region
  $region10: #{_lambda_.23} parent=0 // pred_check
    _
  $region11: #{_lambda_.23} parent=0 // pred_check_branch
    %14 = sbr.rel (0) target = $region13
  $region12: #{_lambda_.23} parent=0 // pred_region
    _
  $region13: #{_lambda_.23} parent=0 // pred_fallthru
    _
  // Predicated region
  $region14: #{_lambda_.23} parent=0 // pred_check
    _
  $region15: #{_lambda_.23} parent=0 // pred_check_branch
    %16 = sbr.rel (0) target = $region17
  $region16: #{_lambda_.23} parent=0 // pred_region
    _
  $region17: #{_lambda_.23} parent=0 // pred_fallthru
    _
  %v17 = vld [vmem:[%s0] sm:$0xff]
  %v18 = vld [vmem:[%s0 + $0x8] sm:$0xff]
  %v19 = vld [vmem:[%s1] sm:$0xff]
  %v20 = vld [vmem:[%s1 + $0x8] sm:$0xff]
  %v21 = vadd.f32 %v17, %v19
  %v22 = vadd.f32 %v18, %v20
  %vm23 = vcmask 261120
  %v24 = vsel %vm23, %v21, 0.0
  %25 = vadd.xlane.f32.xlu0 %v24
  %v26 = vpop.xlane.xlu0 %25
  %v27 = vsel %vm23, %v22, 0.0
  %28 = vadd.xlane.f32.xlu0 %v27
  %v29 = vpop.xlane.xlu0 %28
  %v30 = vrcp.pop 32.0
  %v31 = vmul.f32 %v26, %v30
  %v32 = vmul.f32 %v29, %v30
  %v33 = vsub.f32 %v21, %v31
  %v34 = vsub.f32 %v22, %v32
  %v35 = vmul.f32 %v33, %v33
  %v36 = vmul.f32 %v34, %v34
  %v37 = vsel %vm23, %v35, 0.0
  %38 = vadd.xlane.f32.xlu0 %v37
  %v39 = vpop.xlane.xlu0 %38
  %v40 = vsel %vm23, %v36, 0.0
  %41 = vadd.xlane.f32.xlu0 %v40
  %v42 = vpop.xlane.xlu0 %41
  %v43 = vmul.f32 %v39, %v30
  %v44 = vmul.f32 %v42, %v30
  %v45 = vadd.f32 %v43, 1e-12
  %v46 = vadd.f32 %v44, 1e-12
  %v47 = vrsqrt.pop %v45
  %v48 = vrsqrt.pop %v46
  %v49 = vmul.f32 %v33, %v47
  %v50 = vmul.f32 %v34, %v48
  %v51 = vld [vmem:[%s2] sm:$0x1]
  %v53 = vlaneseq
  %v54 = vshrl.u32 %v53, 7
  %v55 = vsub.s32 0, %v54
  %v56 = vrot.slane %v51, %v55
  %v58 = vmul.f32 %v49, %v56
  %v59 = vmul.f32 %v50, %v56
  %v60 = vld [vmem:[%s3] sm:$0x1]
  %v62 = vlaneseq
  %v63 = vshrl.u32 %v62, 7
  %v64 = vsub.s32 0, %v63
  %v65 = vrot.slane %v60, %v64
  %v67 = vadd.f32 %v58, %v65
  %v68 = vadd.f32 %v59, %v65
  %69 = vst.msk [vmem:[%s4] sm:$0xff] %vm23, %v67
  %70 = vst.msk [vmem:[%s4 + $0x8] sm:$0xff] %vm23, %v68
  // Predicated region
  $region18: #{_lambda_.23} parent=0 // pred_check
    _
  $region19: #{_lambda_.23} parent=0 // pred_check_branch
    %72 = sbr.rel (0) target = $region21
  $region20: #{_lambda_.23} parent=0 // pred_region
    _
  $region21: #{_lambda_.23} parent=0 // pred_fallthru
    _
  // Predicated region
  $region22: #{_lambda_.23} parent=0 // pred_check
    _
  $region23: #{_lambda_.23} parent=0 // pred_check_branch
    %74 = sbr.rel (0) target = $region25
  $region24: #{_lambda_.23} parent=0 // pred_region
    _
  $region25: #{_lambda_.23} parent=0 // pred_fallthru
    _

// kernel: _lambda_.24
$region0: #{_lambda_.24}
  #allocation0 [shape = 'u32[]', space=smem, size = 0x4, offset = 0x4, fixed_abs, tag = 'smem constant byte address 0x4 - core index']
  #allocation1 [shape = 'u32[144,128]{1,0:T(1,128)}', space=vmem, size = 0x12000, scoped, tag = 'internal scratch']
  #allocation2 [shape = 'f32[16,64]{1,0:T(8,128)}', space=vmem, size = 0x2000, scoped, tag = 'scratch operand']
  %s0 = inlined_call_operand.vmem [shape: bf16[16,32], index: 0, kind: input, shape index: {}]
  %s1 = inlined_call_operand.vmem [shape: bf16[32,64], index: 1, kind: input, shape index: {}]
  %s2 = inlined_call_operand.vmem [shape: f32[1,64], index: 2, kind: input, shape index: {}]
  %s3 = inlined_call_operand.vmem [shape: bf16[16,64], index: 3, kind: output, shape index: {}]
  %s4 = sld [smem:[#allocation0]]
  $region30: #{_lambda_.24} parent=0
    _
  %s6 = ssub.s32 1, %s4
  %s7 = scalar_select 0, %s6, %s4
  // Predicated region
  $region2: #{_lambda_.24} parent=0 // pred_check
    _
  $region3: #{_lambda_.24} parent=0 // pred_check_branch
    %9 = sbr.rel (0) target = $region5
  $region4: #{_lambda_.24} parent=0 // pred_region
    _
  $region5: #{_lambda_.24} parent=0 // pred_fallthru
    _
  // Predicated region
  $region6: #{_lambda_.24} parent=0 // pred_check
    _
  $region7: #{_lambda_.24} parent=0 // pred_check_branch
    %11 = sbr.rel (0) target = $region9
  $region8: #{_lambda_.24} parent=0 // pred_region
    _
  $region9: #{_lambda_.24} parent=0 // pred_fallthru
    _
  // Predicated region
  $region10: #{_lambda_.24} parent=0 // pred_check
    _
  $region11: #{_lambda_.24} parent=0 // pred_check_branch
    %13 = sbr.rel (0) target = $region13
  $region12: #{_lambda_.24} parent=0 // pred_region
    _
  $region13: #{_lambda_.24} parent=0 // pred_fallthru
    _
  %p15 = scmp.eq.s32.totalorder 0, 0
  // Predicated region
  $region14: #{_lambda_.24} parent=0 // pred_check
    %p16 = pneg %p15
  $region15: #{_lambda_.24} parent=0 // pred_check_branch
    %18 = sbr.rel (%p16) target = $region17
  $region16: #{_lambda_.24} parent=0 // pred_region
    %vm19 = vcmask 523264
    %20 = vst.msk [vmem:[#allocation2] sm:$0xff] %vm19, 0.0
    %21 = vst.msk [vmem:[#allocation2 + $0x8] sm:$0xff] %vm19, 0.0
  $region17: #{_lambda_.24} parent=0 // pred_fallthru
    _
  %v22 = vld [vmem:[#allocation2] sm:$0xff]
  %v23 = vld [vmem:[#allocation2 + $0x8] sm:$0xff]
  %v24 = vld [vmem:[%s0] sm:$0xf]
  %v25 = vld [vmem:[%s0 + $0x4] sm:$0xf]
  %v26 = vld [vmem:[%s1] sm:$0xf]
  %v27 = vld [vmem:[%s1 + $0x4] sm:$0xf]
  %v28 = vld [vmem:[%s1 + $0x8] sm:$0xf]
  %v29 = vld [vmem:[%s1 + $0xc] sm:$0xf]
  %v32 = vunpack.c.l.b16 %v24
  %v33 = vunpack.c.l.b16 %v25
  %v34 = vpack.c.b16 %v33, %v32
  %v39 = vunpack.c.l.b16 %v26
  %v40 = vunpack.c.l.b16 %v27
  %v41 = vunpack.c.l.b16 %v28
  %v42 = vunpack.c.l.b16 %v29
  %v43 = vpack.c.b16 %v40, %v39
  %v44 = vpack.c.b16 %v42, %v41
  %vm47 = vcmask 261120
  %v49 = vsel %vm47, %v34, 0
  %51 = vmatprep.subr.bf16.mxu0 0
  %52 = vmatpush1.bf16.msra.mxu0 %v43
  %53 = vmatprep.subr.bf16.mxu0 0
  %54 = vmatpush1.bf16.msra.mxu0 %v44
  %55 = vmatprep.subr.bf16.mxu0 0
  %56 = vmatpush1.bf16.msra.mxu0 0
  %57 = vmatprep.subr.bf16.mxu0 0
  %58 = vmatpush1.bf16.msra.mxu0 0
  %59 = vmatprep.subr.bf16.mxu0 0
  %60 = vmatpush1.bf16.msra.mxu0 0
  %61 = vmatprep.subr.bf16.mxu0 0
  %62 = vmatpush1.bf16.msra.mxu0 0
  %63 = vmatprep.subr.bf16.mxu0 0
  %64 = vmatpush1.bf16.msra.mxu0 0
  %65 = vmatprep.subr.bf16.mxu0 0
  %66 = vmatpush1.bf16.msra.mxu0 0
  %67 = vmatprep.subr.bf16.mxu0 0
  %68 = vmatpush1.bf16.msra.mxu0 0
  %69 = vmatprep.subr.bf16.mxu0 0
  %70 = vmatpush1.bf16.msra.mxu0 0
  %71 = vmatprep.subr.bf16.mxu0 0
  %72 = vmatpush1.bf16.msra.mxu0 0
  %73 = vmatprep.subr.bf16.mxu0 0
  %74 = vmatpush1.bf16.msra.mxu0 0
  %75 = vmatprep.subr.bf16.mxu0 0
  %76 = vmatpush1.bf16.msra.mxu0 0
  %77 = vmatprep.subr.bf16.mxu0 0
  %78 = vmatpush1.bf16.msra.mxu0 0
  %79 = vmatprep.subr.bf16.mxu0 0
  %80 = vmatpush1.bf16.msra.mxu0 0
  %81 = vmatprep.subr.bf16.mxu0 0
  %82 = vmatpush1.bf16.msra.mxu0 0
  %83 = vmatprep.mubr.bf16.mxu0 0
  %84 = vmatmul.mubr.bf16.gmra.mrb[0].mxu0 %v49
  %v85 = vpop.f32.mrb[0].mxu0
  %v86 = vadd.f32 0.0, %v85
  %v87 = vpop.f32.mrb[0].mxu0
  %v88 = vpop.f32.mrb[0].mxu0
  %v89 = vadd.f32 0.0, %v88
  %v90 = vpop.f32.mrb[0].mxu0
  %91 = vdwg.mxu0
  %v92 = vadd.f32 %v22, %v86
  %v93 = vadd.f32 %v23, %v89
  %vm94 = vcmask 523264
  %95 = vst.msk [vmem:[#allocation2] sm:$0xff] %vm94, %v92
  %96 = vst.msk [vmem:[#allocation2 + $0x8] sm:$0xff] %vm94, %v93
  // Predicated region
  $region18: #{_lambda_.24} parent=0 // pred_check
    %p97 = pneg %p15
  $region19: #{_lambda_.24} parent=0 // pred_check_branch
    %99 = sbr.rel (%p97) target = $region21
  $region20: #{_lambda_.24} parent=0 // pred_region
    %v100 = vld [vmem:[#allocation2] sm:$0xff]
    %v101 = vld [vmem:[#allocation2 + $0x8] sm:$0xff]
    %v102 = vld [vmem:[%s2] sm:$0x1]
    %v104 = vlaneseq
    %v105 = vshrl.u32 %v104, 7
    %v106 = vsub.s32 0, %v105
    %v107 = vrot.slane %v102, %v106
    %v109 = vadd.f32 %v100, %v107
    %v110 = vadd.f32 %v101, %v107
    %v111 = vmul.f32 %v109, %v109
    %v112 = vmul.f32 %v110, %v110
    %v113 = vmul.f32 %v109, %v111
    %v114 = vmul.f32 %v110, %v112
    %v115 = vmul.f32 %v113, 0.044715
    %v116 = vmul.f32 %v114, 0.044715
    %v117 = vadd.f32 %v109, %v115
    %v118 = vadd.f32 %v110, %v116
    %v119 = vmul.f32 %v117, 0.7978846
    %v120 = vmul.f32 %v118, 0.7978846
    %v121 = vtanh.pop %v119
    %v122 = vtanh.pop %v120
    %v123 = vadd.f32 %v121, 1.0
    %v124 = vadd.f32 %v122, 1.0
    %v125 = vmul.f32 %v123, 0.5
    %v126 = vmul.f32 %v124, 0.5
    %v127 = vmul.f32 %v109, %v125
    %v128 = vmul.f32 %v110, %v126
    %v129 = vpack.c.bf16 %v128, %v127
    %v131 = vunpack.c.l.b16 %v129
    %v132 = vunpack.c.h.b16 %v129
    %v133 = vpack.c.b16 %v131, %v131
    %v134 = vpack.c.b16 %v132, %v132
    %vm137 = vcmask 519168
    %138 = vst.msk [vmem:[%s3] sm:$0xf] %vm137, %v133
    %139 = vst.msk [vmem:[%s3 + $0x4] sm:$0xf] %vm137, %v134
  $region21: #{_lambda_.24} parent=0 // pred_fallthru
    _
  // Predicated region
  $region22: #{_lambda_.24} parent=0 // pred_check
    _
  $region23: #{_lambda_.24} parent=0 // pred_check_branch
    %141 = sbr.rel (0) target = $region25
  $region24: #{_lambda_.24} parent=0 // pred_region
    _
  $region25: #{_lambda_.24} parent=0 // pred_fallthru
    _
  // Predicated region
  $region26: #{_lambda_.24} parent=0 // pred_check
    _
  $region27: #{_lambda_.24} parent=0 // pred_check_branch
    %143 = sbr.rel (0) target = $region29
  $region28: #{_lambda_.24} parent=0 // pred_region
    _
  $region29: #{_lambda_.24} parent=0 // pred_fallthru
    _

// kernel: _lambda_.25
$region0: #{_lambda_.25}
  #allocation0 [shape = 'u32[]', space=smem, size = 0x4, offset = 0x4, fixed_abs, tag = 'smem constant byte address 0x4 - core index']
  #allocation1 [shape = 'u32[144,128]{1,0:T(1,128)}', space=vmem, size = 0x12000, scoped, tag = 'internal scratch']
  #allocation2 [shape = 'f32[16,32]{1,0:T(8,128)}', space=vmem, size = 0x2000, scoped, tag = 'scratch operand']
  %s0 = inlined_call_operand.vmem [shape: bf16[16,64], index: 0, kind: input, shape index: {}]
  %s1 = inlined_call_operand.vmem [shape: bf16[64,32], index: 1, kind: input, shape index: {}]
  %s2 = inlined_call_operand.vmem [shape: f32[1,32], index: 2, kind: input, shape index: {}]
  %s3 = inlined_call_operand.vmem [shape: f32[16,32], index: 3, kind: output, shape index: {}]
  %s4 = sld [smem:[#allocation0]]
  $region30: #{_lambda_.25} parent=0
    _
  %s6 = ssub.s32 1, %s4
  %s7 = scalar_select 0, %s6, %s4
  // Predicated region
  $region2: #{_lambda_.25} parent=0 // pred_check
    _
  $region3: #{_lambda_.25} parent=0 // pred_check_branch
    %9 = sbr.rel (0) target = $region5
  $region4: #{_lambda_.25} parent=0 // pred_region
    _
  $region5: #{_lambda_.25} parent=0 // pred_fallthru
    _
  // Predicated region
  $region6: #{_lambda_.25} parent=0 // pred_check
    _
  $region7: #{_lambda_.25} parent=0 // pred_check_branch
    %11 = sbr.rel (0) target = $region9
  $region8: #{_lambda_.25} parent=0 // pred_region
    _
  $region9: #{_lambda_.25} parent=0 // pred_fallthru
    _
  // Predicated region
  $region10: #{_lambda_.25} parent=0 // pred_check
    _
  $region11: #{_lambda_.25} parent=0 // pred_check_branch
    %13 = sbr.rel (0) target = $region13
  $region12: #{_lambda_.25} parent=0 // pred_region
    _
  $region13: #{_lambda_.25} parent=0 // pred_fallthru
    _
  %p15 = scmp.eq.s32.totalorder 0, 0
  // Predicated region
  $region14: #{_lambda_.25} parent=0 // pred_check
    %p16 = pneg %p15
  $region15: #{_lambda_.25} parent=0 // pred_check_branch
    %18 = sbr.rel (%p16) target = $region17
  $region16: #{_lambda_.25} parent=0 // pred_region
    %vm19 = vcmask 261120
    %20 = vst.msk [vmem:[#allocation2] sm:$0xff] %vm19, 0.0
    %21 = vst.msk [vmem:[#allocation2 + $0x8] sm:$0xff] %vm19, 0.0
  $region17: #{_lambda_.25} parent=0 // pred_fallthru
    _
  %v22 = vld [vmem:[#allocation2] sm:$0xff]
  %v23 = vld [vmem:[#allocation2 + $0x8] sm:$0xff]
  %v24 = vld [vmem:[%s0] sm:$0xf]
  %v25 = vld [vmem:[%s0 + $0x4] sm:$0xf]
  %v26 = vld [vmem:[%s1] sm:$0xf]
  %v27 = vld [vmem:[%s1 + $0x4] sm:$0xf]
  %v28 = vld [vmem:[%s1 + $0x8] sm:$0xf]
  %v29 = vld [vmem:[%s1 + $0xc] sm:$0xf]
  %v30 = vld [vmem:[%s1 + $0x10] sm:$0xf]
  %v31 = vld [vmem:[%s1 + $0x14] sm:$0xf]
  %v32 = vld [vmem:[%s1 + $0x18] sm:$0xf]
  %v33 = vld [vmem:[%s1 + $0x1c] sm:$0xf]
  %v36 = vunpack.c.l.b16 %v24
  %v37 = vunpack.c.l.b16 %v25
  %v38 = vpack.c.b16 %v37, %v36
  %v47 = vunpack.c.l.b16 %v26
  %v48 = vunpack.c.l.b16 %v27
  %v49 = vunpack.c.l.b16 %v28
  %v50 = vunpack.c.l.b16 %v29
  %v51 = vunpack.c.l.b16 %v30
  %v52 = vunpack.c.l.b16 %v31
  %v53 = vunpack.c.l.b16 %v32
  %v54 = vunpack.c.l.b16 %v33
  %v55 = vpack.c.b16 %v48, %v47
  %v56 = vpack.c.b16 %v50, %v49
  %v57 = vpack.c.b16 %v52, %v51
  %v58 = vpack.c.b16 %v54, %v53
  %vm63 = vcmask 523264
  %v65 = vsel %vm63, %v38, 0
  %67 = vmatprep.subr.bf16.mxu0 0
  %68 = vmatpush1.bf16.msra.mxu0 %v55
  %69 = vmatprep.subr.bf16.mxu0 0
  %70 = vmatpush1.bf16.msra.mxu0 %v56
  %71 = vmatprep.subr.bf16.mxu0 0
  %72 = vmatpush1.bf16.msra.mxu0 %v57
  %73 = vmatprep.subr.bf16.mxu0 0
  %74 = vmatpush1.bf16.msra.mxu0 %v58
  %75 = vmatprep.subr.bf16.mxu0 0
  %76 = vmatpush1.bf16.msra.mxu0 0
  %77 = vmatprep.subr.bf16.mxu0 0
  %78 = vmatpush1.bf16.msra.mxu0 0
  %79 = vmatprep.subr.bf16.mxu0 0
  %80 = vmatpush1.bf16.msra.mxu0 0
  %81 = vmatprep.subr.bf16.mxu0 0
  %82 = vmatpush1.bf16.msra.mxu0 0
  %83 = vmatprep.subr.bf16.mxu0 0
  %84 = vmatpush1.bf16.msra.mxu0 0
  %85 = vmatprep.subr.bf16.mxu0 0
  %86 = vmatpush1.bf16.msra.mxu0 0
  %87 = vmatprep.subr.bf16.mxu0 0
  %88 = vmatpush1.bf16.msra.mxu0 0
  %89 = vmatprep.subr.bf16.mxu0 0
  %90 = vmatpush1.bf16.msra.mxu0 0
  %91 = vmatprep.subr.bf16.mxu0 0
  %92 = vmatpush1.bf16.msra.mxu0 0
  %93 = vmatprep.subr.bf16.mxu0 0
  %94 = vmatpush1.bf16.msra.mxu0 0
  %95 = vmatprep.subr.bf16.mxu0 0
  %96 = vmatpush1.bf16.msra.mxu0 0
  %97 = vmatprep.subr.bf16.mxu0 0
  %98 = vmatpush1.bf16.msra.mxu0 0
  %99 = vmatprep.mubr.bf16.mxu0 0
  %100 = vmatmul.mubr.bf16.gmra.mrb[0].mxu0 %v65
  %v101 = vpop.f32.mrb[0].mxu0
  %v102 = vadd.f32 0.0, %v101
  %v103 = vpop.f32.mrb[0].mxu0
  %v104 = vpop.f32.mrb[0].mxu0
  %v105 = vadd.f32 0.0, %v104
  %v106 = vpop.f32.mrb[0].mxu0
  %107 = vdwg.mxu0
  %v108 = vadd.f32 %v22, %v102
  %v109 = vadd.f32 %v23, %v105
  %vm110 = vcmask 261120
  %111 = vst.msk [vmem:[#allocation2] sm:$0xff] %vm110, %v108
  %112 = vst.msk [vmem:[#allocation2 + $0x8] sm:$0xff] %vm110, %v109
  // Predicated region
  $region18: #{_lambda_.25} parent=0 // pred_check
    %p113 = pneg %p15
  $region19: #{_lambda_.25} parent=0 // pred_check_branch
    %115 = sbr.rel (%p113) target = $region21
  $region20: #{_lambda_.25} parent=0 // pred_region
    %v116 = vld [vmem:[#allocation2] sm:$0xff]
    %v117 = vld [vmem:[#allocation2 + $0x8] sm:$0xff]
    %v118 = vld [vmem:[%s2] sm:$0x1]
    %v120 = vlaneseq
    %v121 = vshrl.u32 %v120, 7
    %v122 = vsub.s32 0, %v121
    %v123 = vrot.slane %v118, %v122
    %v125 = vadd.f32 %v116, %v123
    %v126 = vadd.f32 %v117, %v123
    %127 = vst.msk [vmem:[%s3] sm:$0xff] %vm110, %v125
    %128 = vst.msk [vmem:[%s3 + $0x8] sm:$0xff] %vm110, %v126
  $region21: #{_lambda_.25} parent=0 // pred_fallthru
    _
  // Predicated region
  $region22: #{_lambda_.25} parent=0 // pred_check
    _
  $region23: #{_lambda_.25} parent=0 // pred_check_branch
    %130 = sbr.rel (0) target = $region25
  $region24: #{_lambda_.25} parent=0 // pred_region
    _
  $region25: #{_lambda_.25} parent=0 // pred_fallthru
    _
  // Predicated region
  $region26: #{_lambda_.25} parent=0 // pred_check
    _
  $region27: #{_lambda_.25} parent=0 // pred_check_branch
    %132 = sbr.rel (0) target = $region29
  $region28: #{_lambda_.25} parent=0 // pred_region
    _
  $region29: #{_lambda_.25} parent=0 // pred_fallthru
    _

// kernel: _lambda_.34
$region0: #{_lambda_.34}
  #allocation0 [shape = 'u32[]', space=smem, size = 0x4, offset = 0x4, fixed_abs, tag = 'smem constant byte address 0x4 - core index']
  #allocation1 [shape = 'u32[144,128]{1,0:T(1,128)}', space=vmem, size = 0x12000, scoped, tag = 'internal scratch']
  #allocation2 [shape = 'f32[16,256]{1,0:T(8,128)}', space=vmem, size = 0x4000, scoped, tag = 'scratch operand']
  %s0 = inlined_call_operand.vmem [shape: bf16[16,32], index: 0, kind: input, shape index: {}]
  %s1 = inlined_call_operand.vmem [shape: bf16[32,256], index: 1, kind: input, shape index: {}]
  %s2 = inlined_call_operand.vmem [shape: f32[1,256], index: 2, kind: input, shape index: {}]
  %s3 = inlined_call_operand.vmem [shape: bf16[16,256], index: 3, kind: output, shape index: {}]
  %s4 = sld [smem:[#allocation0]]
  $region30: #{_lambda_.34} parent=0
    _
  %s6 = ssub.s32 1, %s4
  %s7 = scalar_select 0, %s6, %s4
  // Predicated region
  $region2: #{_lambda_.34} parent=0 // pred_check
    _
  $region3: #{_lambda_.34} parent=0 // pred_check_branch
    %9 = sbr.rel (0) target = $region5
  $region4: #{_lambda_.34} parent=0 // pred_region
    _
  $region5: #{_lambda_.34} parent=0 // pred_fallthru
    _
  // Predicated region
  $region6: #{_lambda_.34} parent=0 // pred_check
    _
  $region7: #{_lambda_.34} parent=0 // pred_check_branch
    %11 = sbr.rel (0) target = $region9
  $region8: #{_lambda_.34} parent=0 // pred_region
    _
  $region9: #{_lambda_.34} parent=0 // pred_fallthru
    _
  // Predicated region
  $region10: #{_lambda_.34} parent=0 // pred_check
    _
  $region11: #{_lambda_.34} parent=0 // pred_check_branch
    %13 = sbr.rel (0) target = $region13
  $region12: #{_lambda_.34} parent=0 // pred_region
    _
  $region13: #{_lambda_.34} parent=0 // pred_fallthru
    _
  %p15 = scmp.eq.s32.totalorder 0, 0
  // Predicated region
  $region14: #{_lambda_.34} parent=0 // pred_check
    %p16 = pneg %p15
  $region15: #{_lambda_.34} parent=0 // pred_check_branch
    %18 = sbr.rel (%p16) target = $region17
  $region16: #{_lambda_.34} parent=0 // pred_region
    %19 = vst [vmem:[#allocation2] sm:$0xff] 0.0
    %20 = vst [vmem:[#allocation2 + $0x8] sm:$0xff] 0.0
    %21 = vst [vmem:[#allocation2 + $0x10] sm:$0xff] 0.0
    %22 = vst [vmem:[#allocation2 + $0x18] sm:$0xff] 0.0
  $region17: #{_lambda_.34} parent=0 // pred_fallthru
    _
  %v23 = vld [vmem:[#allocation2] sm:$0xff]
  %v24 = vld [vmem:[#allocation2 + $0x8] sm:$0xff]
  %v25 = vld [vmem:[#allocation2 + $0x10] sm:$0xff]
  %v26 = vld [vmem:[#allocation2 + $0x18] sm:$0xff]
  %v27 = vld [vmem:[%s0] sm:$0xf]
  %v28 = vld [vmem:[%s0 + $0x4] sm:$0xf]
  %v29 = vld [vmem:[%s1] sm:$0xff]
  %v30 = vld [vmem:[%s1 + $0x8] sm:$0xff]
  %v31 = vld [vmem:[%s1 + $0x10] sm:$0xff]
  %v32 = vld [vmem:[%s1 + $0x18] sm:$0xff]
  %v35 = vunpack.c.l.b16 %v27
  %v36 = vunpack.c.l.b16 %v28
  %v37 = vpack.c.b16 %v36, %v35
  %v42 = vunpack.c.l.b16 %v29
  %v43 = vunpack.c.h.b16 %v29
  %v44 = vunpack.c.l.b16 %v30
  %v45 = vunpack.c.h.b16 %v30
  %v46 = vunpack.c.l.b16 %v31
  %v47 = vunpack.c.h.b16 %v31
  %v48 = vunpack.c.l.b16 %v32
  %v49 = vunpack.c.h.b16 %v32
  %v50 = vpack.c.b16 %v44, %v42
  %v51 = vpack.c.b16 %v45, %v43
  %v52 = vpack.c.b16 %v48, %v46
  %v53 = vpack.c.b16 %v49, %v47
  %vm58 = vcmask 261120
  %v60 = vsel %vm58, %v37, 0
  %62 = vmatprep.subr.bf16.mxu0 %v51
  %63 = vmatpush1.bf16.msra.mxu0 %v50
  %64 = vmatprep.subr.bf16.mxu0 %v53
  %65 = vmatpush1.bf16.msra.mxu0 %v52
  %66 = vmatprep.subr.bf16.mxu0 0
  %67 = vmatpush1.bf16.msra.mxu0 0
  %68 = vmatprep.subr.bf16.mxu0 0
  %69 = vmatpush1.bf16.msra.mxu0 0
  %70 = vmatprep.subr.bf16.mxu0 0
  %71 = vmatpush1.bf16.msra.mxu0 0
  %72 = vmatprep.subr.bf16.mxu0 0
  %73 = vmatpush1.bf16.msra.mxu0 0
  %74 = vmatprep.subr.bf16.mxu0 0
  %75 = vmatpush1.bf16.msra.mxu0 0
  %76 = vmatprep.subr.bf16.mxu0 0
  %77 = vmatpush1.bf16.msra.mxu0 0
  %78 = vmatprep.subr.bf16.mxu0 0
  %79 = vmatpush1.bf16.msra.mxu0 0
  %80 = vmatprep.subr.bf16.mxu0 0
  %81 = vmatpush1.bf16.msra.mxu0 0
  %82 = vmatprep.subr.bf16.mxu0 0
  %83 = vmatpush1.bf16.msra.mxu0 0
  %84 = vmatprep.subr.bf16.mxu0 0
  %85 = vmatpush1.bf16.msra.mxu0 0
  %86 = vmatprep.subr.bf16.mxu0 0
  %87 = vmatpush1.bf16.msra.mxu0 0
  %88 = vmatprep.subr.bf16.mxu0 0
  %89 = vmatpush1.bf16.msra.mxu0 0
  %90 = vmatprep.subr.bf16.mxu0 0
  %91 = vmatpush1.bf16.msra.mxu0 0
  %92 = vmatprep.subr.bf16.mxu0 0
  %93 = vmatpush1.bf16.msra.mxu0 0
  %94 = vmatprep.mubr.bf16.mxu0 0
  %95 = vmatmul.mubr.bf16.gmra.mrb[0].mxu0 %v60
  %v96 = vpop.f32.mrb[0].mxu0
  %v97 = vadd.f32 0.0, %v96
  %v98 = vpop.f32.mrb[0].mxu0
  %v99 = vadd.f32 0.0, %v98
  %v100 = vpop.f32.mrb[0].mxu0
  %v101 = vadd.f32 0.0, %v100
  %v102 = vpop.f32.mrb[0].mxu0
  %v103 = vadd.f32 0.0, %v102
  %104 = vdwg.mxu0
  %v105 = vadd.f32 %v23, %v97
  %v106 = vadd.f32 %v24, %v99
  %v107 = vadd.f32 %v25, %v101
  %v108 = vadd.f32 %v26, %v103
  %109 = vst [vmem:[#allocation2] sm:$0xff] %v105
  %110 = vst [vmem:[#allocation2 + $0x8] sm:$0xff] %v106
  %111 = vst [vmem:[#allocation2 + $0x10] sm:$0xff] %v107
  %112 = vst [vmem:[#allocation2 + $0x18] sm:$0xff] %v108
  // Predicated region
  $region18: #{_lambda_.34} parent=0 // pred_check
    %p113 = pneg %p15
  $region19: #{_lambda_.34} parent=0 // pred_check_branch
    %115 = sbr.rel (%p113) target = $region21
  $region20: #{_lambda_.34} parent=0 // pred_region
    %v116 = vld [vmem:[#allocation2] sm:$0xff]
    %v117 = vld [vmem:[#allocation2 + $0x8] sm:$0xff]
    %v118 = vld [vmem:[#allocation2 + $0x10] sm:$0xff]
    %v119 = vld [vmem:[#allocation2 + $0x18] sm:$0xff]
    %v120 = vld [vmem:[%s2] sm:$0x3]
    %v122 = vlaneseq
    %v123 = vshrl.u32 %v122, 7
    %v124 = vsub.s32 0, %v123
    %v125 = vrot.slane %v120, %v124
    %v126 = vlaneseq
    %v127 = vshrl.u32 %v126, 7
    %v128 = vsub.s32 1, %v127
    %v129 = vrot.slane %v120, %v128
    %v132 = vadd.f32 %v116, %v125
    %v133 = vadd.f32 %v117, %v129
    %v134 = vadd.f32 %v118, %v125
    %v135 = vadd.f32 %v119, %v129
    %v136 = vpack.c.bf16 %v134, %v132
    %v137 = vpack.c.bf16 %v135, %v133
    %v140 = vunpack.c.l.b16 %v136
    %v141 = vunpack.c.l.b16 %v137
    %v142 = vunpack.c.h.b16 %v136
    %v143 = vunpack.c.h.b16 %v137
    %v144 = vpack.c.b16 %v141, %v140
    %v145 = vpack.c.b16 %v143, %v142
    %148 = vst [vmem:[%s3] sm:$0xff] %v144
    %149 = vst [vmem:[%s3 + $0x8] sm:$0xff] %v145
  $region21: #{_lambda_.34} parent=0 // pred_fallthru
    _
  // Predicated region
  $region22: #{_lambda_.34} parent=0 // pred_check
    _
  $region23: #{_lambda_.34} parent=0 // pred_check_branch
    %151 = sbr.rel (0) target = $region25
  $region24: #{_lambda_.34} parent=0 // pred_region
    _
  $region25: #{_lambda_.34} parent=0 // pred_fallthru
    _
  // Predicated region
  $region26: #{_lambda_.34} parent=0 // pred_check
    _
  $region27: #{_lambda_.34} parent=0 // pred_check_branch
    %153 = sbr.rel (0) target = $region29
  $region28: #{_lambda_.34} parent=0 // pred_region
    _
  $region29: #{_lambda_.34} parent=0 // pred_fallthru
    _

// kernel: _lambda_.36
$region0: #{_lambda_.36}
  #allocation0 [shape = 'u32[]', space=smem, size = 0x4, offset = 0x4, fixed_abs, tag = 'smem constant byte address 0x4 - core index']
  #allocation1 [shape = 'u32[144,128]{1,0:T(1,128)}', space=vmem, size = 0x12000, scoped, tag = 'internal scratch']
  #allocation2 [shape = 'f32[16,256]{1,0:T(8,128)}', space=vmem, size = 0x4000, scoped, tag = 'scratch operand']
  %s0 = inlined_call_operand.vmem [shape: bf16[16,64], index: 0, kind: input, shape index: {}]
  %s1 = inlined_call_operand.vmem [shape: bf16[64,256], index: 1, kind: input, shape index: {}]
  %s2 = inlined_call_operand.vmem [shape: f32[1,256], index: 2, kind: input, shape index: {}]
  %s3 = inlined_call_operand.vmem [shape: bf16[16,256], index: 3, kind: output, shape index: {}]
  %s4 = sld [smem:[#allocation0]]
  $region30: #{_lambda_.36} parent=0
    _
  %s6 = ssub.s32 1, %s4
  %s7 = scalar_select 0, %s6, %s4
  // Predicated region
  $region2: #{_lambda_.36} parent=0 // pred_check
    _
  $region3: #{_lambda_.36} parent=0 // pred_check_branch
    %9 = sbr.rel (0) target = $region5
  $region4: #{_lambda_.36} parent=0 // pred_region
    _
  $region5: #{_lambda_.36} parent=0 // pred_fallthru
    _
  // Predicated region
  $region6: #{_lambda_.36} parent=0 // pred_check
    _
  $region7: #{_lambda_.36} parent=0 // pred_check_branch
    %11 = sbr.rel (0) target = $region9
  $region8: #{_lambda_.36} parent=0 // pred_region
    _
  $region9: #{_lambda_.36} parent=0 // pred_fallthru
    _
  // Predicated region
  $region10: #{_lambda_.36} parent=0 // pred_check
    _
  $region11: #{_lambda_.36} parent=0 // pred_check_branch
    %13 = sbr.rel (0) target = $region13
  $region12: #{_lambda_.36} parent=0 // pred_region
    _
  $region13: #{_lambda_.36} parent=0 // pred_fallthru
    _
  %p15 = scmp.eq.s32.totalorder 0, 0
  // Predicated region
  $region14: #{_lambda_.36} parent=0 // pred_check
    %p16 = pneg %p15
  $region15: #{_lambda_.36} parent=0 // pred_check_branch
    %18 = sbr.rel (%p16) target = $region17
  $region16: #{_lambda_.36} parent=0 // pred_region
    %19 = vst [vmem:[#allocation2] sm:$0xff] 0.0
    %20 = vst [vmem:[#allocation2 + $0x8] sm:$0xff] 0.0
    %21 = vst [vmem:[#allocation2 + $0x10] sm:$0xff] 0.0
    %22 = vst [vmem:[#allocation2 + $0x18] sm:$0xff] 0.0
  $region17: #{_lambda_.36} parent=0 // pred_fallthru
    _
  %v23 = vld [vmem:[#allocation2] sm:$0xff]
  %v24 = vld [vmem:[#allocation2 + $0x8] sm:$0xff]
  %v25 = vld [vmem:[#allocation2 + $0x10] sm:$0xff]
  %v26 = vld [vmem:[#allocation2 + $0x18] sm:$0xff]
  %v27 = vld [vmem:[%s0] sm:$0xf]
  %v28 = vld [vmem:[%s0 + $0x4] sm:$0xf]
  %v29 = vld [vmem:[%s1] sm:$0xff]
  %v30 = vld [vmem:[%s1 + $0x8] sm:$0xff]
  %v31 = vld [vmem:[%s1 + $0x10] sm:$0xff]
  %v32 = vld [vmem:[%s1 + $0x18] sm:$0xff]
  %v33 = vld [vmem:[%s1 + $0x20] sm:$0xff]
  %v34 = vld [vmem:[%s1 + $0x28] sm:$0xff]
  %v35 = vld [vmem:[%s1 + $0x30] sm:$0xff]
  %v36 = vld [vmem:[%s1 + $0x38] sm:$0xff]
  %v39 = vunpack.c.l.b16 %v27
  %v40 = vunpack.c.l.b16 %v28
  %v41 = vpack.c.b16 %v40, %v39
  %v50 = vunpack.c.l.b16 %v29
  %v51 = vunpack.c.h.b16 %v29
  %v52 = vunpack.c.l.b16 %v30
  %v53 = vunpack.c.h.b16 %v30
  %v54 = vunpack.c.l.b16 %v31
  %v55 = vunpack.c.h.b16 %v31
  %v56 = vunpack.c.l.b16 %v32
  %v57 = vunpack.c.h.b16 %v32
  %v58 = vunpack.c.l.b16 %v33
  %v59 = vunpack.c.h.b16 %v33
  %v60 = vunpack.c.l.b16 %v34
  %v61 = vunpack.c.h.b16 %v34
  %v62 = vunpack.c.l.b16 %v35
  %v63 = vunpack.c.h.b16 %v35
  %v64 = vunpack.c.l.b16 %v36
  %v65 = vunpack.c.h.b16 %v36
  %v66 = vpack.c.b16 %v52, %v50
  %v67 = vpack.c.b16 %v53, %v51
  %v68 = vpack.c.b16 %v56, %v54
  %v69 = vpack.c.b16 %v57, %v55
  %v70 = vpack.c.b16 %v60, %v58
  %v71 = vpack.c.b16 %v61, %v59
  %v72 = vpack.c.b16 %v64, %v62
  %v73 = vpack.c.b16 %v65, %v63
  %vm82 = vcmask 523264
  %v84 = vsel %vm82, %v41, 0
  %86 = vmatprep.subr.bf16.mxu0 %v67
  %87 = vmatpush1.bf16.msra.mxu0 %v66
  %88 = vmatprep.subr.bf16.mxu0 %v69
  %89 = vmatpush1.bf16.msra.mxu0 %v68
  %90 = vmatprep.subr.bf16.mxu0 %v71
  %91 = vmatpush1.bf16.msra.mxu0 %v70
  %92 = vmatprep.subr.bf16.mxu0 %v73
  %93 = vmatpush1.bf16.msra.mxu0 %v72
  %94 = vmatprep.subr.bf16.mxu0 0
  %95 = vmatpush1.bf16.msra.mxu0 0
  %96 = vmatprep.subr.bf16.mxu0 0
  %97 = vmatpush1.bf16.msra.mxu0 0
  %98 = vmatprep.subr.bf16.mxu0 0
  %99 = vmatpush1.bf16.msra.mxu0 0
  %100 = vmatprep.subr.bf16.mxu0 0
  %101 = vmatpush1.bf16.msra.mxu0 0
  %102 = vmatprep.subr.bf16.mxu0 0
  %103 = vmatpush1.bf16.msra.mxu0 0
  %104 = vmatprep.subr.bf16.mxu0 0
  %105 = vmatpush1.bf16.msra.mxu0 0
  %106 = vmatprep.subr.bf16.mxu0 0
  %107 = vmatpush1.bf16.msra.mxu0 0
  %108 = vmatprep.subr.bf16.mxu0 0
  %109 = vmatpush1.bf16.msra.mxu0 0
  %110 = vmatprep.subr.bf16.mxu0 0
  %111 = vmatpush1.bf16.msra.mxu0 0
  %112 = vmatprep.subr.bf16.mxu0 0
  %113 = vmatpush1.bf16.msra.mxu0 0
  %114 = vmatprep.subr.bf16.mxu0 0
  %115 = vmatpush1.bf16.msra.mxu0 0
  %116 = vmatprep.subr.bf16.mxu0 0
  %117 = vmatpush1.bf16.msra.mxu0 0
  %118 = vmatprep.mubr.bf16.mxu0 0
  %119 = vmatmul.mubr.bf16.gmra.mrb[0].mxu0 %v84
  %v120 = vpop.f32.mrb[0].mxu0
  %v121 = vadd.f32 0.0, %v120
  %v122 = vpop.f32.mrb[0].mxu0
  %v123 = vadd.f32 0.0, %v122
  %v124 = vpop.f32.mrb[0].mxu0
  %v125 = vadd.f32 0.0, %v124
  %v126 = vpop.f32.mrb[0].mxu0
  %v127 = vadd.f32 0.0, %v126
  %128 = vdwg.mxu0
  %v129 = vadd.f32 %v23, %v121
  %v130 = vadd.f32 %v24, %v123
  %v131 = vadd.f32 %v25, %v125
  %v132 = vadd.f32 %v26, %v127
  %133 = vst [vmem:[#allocation2] sm:$0xff] %v129
  %134 = vst [vmem:[#allocation2 + $0x8] sm:$0xff] %v130
  %135 = vst [vmem:[#allocation2 + $0x10] sm:$0xff] %v131
  %136 = vst [vmem:[#allocation2 + $0x18] sm:$0xff] %v132
  // Predicated region
  $region18: #{_lambda_.36} parent=0 // pred_check
    %p137 = pneg %p15
  $region19: #{_lambda_.36} parent=0 // pred_check_branch
    %139 = sbr.rel (%p137) target = $region21
  $region20: #{_lambda_.36} parent=0 // pred_region
    %v140 = vld [vmem:[#allocation2] sm:$0xff]
    %v141 = vld [vmem:[#allocation2 + $0x8] sm:$0xff]
    %v142 = vld [vmem:[#allocation2 + $0x10] sm:$0xff]
    %v143 = vld [vmem:[#allocation2 + $0x18] sm:$0xff]
    %v144 = vld [vmem:[%s2] sm:$0x3]
    %v146 = vlaneseq
    %v147 = vshrl.u32 %v146, 7
    %v148 = vsub.s32 0, %v147
    %v149 = vrot.slane %v144, %v148
    %v150 = vlaneseq
    %v151 = vshrl.u32 %v150, 7
    %v152 = vsub.s32 1, %v151
    %v153 = vrot.slane %v144, %v152
    %v156 = vadd.f32 %v140, %v149
    %v157 = vadd.f32 %v141, %v153
    %v158 = vadd.f32 %v142, %v149
    %v159 = vadd.f32 %v143, %v153
    %v160 = vpack.c.bf16 %v158, %v156
    %v161 = vpack.c.bf16 %v159, %v157
    %v164 = vunpack.c.l.b16 %v160
    %v165 = vunpack.c.l.b16 %v161
    %v166 = vunpack.c.h.b16 %v160
    %v167 = vunpack.c.h.b16 %v161
    %v168 = vpack.c.b16 %v165, %v164
    %v169 = vpack.c.b16 %v167, %v166
    %172 = vst [vmem:[%s3] sm:$0xff] %v168
    %173 = vst [vmem:[%s3 + $0x8] sm:$0xff] %v169
  $region21: #{_lambda_.36} parent=0 // pred_fallthru
    _
  // Predicated region
  $region22: #{_lambda_.36} parent=0 // pred_check
    _
  $region23: #{_lambda_.36} parent=0 // pred_check_branch
    %175 = sbr.rel (0) target = $region25
  $region24: #{_lambda_.36} parent=0 // pred_region
    _
  $region25: #{_lambda_.36} parent=0 // pred_fallthru
    _
  // Predicated region
  $region26: #{_lambda_.36} parent=0 // pred_check
    _
  $region27: #{_lambda_.36} parent=0 // pred_check_branch
    %177 = sbr.rel (0) target = $region29
  $region28: #{_lambda_.36} parent=0 // pred_region
    _
  $region29: #{_lambda_.36} parent=0 // pred_fallthru
    _

// kernel: _lambda_.35
$region0: #{_lambda_.35}
  #allocation0 [shape = 'u32[]', space=smem, size = 0x4, offset = 0x4, fixed_abs, tag = 'smem constant byte address 0x4 - core index']
  #allocation1 [shape = 'u32[144,128]{1,0:T(1,128)}', space=vmem, size = 0x12000, scoped, tag = 'internal scratch']
  #allocation2 [shape = 'f32[2,32]{1,0:T(2,128)}', space=vmem, size = 0x400, scoped, tag = 'scratch operand']
  #allocation3 [shape = 'f32[2,32]{1,0:T(2,128)}', space=vmem, size = 0x400, scoped, tag = 'scratch operand']
  #allocation4 [shape = 'f32[2,32]{1,0:T(2,128)}', space=vmem, size = 0x400, scoped, tag = 'scratch operand']
  #allocation5 [shape = 'f32[2,32]{1,0:T(2,128)}', space=vmem, size = 0x400, scoped, tag = 'scratch operand']
  %s0 = inlined_call_operand.vmem [shape: bf16[8,2,256], index: 0, kind: input, shape index: {}]
  %s1 = inlined_call_operand.vmem [shape: bf16[2,32,128], index: 1, kind: input, shape index: {}]
  %s2 = inlined_call_operand.vmem [shape: f32[8,2,64], index: 2, kind: output, shape index: {}]
  %s3 = sld [smem:[#allocation0]]
  $region25: #{_lambda_.35} parent=0
    _
  %s5 = ssub.s32 1, %s3
  %s6 = scalar_select 0, %s5, %s3
  // Predicated region
  $region2: #{_lambda_.35} parent=0 // pred_check
    _
  $region3: #{_lambda_.35} parent=0 // pred_check_branch
    %8 = sbr.rel (0) target = $region5
  $region4: #{_lambda_.35} parent=0 // pred_region
    _
  $region5: #{_lambda_.35} parent=0 // pred_fallthru
    _
  // Predicated region
  $region6: #{_lambda_.35} parent=0 // pred_check
    _
  $region7: #{_lambda_.35} parent=0 // pred_check_branch
    %10 = sbr.rel (0) target = $region9
  $region8: #{_lambda_.35} parent=0 // pred_region
    _
  $region9: #{_lambda_.35} parent=0 // pred_fallthru
    _
  %vm12 = vcmask 254976
  %13 = vst.msk [vmem:[#allocation2] sm:$0x3] %vm12, 0.0
  %14 = vst.msk [vmem:[#allocation3] sm:$0x3] %vm12, 0.0
  %15 = vst.msk [vmem:[#allocation4] sm:$0x3] %vm12, 0.0
  %16 = vst.msk [vmem:[#allocation5] sm:$0x3] %vm12, 0.0
  loop: start=0, step=1, limit=8
  $region10: #{_lambda_.35} parent=0 // loop_pre_header
    _
  $region11: #{_lambda_.35} parent=0 // loop_header
    %s18 = sphi 0, %s22
    %p19 = scmp.ge.s32.totalorder %s18, 8
  $region12: #{_lambda_.35} parent=0 // loop_header_branch
    %21 = sbr.rel (%p19) target = $region16
  $region13: #{_lambda_.35} parent=0 // loop_body
    %s23 = ssub.s32 7, %s18
    %s24 = smul.u32 %s18, 2
    %s25 = scalar_lea.vmem %s0, %s24
    %v26 = vld [vmem:[%s25] sm:$0x1]
    %v27 = vunpack.c.l.bf16 %v26
    %v28 = vld [vmem:[#allocation2] sm:$0x3]
    %v29 = vpack.c.bf16 %v28, %v28
    %v30 = vld [vmem:[%s1] sm:$0xf]
    %v31 = vld [vmem:[%s1 + $0x4] sm:$0xf]
    %v32 = vld [vmem:[%s1 + $0x8] sm:$0xf]
    %v33 = vld [vmem:[%s1 + $0xc] sm:$0xf]
    %v38 = vunpack.c.l.b16 %v30
    %v39 = vunpack.c.l.b16 %v31
    %v40 = vunpack.c.l.b16 %v32
    %v41 = vunpack.c.l.b16 %v33
    %v42 = vpack.c.b16 %v39, %v38
    %v43 = vpack.c.b16 %v41, %v40
    %vm46 = vcmask 261120
    %v48 = vsel %vm46, %v29, 0
    %50 = vmatprep.subr.bf16.mxu0 0
    %51 = vmatpush1.bf16.msra.mxu0 %v42
    %52 = vmatprep.subr.bf16.mxu0 0
    %53 = vmatpush1.bf16.msra.mxu0 %v43
    %54 = vmatprep.subr.bf16.mxu0 0
    %55 = vmatpush1.bf16.msra.mxu0 0
    %56 = vmatprep.subr.bf16.mxu0 0
    %57 = vmatpush1.bf16.msra.mxu0 0
    %58 = vmatprep.subr.bf16.mxu0 0
    %59 = vmatpush1.bf16.msra.mxu0 0
    %60 = vmatprep.subr.bf16.mxu0 0
    %61 = vmatpush1.bf16.msra.mxu0 0
    %62 = vmatprep.subr.bf16.mxu0 0
    %63 = vmatpush1.bf16.msra.mxu0 0
    %64 = vmatprep.subr.bf16.mxu0 0
    %65 = vmatpush1.bf16.msra.mxu0 0
    %66 = vmatprep.subr.bf16.mxu0 0
    %67 = vmatpush1.bf16.msra.mxu0 0
    %68 = vmatprep.subr.bf16.mxu0 0
    %69 = vmatpush1.bf16.msra.mxu0 0
    %70 = vmatprep.subr.bf16.mxu0 0
    %71 = vmatpush1.bf16.msra.mxu0 0
    %72 = vmatprep.subr.bf16.mxu0 0
    %73 = vmatpush1.bf16.msra.mxu0 0
    %74 = vmatprep.subr.bf16.mxu0 0
    %75 = vmatpush1.bf16.msra.mxu0 0
    %76 = vmatprep.subr.bf16.mxu0 0
    %77 = vmatpush1.bf16.msra.mxu0 0
    %78 = vmatprep.subr.bf16.mxu0 0
    %79 = vmatpush1.bf16.msra.mxu0 0
    %80 = vmatprep.subr.bf16.mxu0 0
    %81 = vmatpush1.bf16.msra.mxu0 0
    %82 = vmatprep.mubr.bf16.mxu0 0
    %83 = vmatmul.mubr.bf16.gmra.mrb[0].mxu0 %v48
    %v84 = vpop.f32.mrb[0].mxu0
    %v85 = vadd.f32 0.0, %v84
    %v86 = vpop.f32.mrb[0].mxu0
    %v87 = vpop.f32.mrb[0].mxu0
    %v88 = vpop.f32.mrb[0].mxu0
    %89 = vdwg.mxu0
    %v90 = vadd.f32 %v27, %v85
    %s91 = smul.u32 %s23, 2
    %s92 = scalar_lea.vmem %s0, %s91
    %v93 = vld [vmem:[%s92 + $0x1] sm:$0x1]
    %v94 = vunpack.c.l.bf16 %v93
    %v95 = vld [vmem:[#allocation4] sm:$0x3]
    %v96 = vpack.c.bf16 %v95, %v95
    %s97 = scalar_lea.vmem %s1, 16
    %v98 = vld [vmem:[%s97] sm:$0xf]
    %v99 = vld [vmem:[%s97 + $0x4] sm:$0xf]
    %v100 = vld [vmem:[%s97 + $0x8] sm:$0xf]
    %v101 = vld [vmem:[%s97 + $0xc] sm:$0xf]
    %v106 = vunpack.c.l.b16 %v98
    %v107 = vunpack.c.l.b16 %v99
    %v108 = vunpack.c.l.b16 %v100
    %v109 = vunpack.c.l.b16 %v101
    %v110 = vpack.c.b16 %v107, %v106
    %v111 = vpack.c.b16 %v109, %v108
    %v115 = vsel %vm46, %v96, 0
    %117 = vmatprep.subr.bf16.mxu0 0
    %118 = vmatpush1.bf16.msra.mxu0 %v110
    %119 = vmatprep.subr.bf16.mxu0 0
    %120 = vmatpush1.bf16.msra.mxu0 %v111
    %121 = vmatprep.subr.bf16.mxu0 0
    %122 = vmatpush1.bf16.msra.mxu0 0
    %123 = vmatprep.subr.bf16.mxu0 0
    %124 = vmatpush1.bf16.msra.mxu0 0
    %125 = vmatprep.subr.bf16.mxu0 0
    %126 = vmatpush1.bf16.msra.mxu0 0
    %127 = vmatprep.subr.bf16.mxu0 0
    %128 = vmatpush1.bf16.msra.mxu0 0
    %129 = vmatprep.subr.bf16.mxu0 0
    %130 = vmatpush1.bf16.msra.mxu0 0
    %131 = vmatprep.subr.bf16.mxu0 0
    %132 = vmatpush1.bf16.msra.mxu0 0
    %133 = vmatprep.subr.bf16.mxu0 0
    %134 = vmatpush1.bf16.msra.mxu0 0
    %135 = vmatprep.subr.bf16.mxu0 0
    %136 = vmatpush1.bf16.msra.mxu0 0
    %137 = vmatprep.subr.bf16.mxu0 0
    %138 = vmatpush1.bf16.msra.mxu0 0
    %139 = vmatprep.subr.bf16.mxu0 0
    %140 = vmatpush1.bf16.msra.mxu0 0
    %141 = vmatprep.subr.bf16.mxu0 0
    %142 = vmatpush1.bf16.msra.mxu0 0
    %143 = vmatprep.subr.bf16.mxu0 0
    %144 = vmatpush1.bf16.msra.mxu0 0
    %145 = vmatprep.subr.bf16.mxu0 0
    %146 = vmatpush1.bf16.msra.mxu0 0
    %147 = vmatprep.subr.bf16.mxu0 0
    %148 = vmatpush1.bf16.msra.mxu0 0
    %149 = vmatprep.mubr.bf16.mxu0 0
    %150 = vmatmul.mubr.bf16.gmra.mrb[0].mxu0 %v115
    %v151 = vpop.f32.mrb[0].mxu0
    %v152 = vadd.f32 0.0, %v151
    %v153 = vpop.f32.mrb[0].mxu0
    %v154 = vpop.f32.mrb[0].mxu0
    %v155 = vpop.f32.mrb[0].mxu0
    %156 = vdwg.mxu0
    %v157 = vadd.f32 %v94, %v152
    %v158 = vld [vmem:[#allocation3] sm:$0x3]
    %v159 = vxor.u32 %v90, 2147483648
    %v160 = vmul.f32 %v159, 1.442695
    %v161 = vpow.pop %v160
    %v162 = vadd.f32 %v161, 1.0
    %v163 = vrcp.pop %v162
    %v164 = vmul.f32 1.0, %v163
    %v165 = vtanh.pop %v90
    %v168 = vunpack.c.l.s4 1983009808
    %v169 = vunpack.c.0.s8 %v168
    %v170 = vlaneseq
    %v171 = vshrl.u32 %v170, 7
    %v172 = vsub.s32 %v169, %v171
    %v173 = vrot.slane %v158, %v172
    %174 = vrot.lane.b32.xlu0 %v173, 32
    %v175 = vpop.permute.xlu0 %174
    %v177 = vmul.f32 %v164, %v175
    %179 = vrot.lane.b32.xlu0 %v165, 64
    %v180 = vpop.permute.xlu0 %179
    %v182 = vmul.f32 %v164, %v180
    %184 = vrot.lane.b32.xlu0 %v182, 32
    %v185 = vpop.permute.xlu0 %184
    %v187 = vadd.f32 %v177, %v185
    %v188 = vtanh.pop %v187
    %190 = vrot.lane.b32.xlu0 %v188, 64
    %v191 = vpop.permute.xlu0 %190
    %v193 = vmul.f32 %v164, %v191
    %v194 = vld [vmem:[#allocation5] sm:$0x3]
    %v195 = vxor.u32 %v157, 2147483648
    %v196 = vmul.f32 %v195, 1.442695
    %v197 = vpow.pop %v196
    %v198 = vadd.f32 %v197, 1.0
    %v199 = vrcp.pop %v198
    %v200 = vmul.f32 1.0, %v199
    %v201 = vtanh.pop %v157
    %v204 = vunpack.c.l.s4 1983009808
    %v205 = vunpack.c.0.s8 %v204
    %v206 = vlaneseq
    %v207 = vshrl.u32 %v206, 7
    %v208 = vsub.s32 %v205, %v207
    %v209 = vrot.slane %v194, %v208
    %210 = vrot.lane.b32.xlu0 %v209, 32
    %v211 = vpop.permute.xlu0 %210
    %v213 = vmul.f32 %v200, %v211
    %215 = vrot.lane.b32.xlu0 %v201, 64
    %v216 = vpop.permute.xlu0 %215
    %v218 = vmul.f32 %v200, %v216
    %220 = vrot.lane.b32.xlu0 %v218, 32
    %v221 = vpop.permute.xlu0 %220
    %v223 = vadd.f32 %v213, %v221
    %v224 = vtanh.pop %v223
    %226 = vrot.lane.b32.xlu0 %v224, 64
    %v227 = vpop.permute.xlu0 %226
    %v229 = vmul.f32 %v200, %v227
    %v232 = vunpack.c.l.s4 1983009808
    %v233 = vunpack.c.0.s8 %v232
    %v234 = vlaneseq
    %v235 = vshrl.u32 %v234, 7
    %v236 = vsub.s32 %v233, %v235
    %v237 = vrot.slane %v193, %v236
    %238 = vrot.lane.b32.xlu0 %v237, 32
    %v239 = vpop.permute.xlu0 %238
    %241 = vst.msk [vmem:[#allocation2] sm:$0x3] %vm12, %v239
    %v244 = vunpack.c.l.s4 1983009808
    %v245 = vunpack.c.0.s8 %v244
    %v246 = vlaneseq
    %v247 = vshrl.u32 %v246, 7
    %v248 = vsub.s32 %v245, %v247
    %v249 = vrot.slane %v187, %v248
    %250 = vrot.lane.b32.xlu0 %v249, 96
    %v251 = vpop.permute.xlu0 %250
    %253 = vst.msk [vmem:[#allocation3] sm:$0x3] %vm12, %v251
    %v256 = vunpack.c.l.s4 1983009808
    %v257 = vunpack.c.0.s8 %v256
    %v258 = vlaneseq
    %v259 = vshrl.u32 %v258, 7
    %v260 = vsub.s32 %v257, %v259
    %v261 = vrot.slane %v229, %v260
    %262 = vrot.lane.b32.xlu0 %v261, 32
    %v263 = vpop.permute.xlu0 %262
    %265 = vst.msk [vmem:[#allocation4] sm:$0x3] %vm12, %v263
    %v268 = vunpack.c.l.s4 1983009808
    %v269 = vunpack.c.0.s8 %v268
    %v270 = vlaneseq
    %v271 = vshrl.u32 %v270, 7
    %v272 = vsub.s32 %v269, %v271
    %v273 = vrot.slane %v223, %v272
    %274 = vrot.lane.b32.xlu0 %v273, 96
    %v275 = vpop.permute.xlu0 %274
    %277 = vst.msk [vmem:[#allocation5] sm:$0x3] %vm12, %v275
    %s278 = scalar_lea.vmem %s2, %s24
    %279 = vst.msk [vmem:[%s278] sm:$0x3] %vm12, %v239
    %280 = vrot.lane.b32.xlu0 %v261, 64
    %v281 = vpop.permute.xlu0 %280
    %s283 = scalar_lea.vmem %s2, %s91
    %vm284 = vcmask 517376
    %285 = vst.msk [vmem:[%s283] sm:$0x3] %vm284, %v281
  $region14: #{_lambda_.35} parent=0 // loop_footer
    %s22 = sadd.s32 1, %s18
  $region15: #{_lambda_.35} parent=0 // loop_footer_branch
    %17 = sbr.rel target = $region11
  $region16: #{_lambda_.35} parent=0 // loop_exit
    _
  // Predicated region
  $region17: #{_lambda_.35} parent=0 // pred_check
    _
  $region18: #{_lambda_.35} parent=0 // pred_check_branch
    %287 = sbr.rel (0) target = $region20
  $region19: #{_lambda_.35} parent=0 // pred_region
    _
  $region20: #{_lambda_.35} parent=0 // pred_fallthru
    _
  // Predicated region
  $region21: #{_lambda_.35} parent=0 // pred_check
    _
  $region22: #{_lambda_.35} parent=0 // pred_check_branch
    %289 = sbr.rel (0) target = $region24
  $region23: #{_lambda_.35} parent=0 // pred_region
    _
  $region24: #{_lambda_.35} parent=0 // pred_fallthru
    _

</llo_original>
